<compile_context>
chip_gen: v7x
topology: tpu7x:2x2x1
jax: 0.10.0
libtpu: 0.0.40
codegen_flags: <defaults>
</compile_context>

<pallas_src>
import functools

import jax
import jax.numpy as jnp
from jax.experimental import pallas as pl
from jax.experimental.pallas import tpu as pltpu

EPS = 1e-5  # torch nn.LayerNorm default eps


def _layernorm(x, g, b):
    mu = jnp.mean(x, axis=-1, keepdims=True)
    d = x - mu
    var = jnp.mean(d * d, axis=-1, keepdims=True)
    return d * jax.lax.rsqrt(var + EPS) * g + b


def _erf(x):
    # Abramowitz & Stegun 7.1.26 (max abs err ~1.5e-7); only exp/recip -> safe EUP lowering.
    p = 0.3275911
    a1, a2, a3, a4, a5 = 0.254829592, -0.284496736, 1.421413741, -1.453152027, 1.061405429
    z = jnp.abs(x)
    t = 1.0 / (1.0 + p * z)
    poly = ((((a5 * t + a4) * t + a3) * t + a2) * t + a1) * t
    y = 1.0 - poly * jnp.exp(-z * z)
    return jnp.where(x >= 0, y, -y)


def _gelu(x):
    # torch nn.GELU default = exact erf form.
    return 0.5 * x * (1.0 + _erf(x * 0.7071067811865476))


# --------------------------- fused whole-model kernel ---------------------------
def fused_encoder_kernel(
    x_ref, w_in_ref, b_in_ref, pos_ref, mem_ref,
    ln1_g_ref, ln1_b_ref, wqkv_ref, wo_ref,
    ln2_g_ref, ln2_b_ref, w1_ref, b1_ref, w2_ref, b2_ref,
    fg_ref, fb_ref, ng_ref, nb_ref,
    o_ref,
    h_ref,                                     # VMEM scratch (block_b*N, D) f32: residual stream
    *, heads, num_mem, seq_len, block_b):
    l = pl.program_id(1)
    depth = pl.num_programs(1)
    D = w_in_ref.shape[1]
    dh = D // heads
    N = num_mem + seq_len
    bf16, f32 = jnp.bfloat16, jnp.float32

    # ---- l == 0: input_linear + abs-pos-emb + memory-token prepend -> residual scratch ----
    @pl.when(l == 0)
    def _init():
        for bb in range(block_b):              # tiny static loop; runs once per sample
            xb = x_ref[bb].astype(bf16)                                      # (S, In)
            emb = jnp.dot(xb, w_in_ref[...], preferred_element_type=f32)     # (S, D)
            emb = emb + b_in_ref[...] + pos_ref[...]
            h_ref[pl.ds(bb * N, num_mem), :] = mem_ref[...]
            h_ref[pl.ds(bb * N + num_mem, seq_len), :] = emb

    h = h_ref[...]                                                           # (Bt*N, D) f32

    # ---------- pre-LN multi-head self-attention + residual ----------
    ln1 = _layernorm(h, ln1_g_ref[...], ln1_b_ref[...])
    # fused QKV: one (Bt*N, D) x (D, 3D) matmul (scale pre-folded into the q columns)
    qkv = jnp.dot(ln1.astype(bf16), wqkv_ref[...], preferred_element_type=f32)
    qkv = qkv.astype(bf16).reshape(block_b, N, 3 * D)
    o_heads = []
    for hd in range(heads):
        qh = qkv[:, :, hd * dh:(hd + 1) * dh]                                # (Bt, N, dh)
        kh = qkv[:, :, D + hd * dh:D + (hd + 1) * dh]
        vh = qkv[:, :, 2 * D + hd * dh:2 * D + (hd + 1) * dh]
        s = jnp.einsum("bnd,bmd->bnm", qh, kh, preferred_element_type=f32)   # (Bt, N, N)
        s = s - jnp.max(s, axis=-1, keepdims=True)
        p = jnp.exp(s)
        p = p * pl.reciprocal(jnp.sum(p, axis=-1, keepdims=True), approx=True)
        o_heads.append(jnp.einsum("bnm,bmd->bnd", p.astype(bf16), vh,
                                  preferred_element_type=f32))               # (Bt, N, dh)
    # fused output projection: one (Bt*N, H*dh) x (H*dh, D) matmul (head-sum folded into MXU)
    attn = jnp.concatenate(o_heads, axis=-1).reshape(block_b * N, D)
    h = h + jnp.dot(attn.astype(bf16), wo_ref[...], preferred_element_type=f32)

    # ---------- pre-LN GELU feed-forward + residual ----------
    ln2 = _layernorm(h, ln2_g_ref[...], ln2_b_ref[...])
    f = jnp.dot(ln2.astype(bf16), w1_ref[...], preferred_element_type=f32) + b1_ref[...]
    f = _gelu(f)
    h = h + jnp.dot(f.astype(bf16), w2_ref[...], preferred_element_type=f32) + b2_ref[...]
    h_ref[...] = h

    # ---- l == depth-1: final norms on the first memory-token row, lane-dense (Bt, D) store ----
    @pl.when(l == depth - 1)
    def _final():
        row = h.reshape(block_b, N, D)[:, 0, :]                              # mem[:, 0, :]
        y = _layernorm(row, fg_ref[...], fb_ref[...])                        # attn_layers final norm
        y = _layernorm(y, ng_ref[...], nb_ref[...])                          # wrapper self.norm
        o_ref[0] = y


# ------------------------------- one-time packing -------------------------------
def pack_params(p, *, heads):
    """Hoisted out of forward(): stack per-layer weights over depth, fuse wq|wk|wv
    (with the 1/sqrt(dh) fold on the q columns) and cast matmul weights to bf16."""
    D = p["w_in"].shape[1]
    scale = (D // heads) ** -0.5
    layers = p["layers"]
    stk = lambda key: jnp.stack([L[key] for L in layers], axis=0)
    wqkv = jnp.stack([jnp.concatenate([L["wq"] * scale, L["wk"], L["wv"]], axis=-1)
                      for L in layers], axis=0)
    return {
        "w_in": p["w_in"].astype(jnp.bfloat16),
        "b_in": p["b_in"], "pos": p["pos"], "mem_tok": p["mem_tok"],
        "ln1_g": stk("ln1_g"), "ln1_b": stk("ln1_b"),
        "wqkv": wqkv.astype(jnp.bfloat16),                 # (depth, D, 3D)
        "wo": stk("wo").astype(jnp.bfloat16),              # (depth, D, D)
        "ln2_g": stk("ln2_g"), "ln2_b": stk("ln2_b"),
        "w1": stk("w1").astype(jnp.bfloat16), "b1": stk("b1"),
        "w2": stk("w2").astype(jnp.bfloat16), "b2": stk("b2"),
        "final_g": p["final_g"], "final_b": p["final_b"],
        "norm_g": p["norm_g"], "norm_b": p["norm_b"],
    }


# ---------------------------------- wrapper ----------------------------------
def forward(x, pp, *, heads, block_b=None):
    B, S, In = x.shape
    D = pp["w_in"].shape[1]
    depth, _, F = pp["w1"].shape
    num_mem = pp["mem_tok"].shape[0]
    N = S + num_mem

    if block_b is None:  # prefer >=2 parallel grid steps (dual-TC) while batching tokens
        divs = [d for d in range(1, B + 1) if B % d == 0]
        cands = ([d for d in divs if d * N <= 1024 and B // d >= 2]
                 or [d for d in divs if d * N <= 1024] or [1])
        block_b = max(cands)
    assert B % block_b == 0, (B, block_b)
    nb = B // block_b

    kern = functools.partial(fused_encoder_kernel, heads=heads, num_mem=num_mem,
                             seq_len=S, block_b=block_b)

    def const(*shape):
        nd = len(shape)
        return pl.BlockSpec(shape, lambda b, l: (0,) * nd)

    def per_layer(*tail):  # select layer l from a depth-stacked array; leading dim squeezed
        return pl.BlockSpec((None,) + tail, lambda b, l: (l,) + (0,) * len(tail))

    # explicit VMEM budget: 2 streamed layers of weights + constants + IO buffers + scratch
    _bytes = lambda a: a.size * a.dtype.itemsize
    layer_bytes = sum(_bytes(pp[k]) // depth for k in
                      ("ln1_g", "ln1_b", "wqkv", "wo", "ln2_g", "ln2_b", "w1", "b1", "w2", "b2"))
    const_bytes = sum(_bytes(pp[k]) for k in
                      ("w_in", "b_in", "pos", "mem_tok", "final_g", "final_b", "norm_g", "norm_b"))
    io_bytes = block_b * S * In * x.dtype.itemsize + block_b * D * 4
    scratch_bytes = block_b * N * D * 4
    est = 2 * layer_bytes + 2 * const_bytes + 2 * io_bytes + scratch_bytes
    vmem_limit = int(min(110 << 20, max(32 << 20, 2 * est)))

    out = pl.pallas_call(
        kern,
        out_shape=jax.ShapeDtypeStruct((nb, block_b, D), jnp.float32),
        grid=(nb, depth),
        in_specs=[
            pl.BlockSpec((block_b, S, In), lambda b, l: (b, 0, 0)),   # x (per batch block)
            const(In, D), const(1, D), const(S, D), const(num_mem, D),
            per_layer(1, D), per_layer(1, D),                          # ln1 g/b
            per_layer(D, 3 * D),                                       # fused wqkv
            per_layer(D, D),                                           # wo
            per_layer(1, D), per_layer(1, D),                          # ln2 g/b
            per_layer(D, F), per_layer(1, F),                          # w1, b1
            per_layer(F, D), per_layer(1, D),                          # w2, b2
            const(1, D), const(1, D), const(1, D), const(1, D),        # final_g/b, norm_g/b
        ],
        out_specs=pl.BlockSpec((1, block_b, D), lambda b, l: (b, 0, 0)),
        scratch_shapes=[pltpu.VMEM((block_b * N, D), jnp.float32)],
        compiler_params=pltpu.CompilerParams(
            dimension_semantics=("parallel", "arbitrary"),
            vmem_limit_bytes=vmem_limit),
    )(
        x, pp["w_in"], pp["b_in"], pp["pos"], pp["mem_tok"],
        pp["ln1_g"], pp["ln1_b"], pp["wqkv"], pp["wo"],
        pp["ln2_g"], pp["ln2_b"], pp["w1"], pp["b1"], pp["w2"], pp["b2"],
        pp["final_g"], pp["final_b"], pp["norm_g"], pp["norm_b"],
    )
    return out.reshape(B, D)


# ------------------------------ pure-JAX reference -----------------------------
def reference(x, p, *, heads):
    def ln(t, g, b):
        mu = t.mean(-1, keepdims=True)
        d = t - mu
        return d * jax.lax.rsqrt((d * d).mean(-1, keepdims=True) + EPS) * g + b

    B = x.shape[0]
    emb = x @ p["w_in"] + p["b_in"] + p["pos"]
    mem = jnp.broadcast_to(p["mem_tok"][None], (B,) + p["mem_tok"].shape)
    h = jnp.concatenate([mem, emb], axis=1)
    for L in p["layers"]:
        xin = h
        l = ln(xin, L["ln1_g"], L["ln1_b"])
        q, k, v = l @ L["wq"], l @ L["wk"], l @ L["wv"]
        N = h.shape[1]
        dh = q.shape[-1] // heads
        q = q.reshape(B, N, heads, dh)
        k = k.reshape(B, N, heads, dh)
        v = v.reshape(B, N, heads, dh)
        s = jnp.einsum("bnhd,bmhd->bhnm", q, k) * dh ** -0.5
        a = jax.nn.softmax(s, axis=-1)
        o = jnp.einsum("bhnm,bmhd->bnhd", a, v).reshape(B, N, -1)
        h = xin + o @ L["wo"]
        xin = h
        l = ln(xin, L["ln2_g"], L["ln2_b"])
        h = xin + jax.nn.gelu(l @ L["w1"] + L["b1"], approximate=False) @ L["w2"] + L["b2"]
    h = ln(h, p["final_g"], p["final_b"])
    h = ln(h, p["norm_g"], p["norm_b"])
    return h[:, 0, :]


# ------------------------------ parameter init ---------------------------------
def init_params(key, *, input_size, dim, heads, depth, ff_mult, seq_len, num_mem):
    ks = iter(jax.random.split(key, 8 + depth * 8))

    def nrm(shape, scale=0.05):
        return jax.random.normal(next(ks), shape, jnp.float32) * scale

    D, F = dim, dim * ff_mult
    p = {
        "w_in": nrm((input_size, D)),
        "b_in": nrm((1, D)),
        "pos": nrm((seq_len, D), scale=D ** -0.5),   # AbsolutePositionalEmbedding * dim**-0.5
        "mem_tok": nrm((num_mem, D), scale=1.0),     # torch.randn memory token
        "final_g": jnp.ones((1, D), jnp.float32),
        "final_b": jnp.zeros((1, D), jnp.float32),
        "norm_g": jnp.ones((1, D), jnp.float32),
        "norm_b": jnp.zeros((1, D), jnp.float32),
        "layers": [],
    }
    for _ in range(depth):
        p["layers"].append({
            "ln1_g": jnp.ones((1, D), jnp.float32),
            "ln1_b": jnp.zeros((1, D), jnp.float32),
            "wq": nrm((D, D)), "wk": nrm((D, D)), "wv": nrm((D, D)), "wo": nrm((D, D)),
            "ln2_g": jnp.ones((1, D), jnp.float32),
            "ln2_b": jnp.zeros((1, D), jnp.float32),
            "w1": nrm((D, F)), "b1": nrm((1, F)),
            "w2": nrm((F, D)), "b2": nrm((1, D)),
        })
    return p


if __name__ == "__main__":
    # B=4, block_b=2 -> 2 parallel grid steps (dual-TC) with 2 samples (16 tokens) per matmul.
    B, S, IN, D, H, DEPTH, FF_MULT, NUM_MEM = 4, 7, 16, 32, 4, 2, 4, 1
    key = jax.random.PRNGKey(0)
    kx, kp = jax.random.split(key)
    x = jax.random.normal(kx, (B, S, IN), jnp.float32)   # x.payload: (b, seq_len, input_size)
    params = init_params(kp, input_size=IN, dim=D, heads=H, depth=DEPTH,
                         ff_mult=FF_MULT, seq_len=S, num_mem=NUM_MEM)

    packed = pack_params(params, heads=H)                # one-time packing, outside forward
    fwd = jax.jit(functools.partial(forward, heads=H, block_b=2))
    out = jax.block_until_ready(fwd(x, packed))
    assert out.shape == (B, D), out.shape

    ref = reference(x, params, heads=H)
    err = float(jnp.max(jnp.abs(out - ref)))
    # bf16 matmul operands (f32 accumulation) vs f32 reference -> bf16-sized tolerance.
    if err > 5e-2:
        raise AssertionError(f"mismatch: max abs err {err}")

    print("KERNEL_OK")
</pallas_src>

<mosaic_0001>
module attributes {stable_mosaic.version = 11 : i64} {
  func.func @fused_encoder_kernel(%arg0: i32, %arg1: i32, %arg2: memref<2x7x16xf32, #tpu.memory_space<vmem>>, %arg3: memref<16x32xbf16, #tpu.memory_space<vmem>>, %arg4: memref<1x32xf32, #tpu.memory_space<vmem>>, %arg5: memref<7x32xf32, #tpu.memory_space<vmem>>, %arg6: memref<1x32xf32, #tpu.memory_space<vmem>>, %arg7: memref<1x1x32xf32, #tpu.memory_space<vmem>>, %arg8: memref<1x1x32xf32, #tpu.memory_space<vmem>>, %arg9: memref<1x32x96xbf16, #tpu.memory_space<vmem>>, %arg10: memref<1x32x32xbf16, #tpu.memory_space<vmem>>, %arg11: memref<1x1x32xf32, #tpu.memory_space<vmem>>, %arg12: memref<1x1x32xf32, #tpu.memory_space<vmem>>, %arg13: memref<1x32x128xbf16, #tpu.memory_space<vmem>>, %arg14: memref<1x1x128xf32, #tpu.memory_space<vmem>>, %arg15: memref<1x128x32xbf16, #tpu.memory_space<vmem>>, %arg16: memref<1x1x32xf32, #tpu.memory_space<vmem>>, %arg17: memref<1x32xf32, #tpu.memory_space<vmem>>, %arg18: memref<1x32xf32, #tpu.memory_space<vmem>>, %arg19: memref<1x32xf32, #tpu.memory_space<vmem>>, %arg20: memref<1x32xf32, #tpu.memory_space<vmem>>, %arg21: memref<1x2x32xf32, #tpu.memory_space<vmem>>, %arg22: memref<16x32xf32, #tpu.memory_space<vmem>>) attributes {dimension_semantics = [#tpu.dimension_semantics<parallel>, #tpu.dimension_semantics<arbitrary>], iteration_bounds = array<i64: 2, 2>, scalar_prefetch = 0 : i64, scratch_operands = 1 : i64, tpu.core_type = #tpu.core_type<tc>, window_params = [{transform_indices = @transform_0, window_bounds = array<i64: 2, 7, 16>}, {pipeline_mode = #tpu.pipeline_mode<synchronous>, transform_indices = @transform_1, window_bounds = array<i64: 16, 32>}, {pipeline_mode = #tpu.pipeline_mode<synchronous>, transform_indices = @transform_2, window_bounds = array<i64: 1, 32>}, {pipeline_mode = #tpu.pipeline_mode<synchronous>, transform_indices = @transform_3, window_bounds = array<i64: 7, 32>}, {pipeline_mode = #tpu.pipeline_mode<synchronous>, transform_indices = @transform_4, window_bounds = array<i64: 1, 32>}, {transform_indices = @transform_5, window_bounds = array<i64: 1, 1, 32>}, {transform_indices = @transform_6, window_bounds = array<i64: 1, 1, 32>}, {transform_indices = @transform_7, window_bounds = array<i64: 1, 32, 96>}, {transform_indices = @transform_8, window_bounds = array<i64: 1, 32, 32>}, {transform_indices = @transform_9, window_bounds = array<i64: 1, 1, 32>}, {transform_indices = @transform_10, window_bounds = array<i64: 1, 1, 32>}, {transform_indices = @transform_11, window_bounds = array<i64: 1, 32, 128>}, {transform_indices = @transform_12, window_bounds = array<i64: 1, 1, 128>}, {transform_indices = @transform_13, window_bounds = array<i64: 1, 128, 32>}, {transform_indices = @transform_14, window_bounds = array<i64: 1, 1, 32>}, {pipeline_mode = #tpu.pipeline_mode<synchronous>, transform_indices = @transform_15, window_bounds = array<i64: 1, 32>}, {pipeline_mode = #tpu.pipeline_mode<synchronous>, transform_indices = @transform_16, window_bounds = array<i64: 1, 32>}, {pipeline_mode = #tpu.pipeline_mode<synchronous>, transform_indices = @transform_17, window_bounds = array<i64: 1, 32>}, {pipeline_mode = #tpu.pipeline_mode<synchronous>, transform_indices = @transform_18, window_bounds = array<i64: 1, 32>}, {transform_indices = @transform_19, window_bounds = array<i64: 1, 2, 32>}]} {
    %c0_i32 = arith.constant 0 : i32
    %0 = arith.cmpi eq, %arg1, %c0_i32 : i32
    %1 = arith.extui %0 : i1 to i32
    %c0_i32_0 = arith.constant 0 : i32
    %2 = arith.cmpi ne, %1, %c0_i32_0 : i32
    scf.if %2 {
      %c0_79 = arith.constant 0 : index
      %c0_80 = arith.constant 0 : index
      %c0_81 = arith.constant 0 : index
      %190 = vector.load %arg2[%c0_79, %c0_80, %c0_81] : memref<2x7x16xf32, #tpu.memory_space<vmem>>, vector<1x7x16xf32>
      %191 = vector.shape_cast %190 : vector<1x7x16xf32> to vector<7x16xf32>
      %192 = arith.truncf %191 : vector<7x16xf32> to vector<7x16xbf16>
      %c0_82 = arith.constant 0 : index
      %c0_83 = arith.constant 0 : index
      %193 = vector.load %arg3[%c0_82, %c0_83] : memref<16x32xbf16, #tpu.memory_space<vmem>>, vector<16x32xbf16>
      %cst_84 = arith.constant dense<0.000000e+00> : vector<7x32xf32>
      %194 = tpu.matmul %192, %193, %cst_84 {dimension_numbers = #tpu.dot_dimension_numbers<[1], [0], [0], [1], [0, 0, 1, 1], [], []>} : vector<7x16xbf16>, vector<16x32xbf16>, vector<7x32xf32> -> vector<7x32xf32>
      %c0_85 = arith.constant 0 : index
      %c0_86 = arith.constant 0 : index
      %195 = vector.load %arg4[%c0_85, %c0_86] : memref<1x32xf32, #tpu.memory_space<vmem>>, vector<1x32xf32>
      %196 = vector.broadcast %195 : vector<1x32xf32> to vector<7x32xf32>
      %197 = arith.addf %194, %196 : vector<7x32xf32>
      %c0_87 = arith.constant 0 : index
      %c0_88 = arith.constant 0 : index
      %198 = vector.load %arg5[%c0_87, %c0_88] : memref<7x32xf32, #tpu.memory_space<vmem>>, vector<7x32xf32>
      %199 = arith.addf %197, %198 : vector<7x32xf32>
      %c0_89 = arith.constant 0 : index
      %c0_90 = arith.constant 0 : index
      %200 = vector.load %arg6[%c0_89, %c0_90] : memref<1x32xf32, #tpu.memory_space<vmem>>, vector<1x32xf32>
      %c0_91 = arith.constant 0 : index
      %c0_92 = arith.constant 0 : index
      %201 = vector.load %arg22[%c0_91, %c0_92] : memref<16x32xf32, #tpu.memory_space<vmem>>, vector<1x32xf32>
      tpu.vector_store %arg22[%c0_91, %c0_92], %200 {strides = array<i32>} : memref<16x32xf32, #tpu.memory_space<vmem>>, vector<1x32xf32>,
      %c1 = arith.constant 1 : index
      %c0_93 = arith.constant 0 : index
      %202 = vector.load %arg22[%c1, %c0_93] : memref<16x32xf32, #tpu.memory_space<vmem>>, vector<7x32xf32>
      tpu.vector_store %arg22[%c1, %c0_93], %199 {strides = array<i32>} : memref<16x32xf32, #tpu.memory_space<vmem>>, vector<7x32xf32>,
      %c1_94 = arith.constant 1 : index
      %c0_95 = arith.constant 0 : index
      %c0_96 = arith.constant 0 : index
      %203 = vector.load %arg2[%c1_94, %c0_95, %c0_96] : memref<2x7x16xf32, #tpu.memory_space<vmem>>, vector<1x7x16xf32>
      %204 = vector.shape_cast %203 : vector<1x7x16xf32> to vector<7x16xf32>
      %205 = arith.truncf %204 : vector<7x16xf32> to vector<7x16xbf16>
      %c0_97 = arith.constant 0 : index
      %c0_98 = arith.constant 0 : index
      %206 = vector.load %arg3[%c0_97, %c0_98] : memref<16x32xbf16, #tpu.memory_space<vmem>>, vector<16x32xbf16>
      %cst_99 = arith.constant dense<0.000000e+00> : vector<7x32xf32>
      %207 = tpu.matmul %205, %206, %cst_99 {dimension_numbers = #tpu.dot_dimension_numbers<[1], [0], [0], [1], [0, 0, 1, 1], [], []>} : vector<7x16xbf16>, vector<16x32xbf16>, vector<7x32xf32> -> vector<7x32xf32>
      %c0_100 = arith.constant 0 : index
      %c0_101 = arith.constant 0 : index
      %208 = vector.load %arg4[%c0_100, %c0_101] : memref<1x32xf32, #tpu.memory_space<vmem>>, vector<1x32xf32>
      %209 = vector.broadcast %208 : vector<1x32xf32> to vector<7x32xf32>
      %210 = arith.addf %207, %209 : vector<7x32xf32>
      %c0_102 = arith.constant 0 : index
      %c0_103 = arith.constant 0 : index
      %211 = vector.load %arg5[%c0_102, %c0_103] : memref<7x32xf32, #tpu.memory_space<vmem>>, vector<7x32xf32>
      %212 = arith.addf %210, %211 : vector<7x32xf32>
      %c0_104 = arith.constant 0 : index
      %c0_105 = arith.constant 0 : index
      %213 = vector.load %arg6[%c0_104, %c0_105] : memref<1x32xf32, #tpu.memory_space<vmem>>, vector<1x32xf32>
      %c8 = arith.constant 8 : index
      %c0_106 = arith.constant 0 : index
      %214 = vector.load %arg22[%c8, %c0_106] : memref<16x32xf32, #tpu.memory_space<vmem>>, vector<1x32xf32>
      tpu.vector_store %arg22[%c8, %c0_106], %213 {strides = array<i32>} : memref<16x32xf32, #tpu.memory_space<vmem>>, vector<1x32xf32>,
      %c9 = arith.constant 9 : index
      %c0_107 = arith.constant 0 : index
      %215 = vector.load %arg22[%c9, %c0_107] : memref<16x32xf32, #tpu.memory_space<vmem>>, vector<7x32xf32>
      tpu.vector_store %arg22[%c9, %c0_107], %212 {strides = array<i32>} : memref<16x32xf32, #tpu.memory_space<vmem>>, vector<7x32xf32>,
    } else {
    }
    %c0 = arith.constant 0 : index
    %c0_1 = arith.constant 0 : index
    %3 = vector.load %arg22[%c0, %c0_1] : memref<16x32xf32, #tpu.memory_space<vmem>>, vector<16x32xf32>
    %c0_2 = arith.constant 0 : index
    %c0_3 = arith.constant 0 : index
    %c0_4 = arith.constant 0 : index
    %4 = vector.load %arg7[%c0_2, %c0_3, %c0_4] : memref<1x1x32xf32, #tpu.memory_space<vmem>>, vector<1x1x32xf32>
    %5 = vector.shape_cast %4 : vector<1x1x32xf32> to vector<1x32xf32>
    %c0_5 = arith.constant 0 : index
    %c0_6 = arith.constant 0 : index
    %c0_7 = arith.constant 0 : index
    %6 = vector.load %arg8[%c0_5, %c0_6, %c0_7] : memref<1x1x32xf32, #tpu.memory_space<vmem>>, vector<1x1x32xf32>
    %7 = vector.shape_cast %6 : vector<1x1x32xf32> to vector<1x32xf32>
    %cst = arith.constant dense<0.000000e+00> : vector<16xf32>
    %8 = vector.multi_reduction <add>, %3, %cst [1] : vector<16x32xf32> to vector<16xf32>
    %9 = vector.shape_cast %8 : vector<16xf32> to vector<16x1xf32>
    %cst_8 = arith.constant 3.200000e+01 : f32
    %10 = vector.broadcast %cst_8 : f32 to vector<16x1xf32>
    %11 = arith.divf %9, %10 : vector<16x1xf32>
    %12 = vector.broadcast %11 : vector<16x1xf32> to vector<16x32xf32>
    %13 = arith.subf %3, %12 : vector<16x32xf32>
    %14 = arith.mulf %13, %13 : vector<16x32xf32>
    %cst_9 = arith.constant dense<0.000000e+00> : vector<16xf32>
    %15 = vector.multi_reduction <add>, %14, %cst_9 [1] : vector<16x32xf32> to vector<16xf32>
    %16 = vector.shape_cast %15 : vector<16xf32> to vector<16x1xf32>
    %cst_10 = arith.constant 3.200000e+01 : f32
    %17 = vector.broadcast %cst_10 : f32 to vector<16x1xf32>
    %18 = arith.divf %16, %17 : vector<16x1xf32>
    %cst_11 = arith.constant 9.99999974E-6 : f32
    %19 = vector.broadcast %cst_11 : f32 to vector<16x1xf32>
    %20 = arith.addf %18, %19 : vector<16x1xf32>
    %21 = math.rsqrt %20 : vector<16x1xf32>
    %22 = vector.broadcast %21 : vector<16x1xf32> to vector<16x32xf32>
    %23 = arith.mulf %13, %22 : vector<16x32xf32>
    %24 = vector.broadcast %5 : vector<1x32xf32> to vector<16x32xf32>
    %25 = arith.mulf %23, %24 : vector<16x32xf32>
    %26 = vector.broadcast %7 : vector<1x32xf32> to vector<16x32xf32>
    %27 = arith.addf %25, %26 : vector<16x32xf32>
    %28 = arith.truncf %27 : vector<16x32xf32> to vector<16x32xbf16>
    %c0_12 = arith.constant 0 : index
    %c0_13 = arith.constant 0 : index
    %c0_14 = arith.constant 0 : index
    %29 = vector.load %arg9[%c0_12, %c0_13, %c0_14] : memref<1x32x96xbf16, #tpu.memory_space<vmem>>, vector<1x32x96xbf16>
    %30 = vector.shape_cast %29 : vector<1x32x96xbf16> to vector<32x96xbf16>
    %cst_15 = arith.constant dense<0.000000e+00> : vector<16x96xf32>
    %31 = tpu.matmul %28, %30, %cst_15 {dimension_numbers = #tpu.dot_dimension_numbers<[1], [0], [0], [1], [0, 0, 1, 1], [], []>} : vector<16x32xbf16>, vector<32x96xbf16>, vector<16x96xf32> -> vector<16x96xf32>
    %32 = arith.truncf %31 : vector<16x96xf32> to vector<16x96xbf16>
    %33 = vector.shape_cast %32 : vector<16x96xbf16> to vector<2x8x96xbf16>
    %34 = vector.extract_strided_slice %33 {offsets = [0, 0, 0], sizes = [2, 8, 8], strides = [1, 1, 1]} : vector<2x8x96xbf16> to vector<2x8x8xbf16>
    %35 = vector.extract_strided_slice %33 {offsets = [0, 0, 32], sizes = [2, 8, 8], strides = [1, 1, 1]} : vector<2x8x96xbf16> to vector<2x8x8xbf16>
    %36 = vector.extract_strided_slice %33 {offsets = [0, 0, 64], sizes = [2, 8, 8], strides = [1, 1, 1]} : vector<2x8x96xbf16> to vector<2x8x8xbf16>
    "tpu.trace_start"() <{level = 10 : i32, message = "bnd,bmd->bnm"}> : () -> ()
    %cst_16 = arith.constant dense<0.000000e+00> : vector<2x8x8xf32>
    %37 = tpu.matmul %34, %35, %cst_16 {dimension_numbers = #tpu.dot_dimension_numbers<[2], [2], [1], [1], [0, 0, 0, 1, 1, 1], [0], [0]>} : vector<2x8x8xbf16>, vector<2x8x8xbf16>, vector<2x8x8xf32> -> vector<2x8x8xf32>
    "tpu.trace_stop"() : () -> ()
    %cst_17 = arith.constant dense<0xFF800000> : vector<2x8xf32>
    %38 = vector.multi_reduction <maximumf>, %37, %cst_17 [2] : vector<2x8x8xf32> to vector<2x8xf32>
    %39 = vector.shape_cast %38 : vector<2x8xf32> to vector<2x8x1xf32>
    %40 = vector.broadcast %39 : vector<2x8x1xf32> to vector<2x8x8xf32>
    %41 = arith.subf %37, %40 : vector<2x8x8xf32>
    %42 = math.exp %41 : vector<2x8x8xf32>
    %cst_18 = arith.constant dense<0.000000e+00> : vector<2x8xf32>
    %43 = vector.multi_reduction <add>, %42, %cst_18 [2] : vector<2x8x8xf32> to vector<2x8xf32>
    %44 = vector.shape_cast %43 : vector<2x8xf32> to vector<2x8x1xf32>
    %45 = tpu.reciprocal %44 {approx = true} : vector<2x8x1xf32> -> vector<2x8x1xf32>
    %46 = vector.broadcast %45 : vector<2x8x1xf32> to vector<2x8x8xf32>
    %47 = arith.mulf %42, %46 : vector<2x8x8xf32>
    %48 = arith.truncf %47 : vector<2x8x8xf32> to vector<2x8x8xbf16>
    "tpu.trace_start"() <{level = 10 : i32, message = "bnm,bmd->bnd"}> : () -> ()
    %cst_19 = arith.constant dense<0.000000e+00> : vector<2x8x8xf32>
    %49 = tpu.matmul %48, %36, %cst_19 {dimension_numbers = #tpu.dot_dimension_numbers<[2], [1], [1], [2], [0, 0, 0, 1, 1, 2], [0], [0]>} : vector<2x8x8xbf16>, vector<2x8x8xbf16>, vector<2x8x8xf32> -> vector<2x8x8xf32>
    "tpu.trace_stop"() : () -> ()
    %50 = vector.extract_strided_slice %33 {offsets = [0, 0, 8], sizes = [2, 8, 8], strides = [1, 1, 1]} : vector<2x8x96xbf16> to vector<2x8x8xbf16>
    %51 = vector.extract_strided_slice %33 {offsets = [0, 0, 40], sizes = [2, 8, 8], strides = [1, 1, 1]} : vector<2x8x96xbf16> to vector<2x8x8xbf16>
    %52 = vector.extract_strided_slice %33 {offsets = [0, 0, 72], sizes = [2, 8, 8], strides = [1, 1, 1]} : vector<2x8x96xbf16> to vector<2x8x8xbf16>
    "tpu.trace_start"() <{level = 10 : i32, message = "bnd,bmd->bnm"}> : () -> ()
    %cst_20 = arith.constant dense<0.000000e+00> : vector<2x8x8xf32>
    %53 = tpu.matmul %50, %51, %cst_20 {dimension_numbers = #tpu.dot_dimension_numbers<[2], [2], [1], [1], [0, 0, 0, 1, 1, 1], [0], [0]>} : vector<2x8x8xbf16>, vector<2x8x8xbf16>, vector<2x8x8xf32> -> vector<2x8x8xf32>
    "tpu.trace_stop"() : () -> ()
    %cst_21 = arith.constant dense<0xFF800000> : vector<2x8xf32>
    %54 = vector.multi_reduction <maximumf>, %53, %cst_21 [2] : vector<2x8x8xf32> to vector<2x8xf32>
    %55 = vector.shape_cast %54 : vector<2x8xf32> to vector<2x8x1xf32>
    %56 = vector.broadcast %55 : vector<2x8x1xf32> to vector<2x8x8xf32>
    %57 = arith.subf %53, %56 : vector<2x8x8xf32>
    %58 = math.exp %57 : vector<2x8x8xf32>
    %cst_22 = arith.constant dense<0.000000e+00> : vector<2x8xf32>
    %59 = vector.multi_reduction <add>, %58, %cst_22 [2] : vector<2x8x8xf32> to vector<2x8xf32>
    %60 = vector.shape_cast %59 : vector<2x8xf32> to vector<2x8x1xf32>
    %61 = tpu.reciprocal %60 {approx = true} : vector<2x8x1xf32> -> vector<2x8x1xf32>
    %62 = vector.broadcast %61 : vector<2x8x1xf32> to vector<2x8x8xf32>
    %63 = arith.mulf %58, %62 : vector<2x8x8xf32>
    %64 = arith.truncf %63 : vector<2x8x8xf32> to vector<2x8x8xbf16>
    "tpu.trace_start"() <{level = 10 : i32, message = "bnm,bmd->bnd"}> : () -> ()
    %cst_23 = arith.constant dense<0.000000e+00> : vector<2x8x8xf32>
    %65 = tpu.matmul %64, %52, %cst_23 {dimension_numbers = #tpu.dot_dimension_numbers<[2], [1], [1], [2], [0, 0, 0, 1, 1, 2], [0], [0]>} : vector<2x8x8xbf16>, vector<2x8x8xbf16>, vector<2x8x8xf32> -> vector<2x8x8xf32>
    "tpu.trace_stop"() : () -> ()
    %66 = vector.extract_strided_slice %33 {offsets = [0, 0, 16], sizes = [2, 8, 8], strides = [1, 1, 1]} : vector<2x8x96xbf16> to vector<2x8x8xbf16>
    %67 = vector.extract_strided_slice %33 {offsets = [0, 0, 48], sizes = [2, 8, 8], strides = [1, 1, 1]} : vector<2x8x96xbf16> to vector<2x8x8xbf16>
    %68 = vector.extract_strided_slice %33 {offsets = [0, 0, 80], sizes = [2, 8, 8], strides = [1, 1, 1]} : vector<2x8x96xbf16> to vector<2x8x8xbf16>
    "tpu.trace_start"() <{level = 10 : i32, message = "bnd,bmd->bnm"}> : () -> ()
    %cst_24 = arith.constant dense<0.000000e+00> : vector<2x8x8xf32>
    %69 = tpu.matmul %66, %67, %cst_24 {dimension_numbers = #tpu.dot_dimension_numbers<[2], [2], [1], [1], [0, 0, 0, 1, 1, 1], [0], [0]>} : vector<2x8x8xbf16>, vector<2x8x8xbf16>, vector<2x8x8xf32> -> vector<2x8x8xf32>
    "tpu.trace_stop"() : () -> ()
    %cst_25 = arith.constant dense<0xFF800000> : vector<2x8xf32>
    %70 = vector.multi_reduction <maximumf>, %69, %cst_25 [2] : vector<2x8x8xf32> to vector<2x8xf32>
    %71 = vector.shape_cast %70 : vector<2x8xf32> to vector<2x8x1xf32>
    %72 = vector.broadcast %71 : vector<2x8x1xf32> to vector<2x8x8xf32>
    %73 = arith.subf %69, %72 : vector<2x8x8xf32>
    %74 = math.exp %73 : vector<2x8x8xf32>
    %cst_26 = arith.constant dense<0.000000e+00> : vector<2x8xf32>
    %75 = vector.multi_reduction <add>, %74, %cst_26 [2] : vector<2x8x8xf32> to vector<2x8xf32>
    %76 = vector.shape_cast %75 : vector<2x8xf32> to vector<2x8x1xf32>
    %77 = tpu.reciprocal %76 {approx = true} : vector<2x8x1xf32> -> vector<2x8x1xf32>
    %78 = vector.broadcast %77 : vector<2x8x1xf32> to vector<2x8x8xf32>
    %79 = arith.mulf %74, %78 : vector<2x8x8xf32>
    %80 = arith.truncf %79 : vector<2x8x8xf32> to vector<2x8x8xbf16>
    "tpu.trace_start"() <{level = 10 : i32, message = "bnm,bmd->bnd"}> : () -> ()
    %cst_27 = arith.constant dense<0.000000e+00> : vector<2x8x8xf32>
    %81 = tpu.matmul %80, %68, %cst_27 {dimension_numbers = #tpu.dot_dimension_numbers<[2], [1], [1], [2], [0, 0, 0, 1, 1, 2], [0], [0]>} : vector<2x8x8xbf16>, vector<2x8x8xbf16>, vector<2x8x8xf32> -> vector<2x8x8xf32>
    "tpu.trace_stop"() : () -> ()
    %82 = vector.extract_strided_slice %33 {offsets = [0, 0, 24], sizes = [2, 8, 8], strides = [1, 1, 1]} : vector<2x8x96xbf16> to vector<2x8x8xbf16>
    %83 = vector.extract_strided_slice %33 {offsets = [0, 0, 56], sizes = [2, 8, 8], strides = [1, 1, 1]} : vector<2x8x96xbf16> to vector<2x8x8xbf16>
    %84 = vector.extract_strided_slice %33 {offsets = [0, 0, 88], sizes = [2, 8, 8], strides = [1, 1, 1]} : vector<2x8x96xbf16> to vector<2x8x8xbf16>
    "tpu.trace_start"() <{level = 10 : i32, message = "bnd,bmd->bnm"}> : () -> ()
    %cst_28 = arith.constant dense<0.000000e+00> : vector<2x8x8xf32>
    %85 = tpu.matmul %82, %83, %cst_28 {dimension_numbers = #tpu.dot_dimension_numbers<[2], [2], [1], [1], [0, 0, 0, 1, 1, 1], [0], [0]>} : vector<2x8x8xbf16>, vector<2x8x8xbf16>, vector<2x8x8xf32> -> vector<2x8x8xf32>
    "tpu.trace_stop"() : () -> ()
    %cst_29 = arith.constant dense<0xFF800000> : vector<2x8xf32>
    %86 = vector.multi_reduction <maximumf>, %85, %cst_29 [2] : vector<2x8x8xf32> to vector<2x8xf32>
    %87 = vector.shape_cast %86 : vector<2x8xf32> to vector<2x8x1xf32>
    %88 = vector.broadcast %87 : vector<2x8x1xf32> to vector<2x8x8xf32>
    %89 = arith.subf %85, %88 : vector<2x8x8xf32>
    %90 = math.exp %89 : vector<2x8x8xf32>
    %cst_30 = arith.constant dense<0.000000e+00> : vector<2x8xf32>
    %91 = vector.multi_reduction <add>, %90, %cst_30 [2] : vector<2x8x8xf32> to vector<2x8xf32>
    %92 = vector.shape_cast %91 : vector<2x8xf32> to vector<2x8x1xf32>
    %93 = tpu.reciprocal %92 {approx = true} : vector<2x8x1xf32> -> vector<2x8x1xf32>
    %94 = vector.broadcast %93 : vector<2x8x1xf32> to vector<2x8x8xf32>
    %95 = arith.mulf %90, %94 : vector<2x8x8xf32>
    %96 = arith.truncf %95 : vector<2x8x8xf32> to vector<2x8x8xbf16>
    "tpu.trace_start"() <{level = 10 : i32, message = "bnm,bmd->bnd"}> : () -> ()
    %cst_31 = arith.constant dense<0.000000e+00> : vector<2x8x8xf32>
    %97 = tpu.matmul %96, %84, %cst_31 {dimension_numbers = #tpu.dot_dimension_numbers<[2], [1], [1], [2], [0, 0, 0, 1, 1, 2], [0], [0]>} : vector<2x8x8xbf16>, vector<2x8x8xbf16>, vector<2x8x8xf32> -> vector<2x8x8xf32>
    "tpu.trace_stop"() : () -> ()
    %98 = tpu.concatenate %49, %65, %81, %97 in 2 : vector<2x8x8xf32>, vector<2x8x8xf32>, vector<2x8x8xf32>, vector<2x8x8xf32> -> vector<2x8x32xf32>
    %99 = vector.shape_cast %98 : vector<2x8x32xf32> to vector<16x32xf32>
    %100 = arith.truncf %99 : vector<16x32xf32> to vector<16x32xbf16>
    %c0_32 = arith.constant 0 : index
    %c0_33 = arith.constant 0 : index
    %c0_34 = arith.constant 0 : index
    %101 = vector.load %arg10[%c0_32, %c0_33, %c0_34] : memref<1x32x32xbf16, #tpu.memory_space<vmem>>, vector<1x32x32xbf16>
    %102 = vector.shape_cast %101 : vector<1x32x32xbf16> to vector<32x32xbf16>
    %cst_35 = arith.constant dense<0.000000e+00> : vector<16x32xf32>
    %103 = tpu.matmul %100, %102, %cst_35 {dimension_numbers = #tpu.dot_dimension_numbers<[1], [0], [0], [1], [0, 0, 1, 1], [], []>} : vector<16x32xbf16>, vector<32x32xbf16>, vector<16x32xf32> -> vector<16x32xf32>
    %104 = arith.addf %3, %103 : vector<16x32xf32>
    %c0_36 = arith.constant 0 : index
    %c0_37 = arith.constant 0 : index
    %c0_38 = arith.constant 0 : index
    %105 = vector.load %arg11[%c0_36, %c0_37, %c0_38] : memref<1x1x32xf32, #tpu.memory_space<vmem>>, vector<1x1x32xf32>
    %106 = vector.shape_cast %105 : vector<1x1x32xf32> to vector<1x32xf32>
    %c0_39 = arith.constant 0 : index
    %c0_40 = arith.constant 0 : index
    %c0_41 = arith.constant 0 : index
    %107 = vector.load %arg12[%c0_39, %c0_40, %c0_41] : memref<1x1x32xf32, #tpu.memory_space<vmem>>, vector<1x1x32xf32>
    %108 = vector.shape_cast %107 : vector<1x1x32xf32> to vector<1x32xf32>
    %cst_42 = arith.constant dense<0.000000e+00> : vector<16xf32>
    %109 = vector.multi_reduction <add>, %104, %cst_42 [1] : vector<16x32xf32> to vector<16xf32>
    %110 = vector.shape_cast %109 : vector<16xf32> to vector<16x1xf32>
    %cst_43 = arith.constant 3.200000e+01 : f32
    %111 = vector.broadcast %cst_43 : f32 to vector<16x1xf32>
    %112 = arith.divf %110, %111 : vector<16x1xf32>
    %113 = vector.broadcast %112 : vector<16x1xf32> to vector<16x32xf32>
    %114 = arith.subf %104, %113 : vector<16x32xf32>
    %115 = arith.mulf %114, %114 : vector<16x32xf32>
    %cst_44 = arith.constant dense<0.000000e+00> : vector<16xf32>
    %116 = vector.multi_reduction <add>, %115, %cst_44 [1] : vector<16x32xf32> to vector<16xf32>
    %117 = vector.shape_cast %116 : vector<16xf32> to vector<16x1xf32>
    %cst_45 = arith.constant 3.200000e+01 : f32
    %118 = vector.broadcast %cst_45 : f32 to vector<16x1xf32>
    %119 = arith.divf %117, %118 : vector<16x1xf32>
    %cst_46 = arith.constant 9.99999974E-6 : f32
    %120 = vector.broadcast %cst_46 : f32 to vector<16x1xf32>
    %121 = arith.addf %119, %120 : vector<16x1xf32>
    %122 = math.rsqrt %121 : vector<16x1xf32>
    %123 = vector.broadcast %122 : vector<16x1xf32> to vector<16x32xf32>
    %124 = arith.mulf %114, %123 : vector<16x32xf32>
    %125 = vector.broadcast %106 : vector<1x32xf32> to vector<16x32xf32>
    %126 = arith.mulf %124, %125 : vector<16x32xf32>
    %127 = vector.broadcast %108 : vector<1x32xf32> to vector<16x32xf32>
    %128 = arith.addf %126, %127 : vector<16x32xf32>
    %129 = arith.truncf %128 : vector<16x32xf32> to vector<16x32xbf16>
    %c0_47 = arith.constant 0 : index
    %c0_48 = arith.constant 0 : index
    %c0_49 = arith.constant 0 : index
    %130 = vector.load %arg13[%c0_47, %c0_48, %c0_49] : memref<1x32x128xbf16, #tpu.memory_space<vmem>>, vector<1x32x128xbf16>
    %131 = vector.shape_cast %130 : vector<1x32x128xbf16> to vector<32x128xbf16>
    %cst_50 = arith.constant dense<0.000000e+00> : vector<16x128xf32>
    %132 = tpu.matmul %129, %131, %cst_50 {dimension_numbers = #tpu.dot_dimension_numbers<[1], [0], [0], [1], [0, 0, 1, 1], [], []>} : vector<16x32xbf16>, vector<32x128xbf16>, vector<16x128xf32> -> vector<16x128xf32>
    %c0_51 = arith.constant 0 : index
    %c0_52 = arith.constant 0 : index
    %c0_53 = arith.constant 0 : index
    %133 = vector.load %arg14[%c0_51, %c0_52, %c0_53] : memref<1x1x128xf32, #tpu.memory_space<vmem>>, vector<1x1x128xf32>
    %134 = vector.shape_cast %133 : vector<1x1x128xf32> to vector<1x128xf32>
    %135 = vector.broadcast %134 : vector<1x128xf32> to vector<16x128xf32>
    %136 = arith.addf %132, %135 : vector<16x128xf32>
    %cst_54 = arith.constant 5.000000e-01 : f32
    %137 = vector.broadcast %cst_54 : f32 to vector<16x128xf32>
    %138 = arith.mulf %137, %136 : vector<16x128xf32>
    %cst_55 = arith.constant 0.707106769 : f32
    %139 = vector.broadcast %cst_55 : f32 to vector<16x128xf32>
    %140 = arith.mulf %136, %139 : vector<16x128xf32>
    %141 = math.absf %140 : vector<16x128xf32>
    %cst_56 = arith.constant 0.327591091 : f32
    %142 = vector.broadcast %cst_56 : f32 to vector<16x128xf32>
    %143 = arith.mulf %142, %141 : vector<16x128xf32>
    %cst_57 = arith.constant 1.000000e+00 : f32
    %144 = vector.broadcast %cst_57 : f32 to vector<16x128xf32>
    %145 = arith.addf %144, %143 : vector<16x128xf32>
    %cst_58 = arith.constant 1.000000e+00 : f32
    %146 = vector.broadcast %cst_58 : f32 to vector<16x128xf32>
    %147 = arith.divf %146, %145 : vector<16x128xf32>
    %cst_59 = arith.constant 1.06140542 : f32
    %148 = vector.broadcast %cst_59 : f32 to vector<16x128xf32>
    %149 = arith.mulf %148, %147 : vector<16x128xf32>
    %cst_60 = arith.constant -1.45315206 : f32
    %150 = vector.broadcast %cst_60 : f32 to vector<16x128xf32>
    %151 = arith.addf %149, %150 : vector<16x128xf32>
    %152 = arith.mulf %151, %147 : vector<16x128xf32>
    %cst_61 = arith.constant 1.42141378 : f32
    %153 = vector.broadcast %cst_61 : f32 to vector<16x128xf32>
    %154 = arith.addf %152, %153 : vector<16x128xf32>
    %155 = arith.mulf %154, %147 : vector<16x128xf32>
    %cst_62 = arith.constant -0.284496725 : f32
    %156 = vector.broadcast %cst_62 : f32 to vector<16x128xf32>
    %157 = arith.addf %155, %156 : vector<16x128xf32>
    %158 = arith.mulf %157, %147 : vector<16x128xf32>
    %cst_63 = arith.constant 0.254829586 : f32
    %159 = vector.broadcast %cst_63 : f32 to vector<16x128xf32>
    %160 = arith.addf %158, %159 : vector<16x128xf32>
    %161 = arith.mulf %160, %147 : vector<16x128xf32>
    %cst_64 = arith.constant 0.000000e+00 : f32
    %162 = vector.broadcast %cst_64 : f32 to vector<16x128xf32>
    %163 = arith.subf %162, %141 : vector<16x128xf32>
    %164 = arith.mulf %163, %141 : vector<16x128xf32>
    %165 = math.exp %164 : vector<16x128xf32>
    %166 = arith.mulf %161, %165 : vector<16x128xf32>
    %cst_65 = arith.constant 1.000000e+00 : f32
    %167 = vector.broadcast %cst_65 : f32 to vector<16x128xf32>
    %168 = arith.subf %167, %166 : vector<16x128xf32>
    %cst_66 = arith.constant 0.000000e+00 : f32
    %169 = vector.broadcast %cst_66 : f32 to vector<16x128xf32>
    %170 = arith.cmpf oge, %140, %169 : vector<16x128xf32>
    %cst_67 = arith.constant 0.000000e+00 : f32
    %171 = vector.broadcast %cst_67 : f32 to vector<16x128xf32>
    %172 = arith.subf %171, %168 : vector<16x128xf32>
    %173 = arith.select %170, %168, %172 : vector<16x128xi1>, vector<16x128xf32>
    %cst_68 = arith.constant 1.000000e+00 : f32
    %174 = vector.broadcast %cst_68 : f32 to vector<16x128xf32>
    %175 = arith.addf %174, %173 : vector<16x128xf32>
    %176 = arith.mulf %138, %175 : vector<16x128xf32>
    %177 = arith.truncf %176 : vector<16x128xf32> to vector<16x128xbf16>
    %c0_69 = arith.constant 0 : index
    %c0_70 = arith.constant 0 : index
    %c0_71 = arith.constant 0 : index
    %178 = vector.load %arg15[%c0_69, %c0_70, %c0_71] : memref<1x128x32xbf16, #tpu.memory_space<vmem>>, vector<1x128x32xbf16>
    %179 = vector.shape_cast %178 : vector<1x128x32xbf16> to vector<128x32xbf16>
    %cst_72 = arith.constant dense<0.000000e+00> : vector<16x32xf32>
    %180 = tpu.matmul %177, %179, %cst_72 {dimension_numbers = #tpu.dot_dimension_numbers<[1], [0], [0], [1], [0, 0, 1, 1], [], []>} : vector<16x128xbf16>, vector<128x32xbf16>, vector<16x32xf32> -> vector<16x32xf32>
    %181 = arith.addf %104, %180 : vector<16x32xf32>
    %c0_73 = arith.constant 0 : index
    %c0_74 = arith.constant 0 : index
    %c0_75 = arith.constant 0 : index
    %182 = vector.load %arg16[%c0_73, %c0_74, %c0_75] : memref<1x1x32xf32, #tpu.memory_space<vmem>>, vector<1x1x32xf32>
    %183 = vector.shape_cast %182 : vector<1x1x32xf32> to vector<1x32xf32>
    %184 = vector.broadcast %183 : vector<1x32xf32> to vector<16x32xf32>
    %185 = arith.addf %181, %184 : vector<16x32xf32>
    %c0_76 = arith.constant 0 : index
    %c0_77 = arith.constant 0 : index
    %186 = vector.load %arg22[%c0_76, %c0_77] : memref<16x32xf32, #tpu.memory_space<vmem>>, vector<16x32xf32>
    tpu.vector_store %arg22[%c0_76, %c0_77], %185 {strides = array<i32>} : memref<16x32xf32, #tpu.memory_space<vmem>>, vector<16x32xf32>,
    %c1_i32 = arith.constant 1 : i32
    %187 = arith.cmpi eq, %arg1, %c1_i32 : i32
    %188 = arith.extui %187 : i1 to i32
    %c0_i32_78 = arith.constant 0 : i32
    %189 = arith.cmpi ne, %188, %c0_i32_78 : i32
    scf.if %189 {
      %190 = vector.shape_cast %185 : vector<16x32xf32> to vector<2x8x32xf32>
      %191 = vector.extract_strided_slice %190 {offsets = [0, 0, 0], sizes = [2, 1, 32], strides = [1, 1, 1]} : vector<2x8x32xf32> to vector<2x1x32xf32>
      %192 = vector.shape_cast %191 : vector<2x1x32xf32> to vector<2x32xf32>
      %c0_79 = arith.constant 0 : index
      %c0_80 = arith.constant 0 : index
      %193 = vector.load %arg17[%c0_79, %c0_80] : memref<1x32xf32, #tpu.memory_space<vmem>>, vector<1x32xf32>
      %c0_81 = arith.constant 0 : index
      %c0_82 = arith.constant 0 : index
      %194 = vector.load %arg18[%c0_81, %c0_82] : memref<1x32xf32, #tpu.memory_space<vmem>>, vector<1x32xf32>
      %cst_83 = arith.constant dense<0.000000e+00> : vector<2xf32>
      %195 = vector.multi_reduction <add>, %192, %cst_83 [1] : vector<2x32xf32> to vector<2xf32>
      %196 = vector.shape_cast %195 : vector<2xf32> to vector<2x1xf32>
      %cst_84 = arith.constant 3.200000e+01 : f32
      %197 = vector.broadcast %cst_84 : f32 to vector<2x1xf32>
      %198 = arith.divf %196, %197 : vector<2x1xf32>
      %199 = vector.broadcast %198 : vector<2x1xf32> to vector<2x32xf32>
      %200 = arith.subf %192, %199 : vector<2x32xf32>
      %201 = arith.mulf %200, %200 : vector<2x32xf32>
      %cst_85 = arith.constant dense<0.000000e+00> : vector<2xf32>
      %202 = vector.multi_reduction <add>, %201, %cst_85 [1] : vector<2x32xf32> to vector<2xf32>
      %203 = vector.shape_cast %202 : vector<2xf32> to vector<2x1xf32>
      %cst_86 = arith.constant 3.200000e+01 : f32
      %204 = vector.broadcast %cst_86 : f32 to vector<2x1xf32>
      %205 = arith.divf %203, %204 : vector<2x1xf32>
      %cst_87 = arith.constant 9.99999974E-6 : f32
      %206 = vector.broadcast %cst_87 : f32 to vector<2x1xf32>
      %207 = arith.addf %205, %206 : vector<2x1xf32>
      %208 = math.rsqrt %207 : vector<2x1xf32>
      %209 = vector.broadcast %208 : vector<2x1xf32> to vector<2x32xf32>
      %210 = arith.mulf %200, %209 : vector<2x32xf32>
      %211 = vector.broadcast %193 : vector<1x32xf32> to vector<2x32xf32>
      %212 = arith.mulf %210, %211 : vector<2x32xf32>
      %213 = vector.broadcast %194 : vector<1x32xf32> to vector<2x32xf32>
      %214 = arith.addf %212, %213 : vector<2x32xf32>
      %c0_88 = arith.constant 0 : index
      %c0_89 = arith.constant 0 : index
      %215 = vector.load %arg19[%c0_88, %c0_89] : memref<1x32xf32, #tpu.memory_space<vmem>>, vector<1x32xf32>
      %c0_90 = arith.constant 0 : index
      %c0_91 = arith.constant 0 : index
      %216 = vector.load %arg20[%c0_90, %c0_91] : memref<1x32xf32, #tpu.memory_space<vmem>>, vector<1x32xf32>
      %cst_92 = arith.constant dense<0.000000e+00> : vector<2xf32>
      %217 = vector.multi_reduction <add>, %214, %cst_92 [1] : vector<2x32xf32> to vector<2xf32>
      %218 = vector.shape_cast %217 : vector<2xf32> to vector<2x1xf32>
      %cst_93 = arith.constant 3.200000e+01 : f32
      %219 = vector.broadcast %cst_93 : f32 to vector<2x1xf32>
      %220 = arith.divf %218, %219 : vector<2x1xf32>
      %221 = vector.broadcast %220 : vector<2x1xf32> to vector<2x32xf32>
      %222 = arith.subf %214, %221 : vector<2x32xf32>
      %223 = arith.mulf %222, %222 : vector<2x32xf32>
      %cst_94 = arith.constant dense<0.000000e+00> : vector<2xf32>
      %224 = vector.multi_reduction <add>, %223, %cst_94 [1] : vector<2x32xf32> to vector<2xf32>
      %225 = vector.shape_cast %224 : vector<2xf32> to vector<2x1xf32>
      %cst_95 = arith.constant 3.200000e+01 : f32
      %226 = vector.broadcast %cst_95 : f32 to vector<2x1xf32>
      %227 = arith.divf %225, %226 : vector<2x1xf32>
      %cst_96 = arith.constant 9.99999974E-6 : f32
      %228 = vector.broadcast %cst_96 : f32 to vector<2x1xf32>
      %229 = arith.addf %227, %228 : vector<2x1xf32>
      %230 = math.rsqrt %229 : vector<2x1xf32>
      %231 = vector.broadcast %230 : vector<2x1xf32> to vector<2x32xf32>
      %232 = arith.mulf %222, %231 : vector<2x32xf32>
      %233 = vector.broadcast %215 : vector<1x32xf32> to vector<2x32xf32>
      %234 = arith.mulf %232, %233 : vector<2x32xf32>
      %235 = vector.broadcast %216 : vector<1x32xf32> to vector<2x32xf32>
      %236 = arith.addf %234, %235 : vector<2x32xf32>
      %c0_97 = arith.constant 0 : index
      %c0_98 = arith.constant 0 : index
      %c0_99 = arith.constant 0 : index
      %237 = vector.load %arg21[%c0_97, %c0_98, %c0_99] : memref<1x2x32xf32, #tpu.memory_space<vmem>>, vector<1x2x32xf32>
      %238 = vector.shape_cast %237 : vector<1x2x32xf32> to vector<2x32xf32>
      %239 = vector.shape_cast %236 : vector<2x32xf32> to vector<1x2x32xf32>
      tpu.vector_store %arg21[%c0_97, %c0_98, %c0_99], %239 {strides = array<i32>} : memref<1x2x32xf32, #tpu.memory_space<vmem>>, vector<1x2x32xf32>,
    } else {
    }
    return
  }
  func.func @transform_0(%arg0: i32, %arg1: i32) -> (i32, i32, i32) {
    %c0_i32 = arith.constant 0 : i32
    %c0_i32_0 = arith.constant 0 : i32
    %c0_i32_1 = arith.constant 0 : i32
    return %arg0, %c0_i32, %c0_i32_0 : i32, i32, i32
  }
  func.func @transform_1(%arg0: i32, %arg1: i32) -> (i32, i32) {
    %c0_i32 = arith.constant 0 : i32
    %c0_i32_0 = arith.constant 0 : i32
    %c0_i32_1 = arith.constant 0 : i32
    return %c0_i32, %c0_i32_0 : i32, i32
  }
  func.func @transform_2(%arg0: i32, %arg1: i32) -> (i32, i32) {
    %c0_i32 = arith.constant 0 : i32
    %c0_i32_0 = arith.constant 0 : i32
    %c0_i32_1 = arith.constant 0 : i32
    return %c0_i32, %c0_i32_0 : i32, i32
  }
  func.func @transform_3(%arg0: i32, %arg1: i32) -> (i32, i32) {
    %c0_i32 = arith.constant 0 : i32
    %c0_i32_0 = arith.constant 0 : i32
    %c0_i32_1 = arith.constant 0 : i32
    return %c0_i32, %c0_i32_0 : i32, i32
  }
  func.func @transform_4(%arg0: i32, %arg1: i32) -> (i32, i32) {
    %c0_i32 = arith.constant 0 : i32
    %c0_i32_0 = arith.constant 0 : i32
    %c0_i32_1 = arith.constant 0 : i32
    return %c0_i32, %c0_i32_0 : i32, i32
  }
  func.func @transform_5(%arg0: i32, %arg1: i32) -> (i32, i32, i32) {
    %c0_i32 = arith.constant 0 : i32
    %c0_i32_0 = arith.constant 0 : i32
    %c0_i32_1 = arith.constant 0 : i32
    return %arg1, %c0_i32, %c0_i32_0 : i32, i32, i32
  }
  func.func @transform_6(%arg0: i32, %arg1: i32) -> (i32, i32, i32) {
    %c0_i32 = arith.constant 0 : i32
    %c0_i32_0 = arith.constant 0 : i32
    %c0_i32_1 = arith.constant 0 : i32
    return %arg1, %c0_i32, %c0_i32_0 : i32, i32, i32
  }
  func.func @transform_7(%arg0: i32, %arg1: i32) -> (i32, i32, i32) {
    %c0_i32 = arith.constant 0 : i32
    %c0_i32_0 = arith.constant 0 : i32
    %c0_i32_1 = arith.constant 0 : i32
    return %arg1, %c0_i32, %c0_i32_0 : i32, i32, i32
  }
  func.func @transform_8(%arg0: i32, %arg1: i32) -> (i32, i32, i32) {
    %c0_i32 = arith.constant 0 : i32
    %c0_i32_0 = arith.constant 0 : i32
    %c0_i32_1 = arith.constant 0 : i32
    return %arg1, %c0_i32, %c0_i32_0 : i32, i32, i32
  }
  func.func @transform_9(%arg0: i32, %arg1: i32) -> (i32, i32, i32) {
    %c0_i32 = arith.constant 0 : i32
    %c0_i32_0 = arith.constant 0 : i32
    %c0_i32_1 = arith.constant 0 : i32
    return %arg1, %c0_i32, %c0_i32_0 : i32, i32, i32
  }
  func.func @transform_10(%arg0: i32, %arg1: i32) -> (i32, i32, i32) {
    %c0_i32 = arith.constant 0 : i32
    %c0_i32_0 = arith.constant 0 : i32
    %c0_i32_1 = arith.constant 0 : i32
    return %arg1, %c0_i32, %c0_i32_0 : i32, i32, i32
  }
  func.func @transform_11(%arg0: i32, %arg1: i32) -> (i32, i32, i32) {
    %c0_i32 = arith.constant 0 : i32
    %c0_i32_0 = arith.constant 0 : i32
    %c0_i32_1 = arith.constant 0 : i32
    return %arg1, %c0_i32, %c0_i32_0 : i32, i32, i32
  }
  func.func @transform_12(%arg0: i32, %arg1: i32) -> (i32, i32, i32) {
    %c0_i32 = arith.constant 0 : i32
    %c0_i32_0 = arith.constant 0 : i32
    %c0_i32_1 = arith.constant 0 : i32
    return %arg1, %c0_i32, %c0_i32_0 : i32, i32, i32
  }
  func.func @transform_13(%arg0: i32, %arg1: i32) -> (i32, i32, i32) {
    %c0_i32 = arith.constant 0 : i32
    %c0_i32_0 = arith.constant 0 : i32
    %c0_i32_1 = arith.constant 0 : i32
    return %arg1, %c0_i32, %c0_i32_0 : i32, i32, i32
  }
  func.func @transform_14(%arg0: i32, %arg1: i32) -> (i32, i32, i32) {
    %c0_i32 = arith.constant 0 : i32
    %c0_i32_0 = arith.constant 0 : i32
    %c0_i32_1 = arith.constant 0 : i32
    return %arg1, %c0_i32, %c0_i32_0 : i32, i32, i32
  }
  func.func @transform_15(%arg0: i32, %arg1: i32) -> (i32, i32) {
    %c0_i32 = arith.constant 0 : i32
    %c0_i32_0 = arith.constant 0 : i32
    %c0_i32_1 = arith.constant 0 : i32
    return %c0_i32, %c0_i32_0 : i32, i32
  }
  func.func @transform_16(%arg0: i32, %arg1: i32) -> (i32, i32) {
    %c0_i32 = arith.constant 0 : i32
    %c0_i32_0 = arith.constant 0 : i32
    %c0_i32_1 = arith.constant 0 : i32
    return %c0_i32, %c0_i32_0 : i32, i32
  }
  func.func @transform_17(%arg0: i32, %arg1: i32) -> (i32, i32) {
    %c0_i32 = arith.constant 0 : i32
    %c0_i32_0 = arith.constant 0 : i32
    %c0_i32_1 = arith.constant 0 : i32
    return %c0_i32, %c0_i32_0 : i32, i32
  }
  func.func @transform_18(%arg0: i32, %arg1: i32) -> (i32, i32) {
    %c0_i32 = arith.constant 0 : i32
    %c0_i32_0 = arith.constant 0 : i32
    %c0_i32_1 = arith.constant 0 : i32
    return %c0_i32, %c0_i32_0 : i32, i32
  }
  func.func @transform_19(%arg0: i32, %arg1: i32) -> (i32, i32, i32) {
    %c0_i32 = arith.constant 0 : i32
    %c0_i32_0 = arith.constant 0 : i32
    %c0_i32_1 = arith.constant 0 : i32
    return %arg0, %c0_i32, %c0_i32_0 : i32, i32, i32
  }
}

</mosaic_0001>

<llo_original>
// kernel: forward.1
$region0: #{forward.1}
  #allocation0 [shape = 'u32[]', space=smem, size = 0x4, offset = 0x4, fixed_abs, tag = 'smem constant byte address 0x4 - core index']
  #allocation1 [shape = 'u32[144,128]{1,0:T(1,128)}', space=vmem, size = 0x12000, scoped, tag = 'internal scratch']
  #allocation2 [shape = 'f32[16,32]{1,0:T(8,128)}', space=vmem, size = 0x2000, scoped, tag = 'scratch operand']
  %s0 = inlined_call_operand.vmem [shape: f32[4,7,16], index: 0, kind: input, shape index: {}]
  %s1 = inlined_call_operand.vmem [shape: bf16[16,32], index: 1, kind: input, shape index: {}]
  %s2 = inlined_call_operand.vmem [shape: f32[1,32], index: 2, kind: input, shape index: {}]
  %s3 = inlined_call_operand.vmem [shape: f32[7,32], index: 3, kind: input, shape index: {}]
  %s4 = inlined_call_operand.vmem [shape: f32[1,32], index: 4, kind: input, shape index: {}]
  %s5 = inlined_call_operand.vmem [shape: f32[2,1,32], index: 5, kind: input, shape index: {}]
  %s6 = inlined_call_operand.vmem [shape: f32[2,1,32], index: 6, kind: input, shape index: {}]
  %s7 = inlined_call_operand.vmem [shape: bf16[2,32,96], index: 7, kind: input, shape index: {}]
  %s8 = inlined_call_operand.vmem [shape: bf16[2,32,32], index: 8, kind: input, shape index: {}]
  %s9 = inlined_call_operand.vmem [shape: f32[2,1,32], index: 9, kind: input, shape index: {}]
  %s10 = inlined_call_operand.vmem [shape: f32[2,1,32], index: 10, kind: input, shape index: {}]
  %s11 = inlined_call_operand.vmem [shape: bf16[2,32,128], index: 11, kind: input, shape index: {}]
  %s12 = inlined_call_operand.vmem [shape: f32[2,1,128], index: 12, kind: input, shape index: {}]
  %s13 = inlined_call_operand.vmem [shape: bf16[2,128,32], index: 13, kind: input, shape index: {}]
  %s14 = inlined_call_operand.vmem [shape: f32[2,1,32], index: 14, kind: input, shape index: {}]
  %s15 = inlined_call_operand.vmem [shape: f32[1,32], index: 15, kind: input, shape index: {}]
  %s16 = inlined_call_operand.vmem [shape: f32[1,32], index: 16, kind: input, shape index: {}]
  %s17 = inlined_call_operand.vmem [shape: f32[1,32], index: 17, kind: input, shape index: {}]
  %s18 = inlined_call_operand.vmem [shape: f32[1,32], index: 18, kind: input, shape index: {}]
  %s19 = inlined_call_operand.hbm [shape: f32[2,2,32], index: 19, kind: output, shape index: {}]
  %s20 = sld [smem:[#allocation0]]
  $region117: #{forward.1} parent=0
    _
  %s22 = ssub.s32 1, %s20
  %s23 = scalar_select 0, %s22, %s20
  $region1: #{forward.1} parent=0
    #allocation3 [shape = 'u8[2048]{0}', space=vmem, size = 0x800, scoped, tag = 'output window, operand 0']
    #allocation4 [shape = 's32[2]{0}', space=sflag, size = 0x8, scoped, tag = 'scoped memory for forward.1']
    %24 = vsyncpa [#allocation4], 0
    %s25 = scalar_lea.sflag [#allocation4], 1
    %26 = vsyncpa %s25, 0
    loop: start=0, step=1, limit=6
    $region2: #{forward.1} parent=1 // loop_pre_header
      _
    $region3: #{forward.1} parent=1 // loop_header
      %s28 = sphi 0, %s32
      %p29 = scmp.ge.s32.totalorder %s28, 6
      %s35 = sphi 0, %s47
      %s36 = sphi 0, %s43
      %s37 = sphi 0, %s35
      %s38 = sphi 0, %s36
      %s39 = sphi 0, %s37
      %s40 = sphi 0, %s38
      %s50 = sphi 0, %s52
      %s53 = sphi 0, %s50
      %s54 = sphi 0, %s53
      %s70 = sphi 0, %s54
      %s74 = sphi 0, %s74
      %s76 = sphi 0, %s74
      %s77 = sphi 0, %s76
      %s91 = sphi 0, %s77
      %s95 = sphi 0, %s95
      %s97 = sphi 0, %s95
      %s98 = sphi 0, %s97
      %s112 = sphi 0, %s98
      %s116 = sphi 0, %s116
      %s118 = sphi 0, %s116
      %s119 = sphi 0, %s118
      %s133 = sphi 0, %s119
      %s137 = sphi 0, %s137
      %s139 = sphi 0, %s137
      %s140 = sphi 0, %s139
      %s154 = sphi 0, %s140
      %s160 = sphi 0, %s162
      %s163 = sphi 0, %s160
      %s164 = sphi 0, %s163
      %s180 = sphi 0, %s164
      %s186 = sphi 0, %s188
      %s189 = sphi 0, %s186
      %s190 = sphi 0, %s189
      %s206 = sphi 0, %s190
      %s212 = sphi 0, %s214
      %s215 = sphi 0, %s212
      %s216 = sphi 0, %s215
      %s232 = sphi 0, %s216
      %s238 = sphi 0, %s240
      %s241 = sphi 0, %s238
      %s242 = sphi 0, %s241
      %s258 = sphi 0, %s242
      %s264 = sphi 0, %s266
      %s267 = sphi 0, %s264
      %s268 = sphi 0, %s267
      %s284 = sphi 0, %s268
      %s290 = sphi 0, %s292
      %s293 = sphi 0, %s290
      %s294 = sphi 0, %s293
      %s310 = sphi 0, %s294
      %s316 = sphi 0, %s318
      %s319 = sphi 0, %s316
      %s320 = sphi 0, %s319
      %s336 = sphi 0, %s320
      %s342 = sphi 0, %s344
      %s345 = sphi 0, %s342
      %s346 = sphi 0, %s345
      %s362 = sphi 0, %s346
      %s368 = sphi 0, %s370
      %s371 = sphi 0, %s368
      %s372 = sphi 0, %s371
      %s388 = sphi 0, %s372
      %s394 = sphi 0, %s396
      %s397 = sphi 0, %s394
      %s398 = sphi 0, %s397
      %s414 = sphi 0, %s398
      %s418 = sphi 0, %s418
      %s420 = sphi 0, %s418
      %s421 = sphi 0, %s420
      %s435 = sphi 0, %s421
      %s439 = sphi 0, %s439
      %s441 = sphi 0, %s439
      %s442 = sphi 0, %s441
      %s456 = sphi 0, %s442
      %s460 = sphi 0, %s460
      %s462 = sphi 0, %s460
      %s463 = sphi 0, %s462
      %s477 = sphi 0, %s463
      %s481 = sphi 0, %s481
      %s483 = sphi 0, %s481
      %s484 = sphi 0, %s483
      %s498 = sphi 0, %s484
      %s504 = sphi 0, %s506
      %s507 = sphi 0, %s504
      %s508 = sphi 0, %s507
      %s524 = sphi 0, %s508
    $region4: #{forward.1} parent=1 // loop_header_branch
      %31 = sbr.rel (%p29) target = $region8
    $region5: #{forward.1} parent=1 // loop_body
      %s33 = ssub.s32 %s28, 1
      %s34 = ssub.s32 %s28, 2
      %s41 = sadd.s32 1, %s36
      %p42 = scmp.ge.s32.totalorder %s41, 2
      %s43 = scalar_select %p42, 0, %s41
      %s44 = sadd.s32 1, %s35
      %s45 = scalar_select %p42, %s44, %s35
      %p46 = scmp.ge.s32.totalorder %s45, 2
      %s47 = scalar_select %p46, 0, %s45
      %s48 = ssub.s32 %s35, %s47
      %p49 = scmp.eq.s32.totalorder %s48, 0
      %s51 = sadd.s32 %s50, 1
      %s52 = scalar_select %p49, %s50, %s51
      %p55 = pneg %p49
      %p56 = scmp.eq.s32.totalorder %s28, 3
      %p57 = por %p55, %p56
      %p58 = scmp.ne.s32.totalorder %s50, %s53
      %p59 = scmp.eq.s32.totalorder %s28, 0
      %p60 = por %p58, %p59
      %p61 = scmp.ne.s32.totalorder %s50, %s53
      %p62 = scmp.eq.s32.totalorder %s33, 3
      %p63 = por %p61, %p62
      %p64 = scmp.ne.s32.totalorder %s53, %s54
      %p65 = scmp.eq.s32.totalorder %s33, 0
      %p66 = por %p64, %p65
      %p67 = scmp.ne.s32.totalorder %s53, %s54
      %p68 = scmp.eq.s32.totalorder %s34, 3
      %p69 = por %p67, %p68
      %p71 = scmp.ne.s32.totalorder %s54, %s70
      %p72 = scmp.eq.s32.totalorder %s34, 0
      %p73 = por %p71, %p72
      %s75 = sadd.s32 %s74, 1
      %p78 = scmp.eq.s32.totalorder %s28, 3
      %p79 = scmp.ne.s32.totalorder %s74, %s76
      %p80 = scmp.eq.s32.totalorder %s28, 0
      %p81 = por %p79, %p80
      %p82 = scmp.ne.s32.totalorder %s74, %s76
      %p83 = scmp.eq.s32.totalorder %s33, 3
      %p84 = por %p82, %p83
      %p85 = scmp.ne.s32.totalorder %s76, %s77
      %p86 = scmp.eq.s32.totalorder %s33, 0
      %p87 = por %p85, %p86
      %p88 = scmp.ne.s32.totalorder %s76, %s77
      %p89 = scmp.eq.s32.totalorder %s34, 3
      %p90 = por %p88, %p89
      %p92 = scmp.ne.s32.totalorder %s77, %s91
      %p93 = scmp.eq.s32.totalorder %s34, 0
      %p94 = por %p92, %p93
      %s96 = sadd.s32 %s95, 1
      %p99 = scmp.eq.s32.totalorder %s28, 3
      %p100 = scmp.ne.s32.totalorder %s95, %s97
      %p101 = scmp.eq.s32.totalorder %s28, 0
      %p102 = por %p100, %p101
      %p103 = scmp.ne.s32.totalorder %s95, %s97
      %p104 = scmp.eq.s32.totalorder %s33, 3
      %p105 = por %p103, %p104
      %p106 = scmp.ne.s32.totalorder %s97, %s98
      %p107 = scmp.eq.s32.totalorder %s33, 0
      %p108 = por %p106, %p107
      %p109 = scmp.ne.s32.totalorder %s97, %s98
      %p110 = scmp.eq.s32.totalorder %s34, 3
      %p111 = por %p109, %p110
      %p113 = scmp.ne.s32.totalorder %s98, %s112
      %p114 = scmp.eq.s32.totalorder %s34, 0
      %p115 = por %p113, %p114
      %s117 = sadd.s32 %s116, 1
      %p120 = scmp.eq.s32.totalorder %s28, 3
      %p121 = scmp.ne.s32.totalorder %s116, %s118
      %p122 = scmp.eq.s32.totalorder %s28, 0
      %p123 = por %p121, %p122
      %p124 = scmp.ne.s32.totalorder %s116, %s118
      %p125 = scmp.eq.s32.totalorder %s33, 3
      %p126 = por %p124, %p125
      %p127 = scmp.ne.s32.totalorder %s118, %s119
      %p128 = scmp.eq.s32.totalorder %s33, 0
      %p129 = por %p127, %p128
      %p130 = scmp.ne.s32.totalorder %s118, %s119
      %p131 = scmp.eq.s32.totalorder %s34, 3
      %p132 = por %p130, %p131
      %p134 = scmp.ne.s32.totalorder %s119, %s133
      %p135 = scmp.eq.s32.totalorder %s34, 0
      %p136 = por %p134, %p135
      %s138 = sadd.s32 %s137, 1
      %p141 = scmp.eq.s32.totalorder %s28, 3
      %p142 = scmp.ne.s32.totalorder %s137, %s139
      %p143 = scmp.eq.s32.totalorder %s28, 0
      %p144 = por %p142, %p143
      %p145 = scmp.ne.s32.totalorder %s137, %s139
      %p146 = scmp.eq.s32.totalorder %s33, 3
      %p147 = por %p145, %p146
      %p148 = scmp.ne.s32.totalorder %s139, %s140
      %p149 = scmp.eq.s32.totalorder %s33, 0
      %p150 = por %p148, %p149
      %p151 = scmp.ne.s32.totalorder %s139, %s140
      %p152 = scmp.eq.s32.totalorder %s34, 3
      %p153 = por %p151, %p152
      %p155 = scmp.ne.s32.totalorder %s140, %s154
      %p156 = scmp.eq.s32.totalorder %s34, 0
      %p157 = por %p155, %p156
      %s158 = ssub.s32 %s36, %s43
      %p159 = scmp.eq.s32.totalorder %s158, 0
      %s161 = sadd.s32 %s160, 1
      %s162 = scalar_select %p159, %s160, %s161
      %p165 = pneg %p159
      %p166 = scmp.eq.s32.totalorder %s28, 3
      %p167 = por %p165, %p166
      %p168 = scmp.ne.s32.totalorder %s160, %s163
      %p169 = scmp.eq.s32.totalorder %s28, 0
      %p170 = por %p168, %p169
      %p171 = scmp.ne.s32.totalorder %s160, %s163
      %p172 = scmp.eq.s32.totalorder %s33, 3
      %p173 = por %p171, %p172
      %p174 = scmp.ne.s32.totalorder %s163, %s164
      %p175 = scmp.eq.s32.totalorder %s33, 0
      %p176 = por %p174, %p175
      %p177 = scmp.ne.s32.totalorder %s163, %s164
      %p178 = scmp.eq.s32.totalorder %s34, 3
      %p179 = por %p177, %p178
      %p181 = scmp.ne.s32.totalorder %s164, %s180
      %p182 = scmp.eq.s32.totalorder %s34, 0
      %p183 = por %p181, %p182
      %s184 = ssub.s32 %s36, %s43
      %p185 = scmp.eq.s32.totalorder %s184, 0
      %s187 = sadd.s32 %s186, 1
      %s188 = scalar_select %p185, %s186, %s187
      %p191 = pneg %p185
      %p192 = scmp.eq.s32.totalorder %s28, 3
      %p193 = por %p191, %p192
      %p194 = scmp.ne.s32.totalorder %s186, %s189
      %p195 = scmp.eq.s32.totalorder %s28, 0
      %p196 = por %p194, %p195
      %p197 = scmp.ne.s32.totalorder %s186, %s189
      %p198 = scmp.eq.s32.totalorder %s33, 3
      %p199 = por %p197, %p198
      %p200 = scmp.ne.s32.totalorder %s189, %s190
      %p201 = scmp.eq.s32.totalorder %s33, 0
      %p202 = por %p200, %p201
      %p203 = scmp.ne.s32.totalorder %s189, %s190
      %p204 = scmp.eq.s32.totalorder %s34, 3
      %p205 = por %p203, %p204
      %p207 = scmp.ne.s32.totalorder %s190, %s206
      %p208 = scmp.eq.s32.totalorder %s34, 0
      %p209 = por %p207, %p208
      %s210 = ssub.s32 %s36, %s43
      %p211 = scmp.eq.s32.totalorder %s210, 0
      %s213 = sadd.s32 %s212, 1
      %s214 = scalar_select %p211, %s212, %s213
      %p217 = pneg %p211
      %p218 = scmp.eq.s32.totalorder %s28, 3
      %p219 = por %p217, %p218
      %p220 = scmp.ne.s32.totalorder %s212, %s215
      %p221 = scmp.eq.s32.totalorder %s28, 0
      %p222 = por %p220, %p221
      %p223 = scmp.ne.s32.totalorder %s212, %s215
      %p224 = scmp.eq.s32.totalorder %s33, 3
      %p225 = por %p223, %p224
      %p226 = scmp.ne.s32.totalorder %s215, %s216
      %p227 = scmp.eq.s32.totalorder %s33, 0
      %p228 = por %p226, %p227
      %p229 = scmp.ne.s32.totalorder %s215, %s216
      %p230 = scmp.eq.s32.totalorder %s34, 3
      %p231 = por %p229, %p230
      %p233 = scmp.ne.s32.totalorder %s216, %s232
      %p234 = scmp.eq.s32.totalorder %s34, 0
      %p235 = por %p233, %p234
      %s236 = ssub.s32 %s36, %s43
      %p237 = scmp.eq.s32.totalorder %s236, 0
      %s239 = sadd.s32 %s238, 1
      %s240 = scalar_select %p237, %s238, %s239
      %p243 = pneg %p237
      %p244 = scmp.eq.s32.totalorder %s28, 3
      %p245 = por %p243, %p244
      %p246 = scmp.ne.s32.totalorder %s238, %s241
      %p247 = scmp.eq.s32.totalorder %s28, 0
      %p248 = por %p246, %p247
      %p249 = scmp.ne.s32.totalorder %s238, %s241
      %p250 = scmp.eq.s32.totalorder %s33, 3
      %p251 = por %p249, %p250
      %p252 = scmp.ne.s32.totalorder %s241, %s242
      %p253 = scmp.eq.s32.totalorder %s33, 0
      %p254 = por %p252, %p253
      %p255 = scmp.ne.s32.totalorder %s241, %s242
      %p256 = scmp.eq.s32.totalorder %s34, 3
      %p257 = por %p255, %p256
      %p259 = scmp.ne.s32.totalorder %s242, %s258
      %p260 = scmp.eq.s32.totalorder %s34, 0
      %p261 = por %p259, %p260
      %s262 = ssub.s32 %s36, %s43
      %p263 = scmp.eq.s32.totalorder %s262, 0
      %s265 = sadd.s32 %s264, 1
      %s266 = scalar_select %p263, %s264, %s265
      %p269 = pneg %p263
      %p270 = scmp.eq.s32.totalorder %s28, 3
      %p271 = por %p269, %p270
      %p272 = scmp.ne.s32.totalorder %s264, %s267
      %p273 = scmp.eq.s32.totalorder %s28, 0
      %p274 = por %p272, %p273
      %p275 = scmp.ne.s32.totalorder %s264, %s267
      %p276 = scmp.eq.s32.totalorder %s33, 3
      %p277 = por %p275, %p276
      %p278 = scmp.ne.s32.totalorder %s267, %s268
      %p279 = scmp.eq.s32.totalorder %s33, 0
      %p280 = por %p278, %p279
      %p281 = scmp.ne.s32.totalorder %s267, %s268
      %p282 = scmp.eq.s32.totalorder %s34, 3
      %p283 = por %p281, %p282
      %p285 = scmp.ne.s32.totalorder %s268, %s284
      %p286 = scmp.eq.s32.totalorder %s34, 0
      %p287 = por %p285, %p286
      %s288 = ssub.s32 %s36, %s43
      %p289 = scmp.eq.s32.totalorder %s288, 0
      %s291 = sadd.s32 %s290, 1
      %s292 = scalar_select %p289, %s290, %s291
      %p295 = pneg %p289
      %p296 = scmp.eq.s32.totalorder %s28, 3
      %p297 = por %p295, %p296
      %p298 = scmp.ne.s32.totalorder %s290, %s293
      %p299 = scmp.eq.s32.totalorder %s28, 0
      %p300 = por %p298, %p299
      %p301 = scmp.ne.s32.totalorder %s290, %s293
      %p302 = scmp.eq.s32.totalorder %s33, 3
      %p303 = por %p301, %p302
      %p304 = scmp.ne.s32.totalorder %s293, %s294
      %p305 = scmp.eq.s32.totalorder %s33, 0
      %p306 = por %p304, %p305
      %p307 = scmp.ne.s32.totalorder %s293, %s294
      %p308 = scmp.eq.s32.totalorder %s34, 3
      %p309 = por %p307, %p308
      %p311 = scmp.ne.s32.totalorder %s294, %s310
      %p312 = scmp.eq.s32.totalorder %s34, 0
      %p313 = por %p311, %p312
      %s314 = ssub.s32 %s36, %s43
      %p315 = scmp.eq.s32.totalorder %s314, 0
      %s317 = sadd.s32 %s316, 1
      %s318 = scalar_select %p315, %s316, %s317
      %p321 = pneg %p315
      %p322 = scmp.eq.s32.totalorder %s28, 3
      %p323 = por %p321, %p322
      %p324 = scmp.ne.s32.totalorder %s316, %s319
      %p325 = scmp.eq.s32.totalorder %s28, 0
      %p326 = por %p324, %p325
      %p327 = scmp.ne.s32.totalorder %s316, %s319
      %p328 = scmp.eq.s32.totalorder %s33, 3
      %p329 = por %p327, %p328
      %p330 = scmp.ne.s32.totalorder %s319, %s320
      %p331 = scmp.eq.s32.totalorder %s33, 0
      %p332 = por %p330, %p331
      %p333 = scmp.ne.s32.totalorder %s319, %s320
      %p334 = scmp.eq.s32.totalorder %s34, 3
      %p335 = por %p333, %p334
      %p337 = scmp.ne.s32.totalorder %s320, %s336
      %p338 = scmp.eq.s32.totalorder %s34, 0
      %p339 = por %p337, %p338
      %s340 = ssub.s32 %s36, %s43
      %p341 = scmp.eq.s32.totalorder %s340, 0
      %s343 = sadd.s32 %s342, 1
      %s344 = scalar_select %p341, %s342, %s343
      %p347 = pneg %p341
      %p348 = scmp.eq.s32.totalorder %s28, 3
      %p349 = por %p347, %p348
      %p350 = scmp.ne.s32.totalorder %s342, %s345
      %p351 = scmp.eq.s32.totalorder %s28, 0
      %p352 = por %p350, %p351
      %p353 = scmp.ne.s32.totalorder %s342, %s345
      %p354 = scmp.eq.s32.totalorder %s33, 3
      %p355 = por %p353, %p354
      %p356 = scmp.ne.s32.totalorder %s345, %s346
      %p357 = scmp.eq.s32.totalorder %s33, 0
      %p358 = por %p356, %p357
      %p359 = scmp.ne.s32.totalorder %s345, %s346
      %p360 = scmp.eq.s32.totalorder %s34, 3
      %p361 = por %p359, %p360
      %p363 = scmp.ne.s32.totalorder %s346, %s362
      %p364 = scmp.eq.s32.totalorder %s34, 0
      %p365 = por %p363, %p364
      %s366 = ssub.s32 %s36, %s43
      %p367 = scmp.eq.s32.totalorder %s366, 0
      %s369 = sadd.s32 %s368, 1
      %s370 = scalar_select %p367, %s368, %s369
      %p373 = pneg %p367
      %p374 = scmp.eq.s32.totalorder %s28, 3
      %p375 = por %p373, %p374
      %p376 = scmp.ne.s32.totalorder %s368, %s371
      %p377 = scmp.eq.s32.totalorder %s28, 0
      %p378 = por %p376, %p377
      %p379 = scmp.ne.s32.totalorder %s368, %s371
      %p380 = scmp.eq.s32.totalorder %s33, 3
      %p381 = por %p379, %p380
      %p382 = scmp.ne.s32.totalorder %s371, %s372
      %p383 = scmp.eq.s32.totalorder %s33, 0
      %p384 = por %p382, %p383
      %p385 = scmp.ne.s32.totalorder %s371, %s372
      %p386 = scmp.eq.s32.totalorder %s34, 3
      %p387 = por %p385, %p386
      %p389 = scmp.ne.s32.totalorder %s372, %s388
      %p390 = scmp.eq.s32.totalorder %s34, 0
      %p391 = por %p389, %p390
      %s392 = ssub.s32 %s36, %s43
      %p393 = scmp.eq.s32.totalorder %s392, 0
      %s395 = sadd.s32 %s394, 1
      %s396 = scalar_select %p393, %s394, %s395
      %p399 = pneg %p393
      %p400 = scmp.eq.s32.totalorder %s28, 3
      %p401 = por %p399, %p400
      %p402 = scmp.ne.s32.totalorder %s394, %s397
      %p403 = scmp.eq.s32.totalorder %s28, 0
      %p404 = por %p402, %p403
      %p405 = scmp.ne.s32.totalorder %s394, %s397
      %p406 = scmp.eq.s32.totalorder %s33, 3
      %p407 = por %p405, %p406
      %p408 = scmp.ne.s32.totalorder %s397, %s398
      %p409 = scmp.eq.s32.totalorder %s33, 0
      %p410 = por %p408, %p409
      %p411 = scmp.ne.s32.totalorder %s397, %s398
      %p412 = scmp.eq.s32.totalorder %s34, 3
      %p413 = por %p411, %p412
      %p415 = scmp.ne.s32.totalorder %s398, %s414
      %p416 = scmp.eq.s32.totalorder %s34, 0
      %p417 = por %p415, %p416
      %s419 = sadd.s32 %s418, 1
      %p422 = scmp.eq.s32.totalorder %s28, 3
      %p423 = scmp.ne.s32.totalorder %s418, %s420
      %p424 = scmp.eq.s32.totalorder %s28, 0
      %p425 = por %p423, %p424
      %p426 = scmp.ne.s32.totalorder %s418, %s420
      %p427 = scmp.eq.s32.totalorder %s33, 3
      %p428 = por %p426, %p427
      %p429 = scmp.ne.s32.totalorder %s420, %s421
      %p430 = scmp.eq.s32.totalorder %s33, 0
      %p431 = por %p429, %p430
      %p432 = scmp.ne.s32.totalorder %s420, %s421
      %p433 = scmp.eq.s32.totalorder %s34, 3
      %p434 = por %p432, %p433
      %p436 = scmp.ne.s32.totalorder %s421, %s435
      %p437 = scmp.eq.s32.totalorder %s34, 0
      %p438 = por %p436, %p437
      %s440 = sadd.s32 %s439, 1
      %p443 = scmp.eq.s32.totalorder %s28, 3
      %p444 = scmp.ne.s32.totalorder %s439, %s441
      %p445 = scmp.eq.s32.totalorder %s28, 0
      %p446 = por %p444, %p445
      %p447 = scmp.ne.s32.totalorder %s439, %s441
      %p448 = scmp.eq.s32.totalorder %s33, 3
      %p449 = por %p447, %p448
      %p450 = scmp.ne.s32.totalorder %s441, %s442
      %p451 = scmp.eq.s32.totalorder %s33, 0
      %p452 = por %p450, %p451
      %p453 = scmp.ne.s32.totalorder %s441, %s442
      %p454 = scmp.eq.s32.totalorder %s34, 3
      %p455 = por %p453, %p454
      %p457 = scmp.ne.s32.totalorder %s442, %s456
      %p458 = scmp.eq.s32.totalorder %s34, 0
      %p459 = por %p457, %p458
      %s461 = sadd.s32 %s460, 1
      %p464 = scmp.eq.s32.totalorder %s28, 3
      %p465 = scmp.ne.s32.totalorder %s460, %s462
      %p466 = scmp.eq.s32.totalorder %s28, 0
      %p467 = por %p465, %p466
      %p468 = scmp.ne.s32.totalorder %s460, %s462
      %p469 = scmp.eq.s32.totalorder %s33, 3
      %p470 = por %p468, %p469
      %p471 = scmp.ne.s32.totalorder %s462, %s463
      %p472 = scmp.eq.s32.totalorder %s33, 0
      %p473 = por %p471, %p472
      %p474 = scmp.ne.s32.totalorder %s462, %s463
      %p475 = scmp.eq.s32.totalorder %s34, 3
      %p476 = por %p474, %p475
      %p478 = scmp.ne.s32.totalorder %s463, %s477
      %p479 = scmp.eq.s32.totalorder %s34, 0
      %p480 = por %p478, %p479
      %s482 = sadd.s32 %s481, 1
      %p485 = scmp.eq.s32.totalorder %s28, 3
      %p486 = scmp.ne.s32.totalorder %s481, %s483
      %p487 = scmp.eq.s32.totalorder %s28, 0
      %p488 = por %p486, %p487
      %p489 = scmp.ne.s32.totalorder %s481, %s483
      %p490 = scmp.eq.s32.totalorder %s33, 3
      %p491 = por %p489, %p490
      %p492 = scmp.ne.s32.totalorder %s483, %s484
      %p493 = scmp.eq.s32.totalorder %s33, 0
      %p494 = por %p492, %p493
      %p495 = scmp.ne.s32.totalorder %s483, %s484
      %p496 = scmp.eq.s32.totalorder %s34, 3
      %p497 = por %p495, %p496
      %p499 = scmp.ne.s32.totalorder %s484, %s498
      %p500 = scmp.eq.s32.totalorder %s34, 0
      %p501 = por %p499, %p500
      %s502 = ssub.s32 %s35, %s47
      %p503 = scmp.eq.s32.totalorder %s502, 0
      %s505 = sadd.s32 %s504, 1
      %s506 = scalar_select %p503, %s504, %s505
      %p509 = pneg %p503
      %p510 = scmp.eq.s32.totalorder %s28, 3
      %p511 = por %p509, %p510
      %p512 = scmp.ne.s32.totalorder %s504, %s507
      %p513 = scmp.eq.s32.totalorder %s28, 0
      %p514 = por %p512, %p513
      %p515 = scmp.ne.s32.totalorder %s504, %s507
      %p516 = scmp.eq.s32.totalorder %s33, 3
      %p517 = por %p515, %p516
      %p518 = scmp.ne.s32.totalorder %s507, %s508
      %p519 = scmp.eq.s32.totalorder %s33, 0
      %p520 = por %p518, %p519
      %p521 = scmp.ne.s32.totalorder %s507, %s508
      %p522 = scmp.eq.s32.totalorder %s34, 3
      %p523 = por %p521, %p522
      %p525 = scmp.ne.s32.totalorder %s508, %s524
      %p526 = scmp.eq.s32.totalorder %s34, 0
      %p527 = por %p525, %p526
      %p528 = scmp.le.s32.totalorder 1, %s28
      %p529 = scmp.lt.s32.totalorder %s28, 5
      %p530 = pnand %p528, %p529
      %p531 = pneg %p530
      // Predicated region
      $region9: #{forward.1} parent=5 // pred_check
        _
      $region10: #{forward.1} parent=5 // pred_check_branch
        %533 = sbr.rel (%p530) target = $region12
      $region11: #{forward.1} parent=5 // pred_region
        %s534 = ssub.s32 %s28, 1
        // Predicated region
        $region13: #{forward.1} parent=11 // pred_check
          %p535 = pneg %p87
        $region14: #{forward.1} parent=11 // pred_check_branch
          %537 = sbr.rel (%p535) target = $region16
        $region15: #{forward.1} parent=11 // pred_region
          _
        $region16: #{forward.1} parent=11 // pred_fallthru
          _
        // Predicated region
        $region17: #{forward.1} parent=11 // pred_check
          %p538 = pneg %p108
        $region18: #{forward.1} parent=11 // pred_check_branch
          %540 = sbr.rel (%p538) target = $region20
        $region19: #{forward.1} parent=11 // pred_region
          _
        $region20: #{forward.1} parent=11 // pred_fallthru
          _
        // Predicated region
        $region21: #{forward.1} parent=11 // pred_check
          %p541 = pneg %p129
        $region22: #{forward.1} parent=11 // pred_check_branch
          %543 = sbr.rel (%p541) target = $region24
        $region23: #{forward.1} parent=11 // pred_region
          _
        $region24: #{forward.1} parent=11 // pred_fallthru
          _
        // Predicated region
        $region25: #{forward.1} parent=11 // pred_check
          %p544 = pneg %p150
        $region26: #{forward.1} parent=11 // pred_check_branch
          %546 = sbr.rel (%p544) target = $region28
        $region27: #{forward.1} parent=11 // pred_region
          _
        $region28: #{forward.1} parent=11 // pred_fallthru
          _
        // Predicated region
        $region29: #{forward.1} parent=11 // pred_check
          %p547 = pneg %p431
        $region30: #{forward.1} parent=11 // pred_check_branch
          %549 = sbr.rel (%p547) target = $region32
        $region31: #{forward.1} parent=11 // pred_region
          _
        $region32: #{forward.1} parent=11 // pred_fallthru
          _
        // Predicated region
        $region33: #{forward.1} parent=11 // pred_check
          %p550 = pneg %p452
        $region34: #{forward.1} parent=11 // pred_check_branch
          %552 = sbr.rel (%p550) target = $region36
        $region35: #{forward.1} parent=11 // pred_region
          _
        $region36: #{forward.1} parent=11 // pred_fallthru
          _
        // Predicated region
        $region37: #{forward.1} parent=11 // pred_check
          %p553 = pneg %p473
        $region38: #{forward.1} parent=11 // pred_check_branch
          %555 = sbr.rel (%p553) target = $region40
        $region39: #{forward.1} parent=11 // pred_region
          _
        $region40: #{forward.1} parent=11 // pred_fallthru
          _
        // Predicated region
        $region41: #{forward.1} parent=11 // pred_check
          %p556 = pneg %p494
        $region42: #{forward.1} parent=11 // pred_check_branch
          %558 = sbr.rel (%p556) target = $region44
        $region43: #{forward.1} parent=11 // pred_region
          _
        $region44: #{forward.1} parent=11 // pred_fallthru
          _
      $region12: #{forward.1} parent=5 // pred_fallthru
        _
      %p559 = scmp.lt.s32.totalorder %s28, 4
      // Predicated region
      $region45: #{forward.1} parent=5 // pred_check
        %p560 = pneg %p559
      $region46: #{forward.1} parent=5 // pred_check_branch
        %562 = sbr.rel (%p560) target = $region48
      $region47: #{forward.1} parent=5 // pred_region
        // Predicated region
        $region49: #{forward.1} parent=47 // pred_check
          %p563 = pneg %p60
        $region50: #{forward.1} parent=47 // pred_check_branch
          %565 = sbr.rel (%p563) target = $region52
        $region51: #{forward.1} parent=47 // pred_region
          %s566 = smul.u32 2, %s35
          %p567 = scmp.lt.s32.totalorder %s566, 3
          %s568 = scalar_select %p567, %s566, 3
          %s569 = smul.addr %s568, 8
          %s570 = scalar_lea.vmem %s0, %s569
          %s571 = smul.u32 2, %s35
        $region52: #{forward.1} parent=47 // pred_fallthru
          _
        // Predicated region
        $region53: #{forward.1} parent=47 // pred_check
          %p572 = pneg %p170
        $region54: #{forward.1} parent=47 // pred_check_branch
          %574 = sbr.rel (%p572) target = $region56
        $region55: #{forward.1} parent=47 // pred_region
          %p575 = scmp.lt.s32.totalorder %s36, 1
          %s576 = scalar_select %p575, %s36, 1
          %s577 = scalar_lea.vmem %s5, %s576
        $region56: #{forward.1} parent=47 // pred_fallthru
          _
        // Predicated region
        $region57: #{forward.1} parent=47 // pred_check
          %p578 = pneg %p196
        $region58: #{forward.1} parent=47 // pred_check_branch
          %580 = sbr.rel (%p578) target = $region60
        $region59: #{forward.1} parent=47 // pred_region
          %p581 = scmp.lt.s32.totalorder %s36, 1
          %s582 = scalar_select %p581, %s36, 1
          %s583 = scalar_lea.vmem %s6, %s582
        $region60: #{forward.1} parent=47 // pred_fallthru
          _
        // Predicated region
        $region61: #{forward.1} parent=47 // pred_check
          %p584 = pneg %p222
        $region62: #{forward.1} parent=47 // pred_check_branch
          %586 = sbr.rel (%p584) target = $region64
        $region63: #{forward.1} parent=47 // pred_region
          %p587 = scmp.lt.s32.totalorder %s36, 1
          %s588 = scalar_select %p587, %s36, 1
          %s589 = smul.addr %s588, 4
          %s590 = smul.addr %s589, 4
          %s591 = scalar_lea.vmem %s7, %s590
        $region64: #{forward.1} parent=47 // pred_fallthru
          _
        // Predicated region
        $region65: #{forward.1} parent=47 // pred_check
          %p592 = pneg %p248
        $region66: #{forward.1} parent=47 // pred_check_branch
          %594 = sbr.rel (%p592) target = $region68
        $region67: #{forward.1} parent=47 // pred_region
          %p595 = scmp.lt.s32.totalorder %s36, 1
          %s596 = scalar_select %p595, %s36, 1
          %s597 = smul.addr %s596, 4
          %s598 = smul.addr %s597, 4
          %s599 = scalar_lea.vmem %s8, %s598
        $region68: #{forward.1} parent=47 // pred_fallthru
          _
        // Predicated region
        $region69: #{forward.1} parent=47 // pred_check
          %p600 = pneg %p274
        $region70: #{forward.1} parent=47 // pred_check_branch
          %602 = sbr.rel (%p600) target = $region72
        $region71: #{forward.1} parent=47 // pred_region
          %p603 = scmp.lt.s32.totalorder %s36, 1
          %s604 = scalar_select %p603, %s36, 1
          %s605 = scalar_lea.vmem %s9, %s604
        $region72: #{forward.1} parent=47 // pred_fallthru
          _
        // Predicated region
        $region73: #{forward.1} parent=47 // pred_check
          %p606 = pneg %p300
        $region74: #{forward.1} parent=47 // pred_check_branch
          %608 = sbr.rel (%p606) target = $region76
        $region75: #{forward.1} parent=47 // pred_region
          %p609 = scmp.lt.s32.totalorder %s36, 1
          %s610 = scalar_select %p609, %s36, 1
          %s611 = scalar_lea.vmem %s10, %s610
        $region76: #{forward.1} parent=47 // pred_fallthru
          _
        // Predicated region
        $region77: #{forward.1} parent=47 // pred_check
          %p612 = pneg %p326
        $region78: #{forward.1} parent=47 // pred_check_branch
          %614 = sbr.rel (%p612) target = $region80
        $region79: #{forward.1} parent=47 // pred_region
          %p615 = scmp.lt.s32.totalorder %s36, 1
          %s616 = scalar_select %p615, %s36, 1
          %s617 = smul.addr %s616, 4
          %s618 = smul.addr %s617, 4
          %s619 = scalar_lea.vmem %s11, %s618
        $region80: #{forward.1} parent=47 // pred_fallthru
          _
        // Predicated region
        $region81: #{forward.1} parent=47 // pred_check
          %p620 = pneg %p352
        $region82: #{forward.1} parent=47 // pred_check_branch
          %622 = sbr.rel (%p620) target = $region84
        $region83: #{forward.1} parent=47 // pred_region
          %p623 = scmp.lt.s32.totalorder %s36, 1
          %s624 = scalar_select %p623, %s36, 1
          %s625 = scalar_lea.vmem %s12, %s624
        $region84: #{forward.1} parent=47 // pred_fallthru
          _
        // Predicated region
        $region85: #{forward.1} parent=47 // pred_check
          %p626 = pneg %p378
        $region86: #{forward.1} parent=47 // pred_check_branch
          %628 = sbr.rel (%p626) target = $region88
        $region87: #{forward.1} parent=47 // pred_region
          %p629 = scmp.lt.s32.totalorder %s36, 1
          %s630 = scalar_select %p629, %s36, 1
          %s631 = smul.addr %s630, 16
          %s632 = smul.addr %s631, 4
          %s633 = scalar_lea.vmem %s13, %s632
        $region88: #{forward.1} parent=47 // pred_fallthru
          _
        // Predicated region
        $region89: #{forward.1} parent=47 // pred_check
          %p634 = pneg %p404
        $region90: #{forward.1} parent=47 // pred_check_branch
          %636 = sbr.rel (%p634) target = $region92
        $region91: #{forward.1} parent=47 // pred_region
          %p637 = scmp.lt.s32.totalorder %s36, 1
          %s638 = scalar_select %p637, %s36, 1
          %s639 = scalar_lea.vmem %s14, %s638
        $region92: #{forward.1} parent=47 // pred_fallthru
          _
      $region48: #{forward.1} parent=5 // pred_fallthru
        _
      %p640 = scmp.le.s32.totalorder 1, %s28
      %p641 = scmp.lt.s32.totalorder %s28, 5
      %p642 = pnand %p640, %p641
      %p643 = pneg %p642
      // Predicated region
      $region93: #{forward.1} parent=5 // pred_check
        _
      $region94: #{forward.1} parent=5 // pred_check_branch
        %645 = sbr.rel (%p642) target = $region96
      $region95: #{forward.1} parent=5 // pred_region
        %s646 = ssub.s32 %s28, 1
        %s647 = smul.u32 2, %s37
        %p648 = scmp.lt.s32.totalorder %s647, 3
        %s649 = scalar_select %p648, %s647, 3
        %s650 = smul.addr %s649, 8
        %s651 = scalar_lea.vmem %s0, %s650
        %p652 = pneg %p66
        %p653 = pneg %p63
        %p654 = pneg %p87
        %p655 = pneg %p84
        %p656 = pneg %p108
        %p657 = pneg %p105
        %p658 = pneg %p129
        %p659 = pneg %p126
        %p660 = pneg %p150
        %p661 = pneg %p147
        %p662 = scmp.lt.s32.totalorder %s38, 1
        %s663 = scalar_select %p662, %s38, 1
        %s664 = scalar_lea.vmem %s5, %s663
        %p665 = pneg %p176
        %p666 = pneg %p173
        %p667 = scmp.lt.s32.totalorder %s38, 1
        %s668 = scalar_select %p667, %s38, 1
        %s669 = scalar_lea.vmem %s6, %s668
        %p670 = pneg %p202
        %p671 = pneg %p199
        %p672 = scmp.lt.s32.totalorder %s38, 1
        %s673 = scalar_select %p672, %s38, 1
        %s674 = smul.addr %s673, 4
        %s675 = smul.addr %s674, 4
        %s676 = scalar_lea.vmem %s7, %s675
        %p677 = pneg %p228
        %p678 = pneg %p225
        %p679 = scmp.lt.s32.totalorder %s38, 1
        %s680 = scalar_select %p679, %s38, 1
        %s681 = smul.addr %s680, 4
        %s682 = smul.addr %s681, 4
        %s683 = scalar_lea.vmem %s8, %s682
        %p684 = pneg %p254
        %p685 = pneg %p251
        %p686 = scmp.lt.s32.totalorder %s38, 1
        %s687 = scalar_select %p686, %s38, 1
        %s688 = scalar_lea.vmem %s9, %s687
        %p689 = pneg %p280
        %p690 = pneg %p277
        %p691 = scmp.lt.s32.totalorder %s38, 1
        %s692 = scalar_select %p691, %s38, 1
        %s693 = scalar_lea.vmem %s10, %s692
        %p694 = pneg %p306
        %p695 = pneg %p303
        %p696 = scmp.lt.s32.totalorder %s38, 1
        %s697 = scalar_select %p696, %s38, 1
        %s698 = smul.addr %s697, 4
        %s699 = smul.addr %s698, 4
        %s700 = scalar_lea.vmem %s11, %s699
        %p701 = pneg %p332
        %p702 = pneg %p329
        %p703 = scmp.lt.s32.totalorder %s38, 1
        %s704 = scalar_select %p703, %s38, 1
        %s705 = scalar_lea.vmem %s12, %s704
        %p706 = pneg %p358
        %p707 = pneg %p355
        %p708 = scmp.lt.s32.totalorder %s38, 1
        %s709 = scalar_select %p708, %s38, 1
        %s710 = smul.addr %s709, 16
        %s711 = smul.addr %s710, 4
        %s712 = scalar_lea.vmem %s13, %s711
        %p713 = pneg %p384
        %p714 = pneg %p381
        %p715 = scmp.lt.s32.totalorder %s38, 1
        %s716 = scalar_select %p715, %s38, 1
        %s717 = scalar_lea.vmem %s14, %s716
        %p718 = pneg %p410
        %p719 = pneg %p407
        %p720 = pneg %p431
        %p721 = pneg %p428
        %p722 = pneg %p452
        %p723 = pneg %p449
        %p724 = pneg %p473
        %p725 = pneg %p470
        %p726 = pneg %p494
        %p727 = pneg %p491
        %p728 = pneg %p520
        %p729 = pneg %p517
        %s730 = sand.u32 %s507, 1
        %s731 = scalar_lea.sflag [#allocation4], %s730
        %s732 = sand.u32 %s507, 1
        %s733 = smul.addr %s732, 2
        %s734 = scalar_lea.vmem [#allocation3], %s733
        %s735 = smul.u32 2, %s37
        %p736 = scmp.lt.s32.totalorder %s735, 3
        %s737 = scalar_select %p736, %s735, 3
        %s738 = smul.addr %s737, 8
        %s739 = scalar_lea.vmem %s0, %s738
        %s740 = smul.u32 2, %s37
        %p741 = scmp.lt.s32.totalorder %s38, 1
        %s742 = scalar_select %p741, %s38, 1
        %s743 = scalar_lea.vmem %s5, %s742
        %p744 = scmp.lt.s32.totalorder %s38, 1
        %s745 = scalar_select %p744, %s38, 1
        %s746 = scalar_lea.vmem %s6, %s745
        %p747 = scmp.lt.s32.totalorder %s38, 1
        %s748 = scalar_select %p747, %s38, 1
        %s749 = smul.addr %s748, 4
        %s750 = smul.addr %s749, 4
        %s751 = scalar_lea.vmem %s7, %s750
        %p752 = scmp.lt.s32.totalorder %s38, 1
        %s753 = scalar_select %p752, %s38, 1
        %s754 = smul.addr %s753, 4
        %s755 = smul.addr %s754, 4
        %s756 = scalar_lea.vmem %s8, %s755
        %p757 = scmp.lt.s32.totalorder %s38, 1
        %s758 = scalar_select %p757, %s38, 1
        %s759 = scalar_lea.vmem %s9, %s758
        %p760 = scmp.lt.s32.totalorder %s38, 1
        %s761 = scalar_select %p760, %s38, 1
        %s762 = scalar_lea.vmem %s10, %s761
        %p763 = scmp.lt.s32.totalorder %s38, 1
        %s764 = scalar_select %p763, %s38, 1
        %s765 = smul.addr %s764, 4
        %s766 = smul.addr %s765, 4
        %s767 = scalar_lea.vmem %s11, %s766
        %p768 = scmp.lt.s32.totalorder %s38, 1
        %s769 = scalar_select %p768, %s38, 1
        %s770 = scalar_lea.vmem %s12, %s769
        %p771 = scmp.lt.s32.totalorder %s38, 1
        %s772 = scalar_select %p771, %s38, 1
        %s773 = smul.addr %s772, 16
        %s774 = smul.addr %s773, 4
        %s775 = scalar_lea.vmem %s13, %s774
        %p776 = scmp.lt.s32.totalorder %s38, 1
        %s777 = scalar_select %p776, %s38, 1
        %s778 = scalar_lea.vmem %s14, %s777
        %p780 = scmp.eq.s32.totalorder %s38, 0
        // Predicated region
        $region97: #{forward.1} parent=95 // pred_check
          %p781 = pneg %p780
        $region98: #{forward.1} parent=95 // pred_check_branch
          %783 = sbr.rel (%p781) target = $region100
        $region99: #{forward.1} parent=95 // pred_region
          %v784 = vld [vmem:[%s739] sm:$0x7f]
          %v785 = vpack.c.bf16 %v784, %v784
          %v786 = vld [vmem:[%s1] sm:$0xf]
          %v787 = vld [vmem:[%s1 + $0x4] sm:$0xf]
          %v788 = vld [vmem:[%s2] sm:$0x1]
          %v790 = vlaneseq
          %v791 = vshrl.u32 %v790, 7
          %v792 = vsub.s32 0, %v791
          %v793 = vrot.slane %v788, %v792
          %v797 = vunpack.c.l.b16 %v786
          %v798 = vunpack.c.l.b16 %v787
          %v799 = vpack.c.b16 %v798, %v797
          %vm801 = vcmask 130048
          %v803 = vsel %vm801, %v785, 0
          %805 = vmatprep.subr.bf16.mxu0 0
          %806 = vmatpush1.bf16.msra.mxu0 %v799
          %807 = vmatprep.subr.bf16.mxu0 0
          %808 = vmatpush1.bf16.msra.mxu0 0
          %809 = vmatprep.subr.bf16.mxu0 0
          %810 = vmatpush1.bf16.msra.mxu0 0
          %811 = vmatprep.subr.bf16.mxu0 0
          %812 = vmatpush1.bf16.msra.mxu0 0
          %813 = vmatprep.subr.bf16.mxu0 0
          %814 = vmatpush1.bf16.msra.mxu0 0
          %815 = vmatprep.subr.bf16.mxu0 0
          %816 = vmatpush1.bf16.msra.mxu0 0
          %817 = vmatprep.subr.bf16.mxu0 0
          %818 = vmatpush1.bf16.msra.mxu0 0
          %819 = vmatprep.subr.bf16.mxu0 0
          %820 = vmatpush1.bf16.msra.mxu0 0
          %821 = vmatprep.subr.bf16.mxu0 0
          %822 = vmatpush1.bf16.msra.mxu0 0
          %823 = vmatprep.subr.bf16.mxu0 0
          %824 = vmatpush1.bf16.msra.mxu0 0
          %825 = vmatprep.subr.bf16.mxu0 0
          %826 = vmatpush1.bf16.msra.mxu0 0
          %827 = vmatprep.subr.bf16.mxu0 0
          %828 = vmatpush1.bf16.msra.mxu0 0
          %829 = vmatprep.subr.bf16.mxu0 0
          %830 = vmatpush1.bf16.msra.mxu0 0
          %831 = vmatprep.subr.bf16.mxu0 0
          %832 = vmatpush1.bf16.msra.mxu0 0
          %833 = vmatprep.subr.bf16.mxu0 0
          %834 = vmatpush1.bf16.msra.mxu0 0
          %835 = vmatprep.subr.bf16.mxu0 0
          %836 = vmatpush1.bf16.msra.mxu0 0
          %837 = vmatprep.mubr.bf16.mxu0 0
          %838 = vmatmul.mubr.bf16.gmra.mrb[0].mxu0 %v803
          %v839 = vpop.f32.mrb[0].mxu0
          %v840 = vadd.f32 %v793, %v839
          %v841 = vpop.f32.mrb[0].mxu0
          %v842 = vpop.f32.mrb[0].mxu0
          %v843 = vpop.f32.mrb[0].mxu0
          %844 = vdwg.mxu0
          %v845 = vld [vmem:[%s3] sm:$0x7f]
          %v846 = vadd.f32 %v840, %v845
          %v847 = vld [vmem:[%s4] sm:$0x1]
          %vm848 = vcmask 253952
          %849 = vst.msk [vmem:[#allocation2] sm:$0x1] %vm848, %v847
          %vm850 = vcmask 260096
          %851 = vst.msk [vmem:[#allocation2 + $0x1] sm:$0x7f] %vm850, %v846
          %s852 = scalar_lea.vmem %s739, 8
          %v853 = vld [vmem:[%s852] sm:$0x7f]
          %v854 = vpack.c.bf16 %v853, %v853
          %v855 = vld [vmem:[%s1] sm:$0xf]
          %v856 = vld [vmem:[%s1 + $0x4] sm:$0xf]
          %v857 = vld [vmem:[%s2] sm:$0x1]
          %v859 = vlaneseq
          %v860 = vshrl.u32 %v859, 7
          %v861 = vsub.s32 0, %v860
          %v862 = vrot.slane %v857, %v861
          %v866 = vunpack.c.l.b16 %v855
          %v867 = vunpack.c.l.b16 %v856
          %v868 = vpack.c.b16 %v867, %v866
          %v871 = vsel %vm801, %v854, 0
          %873 = vmatprep.subr.bf16.mxu0 0
          %874 = vmatpush1.bf16.msra.mxu0 %v868
          %875 = vmatprep.subr.bf16.mxu0 0
          %876 = vmatpush1.bf16.msra.mxu0 0
          %877 = vmatprep.subr.bf16.mxu0 0
          %878 = vmatpush1.bf16.msra.mxu0 0
          %879 = vmatprep.subr.bf16.mxu0 0
          %880 = vmatpush1.bf16.msra.mxu0 0
          %881 = vmatprep.subr.bf16.mxu0 0
          %882 = vmatpush1.bf16.msra.mxu0 0
          %883 = vmatprep.subr.bf16.mxu0 0
          %884 = vmatpush1.bf16.msra.mxu0 0
          %885 = vmatprep.subr.bf16.mxu0 0
          %886 = vmatpush1.bf16.msra.mxu0 0
          %887 = vmatprep.subr.bf16.mxu0 0
          %888 = vmatpush1.bf16.msra.mxu0 0
          %889 = vmatprep.subr.bf16.mxu0 0
          %890 = vmatpush1.bf16.msra.mxu0 0
          %891 = vmatprep.subr.bf16.mxu0 0
          %892 = vmatpush1.bf16.msra.mxu0 0
          %893 = vmatprep.subr.bf16.mxu0 0
          %894 = vmatpush1.bf16.msra.mxu0 0
          %895 = vmatprep.subr.bf16.mxu0 0
          %896 = vmatpush1.bf16.msra.mxu0 0
          %897 = vmatprep.subr.bf16.mxu0 0
          %898 = vmatpush1.bf16.msra.mxu0 0
          %899 = vmatprep.subr.bf16.mxu0 0
          %900 = vmatpush1.bf16.msra.mxu0 0
          %901 = vmatprep.subr.bf16.mxu0 0
          %902 = vmatpush1.bf16.msra.mxu0 0
          %903 = vmatprep.subr.bf16.mxu0 0
          %904 = vmatpush1.bf16.msra.mxu0 0
          %905 = vmatprep.mubr.bf16.mxu0 0
          %906 = vmatmul.mubr.bf16.gmra.mrb[0].mxu0 %v871
          %v907 = vpop.f32.mrb[0].mxu0
          %v908 = vadd.f32 %v862, %v907
          %v909 = vpop.f32.mrb[0].mxu0
          %v910 = vpop.f32.mrb[0].mxu0
          %v911 = vpop.f32.mrb[0].mxu0
          %912 = vdwg.mxu0
          %v913 = vld [vmem:[%s3] sm:$0x7f]
          %v914 = vadd.f32 %v908, %v913
          %v915 = vld [vmem:[%s4] sm:$0x1]
          %916 = vst.msk [vmem:[#allocation2 + $0x8] sm:$0x1] %vm848, %v915
          %917 = vst.msk [vmem:[#allocation2 + $0x9] sm:$0x7f] %vm850, %v914
        $region100: #{forward.1} parent=95 // pred_fallthru
          _
        %v918 = vld [vmem:[#allocation2] sm:$0xff]
        %v919 = vld [vmem:[#allocation2 + $0x8] sm:$0xff]
        %v920 = vld [vmem:[%s743] sm:$0x1]
        %v921 = vld [vmem:[%s746] sm:$0x1]
        %vm922 = vcmask 261120
        %v923 = vsel %vm922, %v918, 0.0
        %924 = vadd.xlane.f32.xlu0 %v923
        %v925 = vpop.xlane.xlu0 %924
        %v926 = vsel %vm922, %v919, 0.0
        %927 = vadd.xlane.f32.xlu0 %v926
        %v928 = vpop.xlane.xlu0 %927
        %v929 = vrcp.pop 32.0
        %v930 = vmul.f32 %v925, %v929
        %v931 = vmul.f32 %v928, %v929
        %v932 = vsub.f32 %v918, %v930
        %v933 = vsub.f32 %v919, %v931
        %v934 = vmul.f32 %v932, %v932
        %v935 = vmul.f32 %v933, %v933
        %v936 = vsel %vm922, %v934, 0.0
        %937 = vadd.xlane.f32.xlu0 %v936
        %v938 = vpop.xlane.xlu0 %937
        %v939 = vsel %vm922, %v935, 0.0
        %940 = vadd.xlane.f32.xlu0 %v939
        %v941 = vpop.xlane.xlu0 %940
        %v942 = vmul.f32 %v938, %v929
        %v943 = vmul.f32 %v941, %v929
        %v944 = vadd.f32 %v942, 1e-05
        %v945 = vadd.f32 %v943, 1e-05
        %v946 = vrsqrt.pop %v944
        %v947 = vrsqrt.pop %v945
        %v948 = vmul.f32 %v932, %v946
        %v949 = vmul.f32 %v933, %v947
        %v951 = vlaneseq
        %v952 = vshrl.u32 %v951, 7
        %v953 = vsub.s32 0, %v952
        %v954 = vrot.slane %v920, %v953
        %v956 = vmul.f32 %v948, %v954
        %v957 = vmul.f32 %v949, %v954
        %v959 = vlaneseq
        %v960 = vshrl.u32 %v959, 7
        %v961 = vsub.s32 0, %v960
        %v962 = vrot.slane %v921, %v961
        %v964 = vadd.f32 %v956, %v962
        %v965 = vadd.f32 %v957, %v962
        %v966 = vpack.c.bf16 %v965, %v964
        %v967 = vld [vmem:[%s751] sm:$0xf]
        %v968 = vld [vmem:[%s751 + $0x4] sm:$0xf]
        %v969 = vld [vmem:[%s751 + $0x8] sm:$0xf]
        %v970 = vld [vmem:[%s751 + $0xc] sm:$0xf]
        %v975 = vunpack.c.l.b16 %v967
        %v976 = vunpack.c.l.b16 %v968
        %v977 = vunpack.c.l.b16 %v969
        %v978 = vunpack.c.l.b16 %v970
        %v979 = vpack.c.b16 %v976, %v975
        %v980 = vpack.c.b16 %v978, %v977
        %v984 = vsel %vm922, %v966, 0
        %986 = vmatprep.subr.bf16.mxu0 0
        %987 = vmatpush1.bf16.msra.mxu0 %v979
        %988 = vmatprep.subr.bf16.mxu0 0
        %989 = vmatpush1.bf16.msra.mxu0 %v980
        %990 = vmatprep.subr.bf16.mxu0 0
        %991 = vmatpush1.bf16.msra.mxu0 0
        %992 = vmatprep.subr.bf16.mxu0 0
        %993 = vmatpush1.bf16.msra.mxu0 0
        %994 = vmatprep.subr.bf16.mxu0 0
        %995 = vmatpush1.bf16.msra.mxu0 0
        %996 = vmatprep.subr.bf16.mxu0 0
        %997 = vmatpush1.bf16.msra.mxu0 0
        %998 = vmatprep.subr.bf16.mxu0 0
        %999 = vmatpush1.bf16.msra.mxu0 0
        %1000 = vmatprep.subr.bf16.mxu0 0
        %1001 = vmatpush1.bf16.msra.mxu0 0
        %1002 = vmatprep.subr.bf16.mxu0 0
        %1003 = vmatpush1.bf16.msra.mxu0 0
        %1004 = vmatprep.subr.bf16.mxu0 0
        %1005 = vmatpush1.bf16.msra.mxu0 0
        %1006 = vmatprep.subr.bf16.mxu0 0
        %1007 = vmatpush1.bf16.msra.mxu0 0
        %1008 = vmatprep.subr.bf16.mxu0 0
        %1009 = vmatpush1.bf16.msra.mxu0 0
        %1010 = vmatprep.subr.bf16.mxu0 0
        %1011 = vmatpush1.bf16.msra.mxu0 0
        %1012 = vmatprep.subr.bf16.mxu0 0
        %1013 = vmatpush1.bf16.msra.mxu0 0
        %1014 = vmatprep.subr.bf16.mxu0 0
        %1015 = vmatpush1.bf16.msra.mxu0 0
        %1016 = vmatprep.subr.bf16.mxu0 0
        %1017 = vmatpush1.bf16.msra.mxu0 0
        %1018 = vmatprep.mubr.bf16.mxu0 0
        %1019 = vmatmul.mubr.bf16.gmra.mrb[0].mxu0 %v984
        %v1020 = vpop.f32.mrb[0].mxu0
        %v1021 = vadd.f32 0.0, %v1020
        %v1022 = vpop.f32.mrb[0].mxu0
        %v1023 = vpop.f32.mrb[0].mxu0
        %v1024 = vadd.f32 0.0, %v1023
        %v1025 = vpop.f32.mrb[0].mxu0
        %1026 = vdwg.mxu0
        %v1027 = vpack.c.bf16 %v1024, %v1021
        %v1029 = vunpack.c.l.b16 %v1027
        %v1030 = vunpack.c.h.b16 %v1027
        %v1031 = vpack.c.b16 %v1029, %v1029
        %v1032 = vpack.c.b16 %v1030, %v1030
        %1033 = vrot.lane.b32.xlu0 %v1031, 96
        %v1034 = vpop.permute.xlu0 %1033
        %vm1035 = vcmask 64512
        %v1037 = vsel %vm1035, %v1031, 0
        %v1040 = vsel %vm1035, %v1034, 0
        %1042 = vmatprep.subr.bf16.mxu0 0
        %1043 = vmatpush1.bf16.xpose.msra.mxu0 %v1040
        %1044 = vmatprep.subr.bf16.mxu0 0
        %1045 = vmatpush1.bf16.xpose.msra.mxu0 0
        %1046 = vmatprep.subr.bf16.mxu0 0
        %1047 = vmatpush1.bf16.xpose.msra.mxu0 0
        %1048 = vmatprep.subr.bf16.mxu0 0
        %1049 = vmatpush1.bf16.xpose.msra.mxu0 0
        %1050 = vmatprep.subr.bf16.mxu0 0
        %1051 = vmatpush1.bf16.xpose.msra.mxu0 0
        %1052 = vmatprep.subr.bf16.mxu0 0
        %1053 = vmatpush1.bf16.xpose.msra.mxu0 0
        %1054 = vmatprep.subr.bf16.mxu0 0
        %1055 = vmatpush1.bf16.xpose.msra.mxu0 0
        %1056 = vmatprep.subr.bf16.mxu0 0
        %1057 = vmatpush1.bf16.xpose.msra.mxu0 0
        %1058 = vmatprep.subr.bf16.mxu0 0
        %1059 = vmatpush1.bf16.xpose.msra.mxu0 0
        %1060 = vmatprep.subr.bf16.mxu0 0
        %1061 = vmatpush1.bf16.xpose.msra.mxu0 0
        %1062 = vmatprep.subr.bf16.mxu0 0
        %1063 = vmatpush1.bf16.xpose.msra.mxu0 0
        %1064 = vmatprep.subr.bf16.mxu0 0
        %1065 = vmatpush1.bf16.xpose.msra.mxu0 0
        %1066 = vmatprep.subr.bf16.mxu0 0
        %1067 = vmatpush1.bf16.xpose.msra.mxu0 0
        %1068 = vmatprep.subr.bf16.mxu0 0
        %1069 = vmatpush1.bf16.xpose.msra.mxu0 0
        %1070 = vmatprep.subr.bf16.mxu0 0
        %1071 = vmatpush1.bf16.xpose.msra.mxu0 0
        %1072 = vmatprep.subr.bf16.mxu0 0
        %1073 = vmatpush1.bf16.xpose.msra.mxu0 0
        %1074 = vmatprep.mubr.bf16.mxu0 0
        %1075 = vmatmul.mubr.bf16.gmra.mrb[0].mxu0 %v1037
        %v1076 = vpop.f32.mrb[0].mxu0
        %v1077 = vadd.f32 0.0, %v1076
        %v1078 = vpop.f32.mrb[0].mxu0
        %v1079 = vpop.f32.mrb[0].mxu0
        %v1080 = vpop.f32.mrb[0].mxu0
        %1081 = vdwg.mxu0
        %1082 = vrot.lane.b32.xlu0 %v1032, 96
        %v1083 = vpop.permute.xlu0 %1082
        %v1085 = vsel %vm1035, %v1032, 0
        %v1088 = vsel %vm1035, %v1083, 0
        %1090 = vmatprep.subr.bf16.mxu0 0
        %1091 = vmatpush1.bf16.xpose.msra.mxu0 %v1088
        %1092 = vmatprep.subr.bf16.mxu0 0
        %1093 = vmatpush1.bf16.xpose.msra.mxu0 0
        %1094 = vmatprep.subr.bf16.mxu0 0
        %1095 = vmatpush1.bf16.xpose.msra.mxu0 0
        %1096 = vmatprep.subr.bf16.mxu0 0
        %1097 = vmatpush1.bf16.xpose.msra.mxu0 0
        %1098 = vmatprep.subr.bf16.mxu0 0
        %1099 = vmatpush1.bf16.xpose.msra.mxu0 0
        %1100 = vmatprep.subr.bf16.mxu0 0
        %1101 = vmatpush1.bf16.xpose.msra.mxu0 0
        %1102 = vmatprep.subr.bf16.mxu0 0
        %1103 = vmatpush1.bf16.xpose.msra.mxu0 0
        %1104 = vmatprep.subr.bf16.mxu0 0
        %1105 = vmatpush1.bf16.xpose.msra.mxu0 0
        %1106 = vmatprep.subr.bf16.mxu0 0
        %1107 = vmatpush1.bf16.xpose.msra.mxu0 0
        %1108 = vmatprep.subr.bf16.mxu0 0
        %1109 = vmatpush1.bf16.xpose.msra.mxu0 0
        %1110 = vmatprep.subr.bf16.mxu0 0
        %1111 = vmatpush1.bf16.xpose.msra.mxu0 0
        %1112 = vmatprep.subr.bf16.mxu0 0
        %1113 = vmatpush1.bf16.xpose.msra.mxu0 0
        %1114 = vmatprep.subr.bf16.mxu0 0
        %1115 = vmatpush1.bf16.xpose.msra.mxu0 0
        %1116 = vmatprep.subr.bf16.mxu0 0
        %1117 = vmatpush1.bf16.xpose.msra.mxu0 0
        %1118 = vmatprep.subr.bf16.mxu0 0
        %1119 = vmatpush1.bf16.xpose.msra.mxu0 0
        %1120 = vmatprep.subr.bf16.mxu0 0
        %1121 = vmatpush1.bf16.xpose.msra.mxu0 0
        %1122 = vmatprep.mubr.bf16.mxu0 0
        %1123 = vmatmul.mubr.bf16.gmra.mrb[0].mxu0 %v1085
        %v1124 = vpop.f32.mrb[0].mxu0
        %v1125 = vadd.f32 0.0, %v1124
        %v1126 = vpop.f32.mrb[0].mxu0
        %v1127 = vpop.f32.mrb[0].mxu0
        %v1128 = vpop.f32.mrb[0].mxu0
        %1129 = vdwg.mxu0
        %v1130 = vsel %vm1035, %v1077, -inf
        %1131 = vmax.xlane.f32.xlu0 %v1130
        %v1132 = vpop.xlane.xlu0 %1131
        %v1133 = vsel %vm1035, %v1125, -inf
        %1134 = vmax.xlane.f32.xlu0 %v1133
        %v1135 = vpop.xlane.xlu0 %1134
        %v1136 = vsub.f32 %v1077, %v1132
        %v1137 = vsub.f32 %v1125, %v1135
        %v1138 = vmul.f32 %v1136, 1.442695
        %v1139 = vpow.pop %v1138
        %v1140 = vmul.f32 %v1137, 1.442695
        %v1141 = vpow.pop %v1140
        %v1142 = vsel %vm1035, %v1139, 0.0
        %1143 = vadd.xlane.f32.xlu0 %v1142
        %v1144 = vpop.xlane.xlu0 %1143
        %v1145 = vsel %vm1035, %v1141, 0.0
        %1146 = vadd.xlane.f32.xlu0 %v1145
        %v1147 = vpop.xlane.xlu0 %1146
        %v1148 = vrcp.pop %v1144
        %v1149 = vrcp.pop %v1147
        %v1150 = vmul.f32 %v1139, %v1148
        %v1151 = vmul.f32 %v1141, %v1149
        %v1152 = vpack.c.bf16 %v1150, %v1150
        %v1153 = vpack.c.bf16 %v1151, %v1151
        %1154 = vrot.lane.b32.xlu0 %v1031, 64
        %v1155 = vpop.permute.xlu0 %1154
        %v1157 = vsel %vm1035, %v1152, 0
        %vm1159 = vcmask 1043456
        %v1161 = vsel %vm1159, %v1155, 0
        %1163 = vmatprep.subr.bf16.mxu0 0
        %1164 = vmatpush1.bf16.msra.mxu0 %v1161
        %1165 = vmatprep.subr.bf16.mxu0 0
        %1166 = vmatpush1.bf16.msra.mxu0 0
        %1167 = vmatprep.subr.bf16.mxu0 0
        %1168 = vmatpush1.bf16.msra.mxu0 0
        %1169 = vmatprep.subr.bf16.mxu0 0
        %1170 = vmatpush1.bf16.msra.mxu0 0
        %1171 = vmatprep.subr.bf16.mxu0 0
        %1172 = vmatpush1.bf16.msra.mxu0 0
        %1173 = vmatprep.subr.bf16.mxu0 0
        %1174 = vmatpush1.bf16.msra.mxu0 0
        %1175 = vmatprep.subr.bf16.mxu0 0
        %1176 = vmatpush1.bf16.msra.mxu0 0
        %1177 = vmatprep.subr.bf16.mxu0 0
        %1178 = vmatpush1.bf16.msra.mxu0 0
        %1179 = vmatprep.subr.bf16.mxu0 0
        %1180 = vmatpush1.bf16.msra.mxu0 0
        %1181 = vmatprep.subr.bf16.mxu0 0
        %1182 = vmatpush1.bf16.msra.mxu0 0
        %1183 = vmatprep.subr.bf16.mxu0 0
        %1184 = vmatpush1.bf16.msra.mxu0 0
        %1185 = vmatprep.subr.bf16.mxu0 0
        %1186 = vmatpush1.bf16.msra.mxu0 0
        %1187 = vmatprep.subr.bf16.mxu0 0
        %1188 = vmatpush1.bf16.msra.mxu0 0
        %1189 = vmatprep.subr.bf16.mxu0 0
        %1190 = vmatpush1.bf16.msra.mxu0 0
        %1191 = vmatprep.subr.bf16.mxu0 0
        %1192 = vmatpush1.bf16.msra.mxu0 0
        %1193 = vmatprep.subr.bf16.mxu0 0
        %1194 = vmatpush1.bf16.msra.mxu0 0
        %1195 = vmatprep.mubr.bf16.mxu0 0
        %1196 = vmatmul.mubr.bf16.gmra.mrb[0].mxu0 %v1157
        %v1197 = vpop.f32.mrb[0].mxu0
        %v1198 = vadd.f32 0.0, %v1197
        %v1199 = vpop.f32.mrb[0].mxu0
        %v1200 = vpop.f32.mrb[0].mxu0
        %v1201 = vpop.f32.mrb[0].mxu0
        %1202 = vdwg.mxu0
        %1203 = vrot.lane.b32.xlu0 %v1032, 64
        %v1204 = vpop.permute.xlu0 %1203
        %v1206 = vsel %vm1035, %v1153, 0
        %v1209 = vsel %vm1159, %v1204, 0
        %1211 = vmatprep.subr.bf16.mxu0 0
        %1212 = vmatpush1.bf16.msra.mxu0 %v1209
        %1213 = vmatprep.subr.bf16.mxu0 0
        %1214 = vmatpush1.bf16.msra.mxu0 0
        %1215 = vmatprep.subr.bf16.mxu0 0
        %1216 = vmatpush1.bf16.msra.mxu0 0
        %1217 = vmatprep.subr.bf16.mxu0 0
        %1218 = vmatpush1.bf16.msra.mxu0 0
        %1219 = vmatprep.subr.bf16.mxu0 0
        %1220 = vmatpush1.bf16.msra.mxu0 0
        %1221 = vmatprep.subr.bf16.mxu0 0
        %1222 = vmatpush1.bf16.msra.mxu0 0
        %1223 = vmatprep.subr.bf16.mxu0 0
        %1224 = vmatpush1.bf16.msra.mxu0 0
        %1225 = vmatprep.subr.bf16.mxu0 0
        %1226 = vmatpush1.bf16.msra.mxu0 0
        %1227 = vmatprep.subr.bf16.mxu0 0
        %1228 = vmatpush1.bf16.msra.mxu0 0
        %1229 = vmatprep.subr.bf16.mxu0 0
        %1230 = vmatpush1.bf16.msra.mxu0 0
        %1231 = vmatprep.subr.bf16.mxu0 0
        %1232 = vmatpush1.bf16.msra.mxu0 0
        %1233 = vmatprep.subr.bf16.mxu0 0
        %1234 = vmatpush1.bf16.msra.mxu0 0
        %1235 = vmatprep.subr.bf16.mxu0 0
        %1236 = vmatpush1.bf16.msra.mxu0 0
        %1237 = vmatprep.subr.bf16.mxu0 0
        %1238 = vmatpush1.bf16.msra.mxu0 0
        %1239 = vmatprep.subr.bf16.mxu0 0
        %1240 = vmatpush1.bf16.msra.mxu0 0
        %1241 = vmatprep.subr.bf16.mxu0 0
        %1242 = vmatpush1.bf16.msra.mxu0 0
        %1243 = vmatprep.mubr.bf16.mxu0 0
        %1244 = vmatmul.mubr.bf16.gmra.mrb[0].mxu0 %v1206
        %v1245 = vpop.f32.mrb[0].mxu0
        %v1246 = vadd.f32 0.0, %v1245
        %v1247 = vpop.f32.mrb[0].mxu0
        %v1248 = vpop.f32.mrb[0].mxu0
        %v1249 = vpop.f32.mrb[0].mxu0
        %1250 = vdwg.mxu0
        %1251 = vrot.lane.b32.xlu0 %v1031, 120
        %v1252 = vpop.permute.xlu0 %1251
        %1253 = vrot.lane.b32.xlu0 %v1031, 88
        %v1254 = vpop.permute.xlu0 %1253
        %v1256 = vsel %vm1035, %v1252, 0
        %v1259 = vsel %vm1035, %v1254, 0
        %1261 = vmatprep.subr.bf16.mxu0 0
        %1262 = vmatpush1.bf16.xpose.msra.mxu0 %v1259
        %1263 = vmatprep.subr.bf16.mxu0 0
        %1264 = vmatpush1.bf16.xpose.msra.mxu0 0
        %1265 = vmatprep.subr.bf16.mxu0 0
        %1266 = vmatpush1.bf16.xpose.msra.mxu0 0
        %1267 = vmatprep.subr.bf16.mxu0 0
        %1268 = vmatpush1.bf16.xpose.msra.mxu0 0
        %1269 = vmatprep.subr.bf16.mxu0 0
        %1270 = vmatpush1.bf16.xpose.msra.mxu0 0
        %1271 = vmatprep.subr.bf16.mxu0 0
        %1272 = vmatpush1.bf16.xpose.msra.mxu0 0
        %1273 = vmatprep.subr.bf16.mxu0 0
        %1274 = vmatpush1.bf16.xpose.msra.mxu0 0
        %1275 = vmatprep.subr.bf16.mxu0 0
        %1276 = vmatpush1.bf16.xpose.msra.mxu0 0
        %1277 = vmatprep.subr.bf16.mxu0 0
        %1278 = vmatpush1.bf16.xpose.msra.mxu0 0
        %1279 = vmatprep.subr.bf16.mxu0 0
        %1280 = vmatpush1.bf16.xpose.msra.mxu0 0
        %1281 = vmatprep.subr.bf16.mxu0 0
        %1282 = vmatpush1.bf16.xpose.msra.mxu0 0
        %1283 = vmatprep.subr.bf16.mxu0 0
        %1284 = vmatpush1.bf16.xpose.msra.mxu0 0
        %1285 = vmatprep.subr.bf16.mxu0 0
        %1286 = vmatpush1.bf16.xpose.msra.mxu0 0
        %1287 = vmatprep.subr.bf16.mxu0 0
        %1288 = vmatpush1.bf16.xpose.msra.mxu0 0
        %1289 = vmatprep.subr.bf16.mxu0 0
        %1290 = vmatpush1.bf16.xpose.msra.mxu0 0
        %1291 = vmatprep.subr.bf16.mxu0 0
        %1292 = vmatpush1.bf16.xpose.msra.mxu0 0
        %1293 = vmatprep.mubr.bf16.mxu0 0
        %1294 = vmatmul.mubr.bf16.gmra.mrb[0].mxu0 %v1256
        %v1295 = vpop.f32.mrb[0].mxu0
        %v1296 = vadd.f32 0.0, %v1295
        %v1297 = vpop.f32.mrb[0].mxu0
        %v1298 = vpop.f32.mrb[0].mxu0
        %v1299 = vpop.f32.mrb[0].mxu0
        %1300 = vdwg.mxu0
        %1301 = vrot.lane.b32.xlu0 %v1032, 120
        %v1302 = vpop.permute.xlu0 %1301
        %1303 = vrot.lane.b32.xlu0 %v1032, 88
        %v1304 = vpop.permute.xlu0 %1303
        %v1306 = vsel %vm1035, %v1302, 0
        %v1309 = vsel %vm1035, %v1304, 0
        %1311 = vmatprep.subr.bf16.mxu0 0
        %1312 = vmatpush1.bf16.xpose.msra.mxu0 %v1309
        %1313 = vmatprep.subr.bf16.mxu0 0
        %1314 = vmatpush1.bf16.xpose.msra.mxu0 0
        %1315 = vmatprep.subr.bf16.mxu0 0
        %1316 = vmatpush1.bf16.xpose.msra.mxu0 0
        %1317 = vmatprep.subr.bf16.mxu0 0
        %1318 = vmatpush1.bf16.xpose.msra.mxu0 0
        %1319 = vmatprep.subr.bf16.mxu0 0
        %1320 = vmatpush1.bf16.xpose.msra.mxu0 0
        %1321 = vmatprep.subr.bf16.mxu0 0
        %1322 = vmatpush1.bf16.xpose.msra.mxu0 0
        %1323 = vmatprep.subr.bf16.mxu0 0
        %1324 = vmatpush1.bf16.xpose.msra.mxu0 0
        %1325 = vmatprep.subr.bf16.mxu0 0
        %1326 = vmatpush1.bf16.xpose.msra.mxu0 0
        %1327 = vmatprep.subr.bf16.mxu0 0
        %1328 = vmatpush1.bf16.xpose.msra.mxu0 0
        %1329 = vmatprep.subr.bf16.mxu0 0
        %1330 = vmatpush1.bf16.xpose.msra.mxu0 0
        %1331 = vmatprep.subr.bf16.mxu0 0
        %1332 = vmatpush1.bf16.xpose.msra.mxu0 0
        %1333 = vmatprep.subr.bf16.mxu0 0
        %1334 = vmatpush1.bf16.xpose.msra.mxu0 0
        %1335 = vmatprep.subr.bf16.mxu0 0
        %1336 = vmatpush1.bf16.xpose.msra.mxu0 0
        %1337 = vmatprep.subr.bf16.mxu0 0
        %1338 = vmatpush1.bf16.xpose.msra.mxu0 0
        %1339 = vmatprep.subr.bf16.mxu0 0
        %1340 = vmatpush1.bf16.xpose.msra.mxu0 0
        %1341 = vmatprep.subr.bf16.mxu0 0
        %1342 = vmatpush1.bf16.xpose.msra.mxu0 0
        %1343 = vmatprep.mubr.bf16.mxu0 0
        %1344 = vmatmul.mubr.bf16.gmra.mrb[0].mxu0 %v1306
        %v1345 = vpop.f32.mrb[0].mxu0
        %v1346 = vadd.f32 0.0, %v1345
        %v1347 = vpop.f32.mrb[0].mxu0
        %v1348 = vpop.f32.mrb[0].mxu0
        %v1349 = vpop.f32.mrb[0].mxu0
        %1350 = vdwg.mxu0
        %v1351 = vsel %vm1035, %v1296, -inf
        %1352 = vmax.xlane.f32.xlu0 %v1351
        %v1353 = vpop.xlane.xlu0 %1352
        %v1354 = vsel %vm1035, %v1346, -inf
        %1355 = vmax.xlane.f32.xlu0 %v1354
        %v1356 = vpop.xlane.xlu0 %1355
        %v1357 = vsub.f32 %v1296, %v1353
        %v1358 = vsub.f32 %v1346, %v1356
        %v1359 = vmul.f32 %v1357, 1.442695
        %v1360 = vpow.pop %v1359
        %v1361 = vmul.f32 %v1358, 1.442695
        %v1362 = vpow.pop %v1361
        %v1363 = vsel %vm1035, %v1360, 0.0
        %1364 = vadd.xlane.f32.xlu0 %v1363
        %v1365 = vpop.xlane.xlu0 %1364
        %v1366 = vsel %vm1035, %v1362, 0.0
        %1367 = vadd.xlane.f32.xlu0 %v1366
        %v1368 = vpop.xlane.xlu0 %1367
        %v1369 = vrcp.pop %v1365
        %v1370 = vrcp.pop %v1368
        %v1371 = vmul.f32 %v1360, %v1369
        %v1372 = vmul.f32 %v1362, %v1370
        %v1373 = vpack.c.bf16 %v1371, %v1371
        %v1374 = vpack.c.bf16 %v1372, %v1372
        %1375 = vrot.lane.b32.xlu0 %v1031, 56
        %v1376 = vpop.permute.xlu0 %1375
        %v1378 = vsel %vm1035, %v1373, 0
        %v1381 = vsel %vm1159, %v1376, 0
        %1383 = vmatprep.subr.bf16.mxu0 0
        %1384 = vmatpush1.bf16.msra.mxu0 %v1381
        %1385 = vmatprep.subr.bf16.mxu0 0
        %1386 = vmatpush1.bf16.msra.mxu0 0
        %1387 = vmatprep.subr.bf16.mxu0 0
        %1388 = vmatpush1.bf16.msra.mxu0 0
        %1389 = vmatprep.subr.bf16.mxu0 0
        %1390 = vmatpush1.bf16.msra.mxu0 0
        %1391 = vmatprep.subr.bf16.mxu0 0
        %1392 = vmatpush1.bf16.msra.mxu0 0
        %1393 = vmatprep.subr.bf16.mxu0 0
        %1394 = vmatpush1.bf16.msra.mxu0 0
        %1395 = vmatprep.subr.bf16.mxu0 0
        %1396 = vmatpush1.bf16.msra.mxu0 0
        %1397 = vmatprep.subr.bf16.mxu0 0
        %1398 = vmatpush1.bf16.msra.mxu0 0
        %1399 = vmatprep.subr.bf16.mxu0 0
        %1400 = vmatpush1.bf16.msra.mxu0 0
        %1401 = vmatprep.subr.bf16.mxu0 0
        %1402 = vmatpush1.bf16.msra.mxu0 0
        %1403 = vmatprep.subr.bf16.mxu0 0
        %1404 = vmatpush1.bf16.msra.mxu0 0
        %1405 = vmatprep.subr.bf16.mxu0 0
        %1406 = vmatpush1.bf16.msra.mxu0 0
        %1407 = vmatprep.subr.bf16.mxu0 0
        %1408 = vmatpush1.bf16.msra.mxu0 0
        %1409 = vmatprep.subr.bf16.mxu0 0
        %1410 = vmatpush1.bf16.msra.mxu0 0
        %1411 = vmatprep.subr.bf16.mxu0 0
        %1412 = vmatpush1.bf16.msra.mxu0 0
        %1413 = vmatprep.subr.bf16.mxu0 0
        %1414 = vmatpush1.bf16.msra.mxu0 0
        %1415 = vmatprep.mubr.bf16.mxu0 0
        %1416 = vmatmul.mubr.bf16.gmra.mrb[0].mxu0 %v1378
        %v1417 = vpop.f32.mrb[0].mxu0
        %v1418 = vadd.f32 0.0, %v1417
        %v1419 = vpop.f32.mrb[0].mxu0
        %v1420 = vpop.f32.mrb[0].mxu0
        %v1421 = vpop.f32.mrb[0].mxu0
        %1422 = vdwg.mxu0
        %1423 = vrot.lane.b32.xlu0 %v1032, 56
        %v1424 = vpop.permute.xlu0 %1423
        %v1426 = vsel %vm1035, %v1374, 0
        %v1429 = vsel %vm1159, %v1424, 0
        %1431 = vmatprep.subr.bf16.mxu0 0
        %1432 = vmatpush1.bf16.msra.mxu0 %v1429
        %1433 = vmatprep.subr.bf16.mxu0 0
        %1434 = vmatpush1.bf16.msra.mxu0 0
        %1435 = vmatprep.subr.bf16.mxu0 0
        %1436 = vmatpush1.bf16.msra.mxu0 0
        %1437 = vmatprep.subr.bf16.mxu0 0
        %1438 = vmatpush1.bf16.msra.mxu0 0
        %1439 = vmatprep.subr.bf16.mxu0 0
        %1440 = vmatpush1.bf16.msra.mxu0 0
        %1441 = vmatprep.subr.bf16.mxu0 0
        %1442 = vmatpush1.bf16.msra.mxu0 0
        %1443 = vmatprep.subr.bf16.mxu0 0
        %1444 = vmatpush1.bf16.msra.mxu0 0
        %1445 = vmatprep.subr.bf16.mxu0 0
        %1446 = vmatpush1.bf16.msra.mxu0 0
        %1447 = vmatprep.subr.bf16.mxu0 0
        %1448 = vmatpush1.bf16.msra.mxu0 0
        %1449 = vmatprep.subr.bf16.mxu0 0
        %1450 = vmatpush1.bf16.msra.mxu0 0
        %1451 = vmatprep.subr.bf16.mxu0 0
        %1452 = vmatpush1.bf16.msra.mxu0 0
        %1453 = vmatprep.subr.bf16.mxu0 0
        %1454 = vmatpush1.bf16.msra.mxu0 0
        %1455 = vmatprep.subr.bf16.mxu0 0
        %1456 = vmatpush1.bf16.msra.mxu0 0
        %1457 = vmatprep.subr.bf16.mxu0 0
        %1458 = vmatpush1.bf16.msra.mxu0 0
        %1459 = vmatprep.subr.bf16.mxu0 0
        %1460 = vmatpush1.bf16.msra.mxu0 0
        %1461 = vmatprep.subr.bf16.mxu0 0
        %1462 = vmatpush1.bf16.msra.mxu0 0
        %1463 = vmatprep.mubr.bf16.mxu0 0
        %1464 = vmatmul.mubr.bf16.gmra.mrb[0].mxu0 %v1426
        %v1465 = vpop.f32.mrb[0].mxu0
        %v1466 = vadd.f32 0.0, %v1465
        %v1467 = vpop.f32.mrb[0].mxu0
        %v1468 = vpop.f32.mrb[0].mxu0
        %v1469 = vpop.f32.mrb[0].mxu0
        %1470 = vdwg.mxu0
        %1471 = vrot.lane.b32.xlu0 %v1031, 112
        %v1472 = vpop.permute.xlu0 %1471
        %1473 = vrot.lane.b32.xlu0 %v1031, 80
        %v1474 = vpop.permute.xlu0 %1473
        %v1476 = vsel %vm1035, %v1472, 0
        %v1479 = vsel %vm1035, %v1474, 0
        %1481 = vmatprep.subr.bf16.mxu0 0
        %1482 = vmatpush1.bf16.xpose.msra.mxu0 %v1479
        %1483 = vmatprep.subr.bf16.mxu0 0
        %1484 = vmatpush1.bf16.xpose.msra.mxu0 0
        %1485 = vmatprep.subr.bf16.mxu0 0
        %1486 = vmatpush1.bf16.xpose.msra.mxu0 0
        %1487 = vmatprep.subr.bf16.mxu0 0
        %1488 = vmatpush1.bf16.xpose.msra.mxu0 0
        %1489 = vmatprep.subr.bf16.mxu0 0
        %1490 = vmatpush1.bf16.xpose.msra.mxu0 0
        %1491 = vmatprep.subr.bf16.mxu0 0
        %1492 = vmatpush1.bf16.xpose.msra.mxu0 0
        %1493 = vmatprep.subr.bf16.mxu0 0
        %1494 = vmatpush1.bf16.xpose.msra.mxu0 0
        %1495 = vmatprep.subr.bf16.mxu0 0
        %1496 = vmatpush1.bf16.xpose.msra.mxu0 0
        %1497 = vmatprep.subr.bf16.mxu0 0
        %1498 = vmatpush1.bf16.xpose.msra.mxu0 0
        %1499 = vmatprep.subr.bf16.mxu0 0
        %1500 = vmatpush1.bf16.xpose.msra.mxu0 0
        %1501 = vmatprep.subr.bf16.mxu0 0
        %1502 = vmatpush1.bf16.xpose.msra.mxu0 0
        %1503 = vmatprep.subr.bf16.mxu0 0
        %1504 = vmatpush1.bf16.xpose.msra.mxu0 0
        %1505 = vmatprep.subr.bf16.mxu0 0
        %1506 = vmatpush1.bf16.xpose.msra.mxu0 0
        %1507 = vmatprep.subr.bf16.mxu0 0
        %1508 = vmatpush1.bf16.xpose.msra.mxu0 0
        %1509 = vmatprep.subr.bf16.mxu0 0
        %1510 = vmatpush1.bf16.xpose.msra.mxu0 0
        %1511 = vmatprep.subr.bf16.mxu0 0
        %1512 = vmatpush1.bf16.xpose.msra.mxu0 0
        %1513 = vmatprep.mubr.bf16.mxu0 0
        %1514 = vmatmul.mubr.bf16.gmra.mrb[0].mxu0 %v1476
        %v1515 = vpop.f32.mrb[0].mxu0
        %v1516 = vadd.f32 0.0, %v1515
        %v1517 = vpop.f32.mrb[0].mxu0
        %v1518 = vpop.f32.mrb[0].mxu0
        %v1519 = vpop.f32.mrb[0].mxu0
        %1520 = vdwg.mxu0
        %1521 = vrot.lane.b32.xlu0 %v1032, 112
        %v1522 = vpop.permute.xlu0 %1521
        %1523 = vrot.lane.b32.xlu0 %v1032, 80
        %v1524 = vpop.permute.xlu0 %1523
        %v1526 = vsel %vm1035, %v1522, 0
        %v1529 = vsel %vm1035, %v1524, 0
        %1531 = vmatprep.subr.bf16.mxu0 0
        %1532 = vmatpush1.bf16.xpose.msra.mxu0 %v1529
        %1533 = vmatprep.subr.bf16.mxu0 0
        %1534 = vmatpush1.bf16.xpose.msra.mxu0 0
        %1535 = vmatprep.subr.bf16.mxu0 0
        %1536 = vmatpush1.bf16.xpose.msra.mxu0 0
        %1537 = vmatprep.subr.bf16.mxu0 0
        %1538 = vmatpush1.bf16.xpose.msra.mxu0 0
        %1539 = vmatprep.subr.bf16.mxu0 0
        %1540 = vmatpush1.bf16.xpose.msra.mxu0 0
        %1541 = vmatprep.subr.bf16.mxu0 0
        %1542 = vmatpush1.bf16.xpose.msra.mxu0 0
        %1543 = vmatprep.subr.bf16.mxu0 0
        %1544 = vmatpush1.bf16.xpose.msra.mxu0 0
        %1545 = vmatprep.subr.bf16.mxu0 0
        %1546 = vmatpush1.bf16.xpose.msra.mxu0 0
        %1547 = vmatprep.subr.bf16.mxu0 0
        %1548 = vmatpush1.bf16.xpose.msra.mxu0 0
        %1549 = vmatprep.subr.bf16.mxu0 0
        %1550 = vmatpush1.bf16.xpose.msra.mxu0 0
        %1551 = vmatprep.subr.bf16.mxu0 0
        %1552 = vmatpush1.bf16.xpose.msra.mxu0 0
        %1553 = vmatprep.subr.bf16.mxu0 0
        %1554 = vmatpush1.bf16.xpose.msra.mxu0 0
        %1555 = vmatprep.subr.bf16.mxu0 0
        %1556 = vmatpush1.bf16.xpose.msra.mxu0 0
        %1557 = vmatprep.subr.bf16.mxu0 0
        %1558 = vmatpush1.bf16.xpose.msra.mxu0 0
        %1559 = vmatprep.subr.bf16.mxu0 0
        %1560 = vmatpush1.bf16.xpose.msra.mxu0 0
        %1561 = vmatprep.subr.bf16.mxu0 0
        %1562 = vmatpush1.bf16.xpose.msra.mxu0 0
        %1563 = vmatprep.mubr.bf16.mxu0 0
        %1564 = vmatmul.mubr.bf16.gmra.mrb[0].mxu0 %v1526
        %v1565 = vpop.f32.mrb[0].mxu0
        %v1566 = vadd.f32 0.0, %v1565
        %v1567 = vpop.f32.mrb[0].mxu0
        %v1568 = vpop.f32.mrb[0].mxu0
        %v1569 = vpop.f32.mrb[0].mxu0
        %1570 = vdwg.mxu0
        %v1571 = vsel %vm1035, %v1516, -inf
        %1572 = vmax.xlane.f32.xlu0 %v1571
        %v1573 = vpop.xlane.xlu0 %1572
        %v1574 = vsel %vm1035, %v1566, -inf
        %1575 = vmax.xlane.f32.xlu0 %v1574
        %v1576 = vpop.xlane.xlu0 %1575
        %v1577 = vsub.f32 %v1516, %v1573
        %v1578 = vsub.f32 %v1566, %v1576
        %v1579 = vmul.f32 %v1577, 1.442695
        %v1580 = vpow.pop %v1579
        %v1581 = vmul.f32 %v1578, 1.442695
        %v1582 = vpow.pop %v1581
        %v1583 = vsel %vm1035, %v1580, 0.0
        %1584 = vadd.xlane.f32.xlu0 %v1583
        %v1585 = vpop.xlane.xlu0 %1584
        %v1586 = vsel %vm1035, %v1582, 0.0
        %1587 = vadd.xlane.f32.xlu0 %v1586
        %v1588 = vpop.xlane.xlu0 %1587
        %v1589 = vrcp.pop %v1585
        %v1590 = vrcp.pop %v1588
        %v1591 = vmul.f32 %v1580, %v1589
        %v1592 = vmul.f32 %v1582, %v1590
        %v1593 = vpack.c.bf16 %v1591, %v1591
        %v1594 = vpack.c.bf16 %v1592, %v1592
        %1595 = vrot.lane.b32.xlu0 %v1031, 48
        %v1596 = vpop.permute.xlu0 %1595
        %v1598 = vsel %vm1035, %v1593, 0
        %v1601 = vsel %vm1159, %v1596, 0
        %1603 = vmatprep.subr.bf16.mxu0 0
        %1604 = vmatpush1.bf16.msra.mxu0 %v1601
        %1605 = vmatprep.subr.bf16.mxu0 0
        %1606 = vmatpush1.bf16.msra.mxu0 0
        %1607 = vmatprep.subr.bf16.mxu0 0
        %1608 = vmatpush1.bf16.msra.mxu0 0
        %1609 = vmatprep.subr.bf16.mxu0 0
        %1610 = vmatpush1.bf16.msra.mxu0 0
        %1611 = vmatprep.subr.bf16.mxu0 0
        %1612 = vmatpush1.bf16.msra.mxu0 0
        %1613 = vmatprep.subr.bf16.mxu0 0
        %1614 = vmatpush1.bf16.msra.mxu0 0
        %1615 = vmatprep.subr.bf16.mxu0 0
        %1616 = vmatpush1.bf16.msra.mxu0 0
        %1617 = vmatprep.subr.bf16.mxu0 0
        %1618 = vmatpush1.bf16.msra.mxu0 0
        %1619 = vmatprep.subr.bf16.mxu0 0
        %1620 = vmatpush1.bf16.msra.mxu0 0
        %1621 = vmatprep.subr.bf16.mxu0 0
        %1622 = vmatpush1.bf16.msra.mxu0 0
        %1623 = vmatprep.subr.bf16.mxu0 0
        %1624 = vmatpush1.bf16.msra.mxu0 0
        %1625 = vmatprep.subr.bf16.mxu0 0
        %1626 = vmatpush1.bf16.msra.mxu0 0
        %1627 = vmatprep.subr.bf16.mxu0 0
        %1628 = vmatpush1.bf16.msra.mxu0 0
        %1629 = vmatprep.subr.bf16.mxu0 0
        %1630 = vmatpush1.bf16.msra.mxu0 0
        %1631 = vmatprep.subr.bf16.mxu0 0
        %1632 = vmatpush1.bf16.msra.mxu0 0
        %1633 = vmatprep.subr.bf16.mxu0 0
        %1634 = vmatpush1.bf16.msra.mxu0 0
        %1635 = vmatprep.mubr.bf16.mxu0 0
        %1636 = vmatmul.mubr.bf16.gmra.mrb[0].mxu0 %v1598
        %v1637 = vpop.f32.mrb[0].mxu0
        %v1638 = vadd.f32 0.0, %v1637
        %v1639 = vpop.f32.mrb[0].mxu0
        %v1640 = vpop.f32.mrb[0].mxu0
        %v1641 = vpop.f32.mrb[0].mxu0
        %1642 = vdwg.mxu0
        %1643 = vrot.lane.b32.xlu0 %v1032, 48
        %v1644 = vpop.permute.xlu0 %1643
        %v1646 = vsel %vm1035, %v1594, 0
        %v1649 = vsel %vm1159, %v1644, 0
        %1651 = vmatprep.subr.bf16.mxu0 0
        %1652 = vmatpush1.bf16.msra.mxu0 %v1649
        %1653 = vmatprep.subr.bf16.mxu0 0
        %1654 = vmatpush1.bf16.msra.mxu0 0
        %1655 = vmatprep.subr.bf16.mxu0 0
        %1656 = vmatpush1.bf16.msra.mxu0 0
        %1657 = vmatprep.subr.bf16.mxu0 0
        %1658 = vmatpush1.bf16.msra.mxu0 0
        %1659 = vmatprep.subr.bf16.mxu0 0
        %1660 = vmatpush1.bf16.msra.mxu0 0
        %1661 = vmatprep.subr.bf16.mxu0 0
        %1662 = vmatpush1.bf16.msra.mxu0 0
        %1663 = vmatprep.subr.bf16.mxu0 0
        %1664 = vmatpush1.bf16.msra.mxu0 0
        %1665 = vmatprep.subr.bf16.mxu0 0
        %1666 = vmatpush1.bf16.msra.mxu0 0
        %1667 = vmatprep.subr.bf16.mxu0 0
        %1668 = vmatpush1.bf16.msra.mxu0 0
        %1669 = vmatprep.subr.bf16.mxu0 0
        %1670 = vmatpush1.bf16.msra.mxu0 0
        %1671 = vmatprep.subr.bf16.mxu0 0
        %1672 = vmatpush1.bf16.msra.mxu0 0
        %1673 = vmatprep.subr.bf16.mxu0 0
        %1674 = vmatpush1.bf16.msra.mxu0 0
        %1675 = vmatprep.subr.bf16.mxu0 0
        %1676 = vmatpush1.bf16.msra.mxu0 0
        %1677 = vmatprep.subr.bf16.mxu0 0
        %1678 = vmatpush1.bf16.msra.mxu0 0
        %1679 = vmatprep.subr.bf16.mxu0 0
        %1680 = vmatpush1.bf16.msra.mxu0 0
        %1681 = vmatprep.subr.bf16.mxu0 0
        %1682 = vmatpush1.bf16.msra.mxu0 0
        %1683 = vmatprep.mubr.bf16.mxu0 0
        %1684 = vmatmul.mubr.bf16.gmra.mrb[0].mxu0 %v1646
        %v1685 = vpop.f32.mrb[0].mxu0
        %v1686 = vadd.f32 0.0, %v1685
        %v1687 = vpop.f32.mrb[0].mxu0
        %v1688 = vpop.f32.mrb[0].mxu0
        %v1689 = vpop.f32.mrb[0].mxu0
        %1690 = vdwg.mxu0
        %1691 = vrot.lane.b32.xlu0 %v1031, 104
        %v1692 = vpop.permute.xlu0 %1691
        %1693 = vrot.lane.b32.xlu0 %v1031, 72
        %v1694 = vpop.permute.xlu0 %1693
        %v1696 = vsel %vm1035, %v1692, 0
        %v1699 = vsel %vm1035, %v1694, 0
        %1701 = vmatprep.subr.bf16.mxu0 0
        %1702 = vmatpush1.bf16.xpose.msra.mxu0 %v1699
        %1703 = vmatprep.subr.bf16.mxu0 0
        %1704 = vmatpush1.bf16.xpose.msra.mxu0 0
        %1705 = vmatprep.subr.bf16.mxu0 0
        %1706 = vmatpush1.bf16.xpose.msra.mxu0 0
        %1707 = vmatprep.subr.bf16.mxu0 0
        %1708 = vmatpush1.bf16.xpose.msra.mxu0 0
        %1709 = vmatprep.subr.bf16.mxu0 0
        %1710 = vmatpush1.bf16.xpose.msra.mxu0 0
        %1711 = vmatprep.subr.bf16.mxu0 0
        %1712 = vmatpush1.bf16.xpose.msra.mxu0 0
        %1713 = vmatprep.subr.bf16.mxu0 0
        %1714 = vmatpush1.bf16.xpose.msra.mxu0 0
        %1715 = vmatprep.subr.bf16.mxu0 0
        %1716 = vmatpush1.bf16.xpose.msra.mxu0 0
        %1717 = vmatprep.subr.bf16.mxu0 0
        %1718 = vmatpush1.bf16.xpose.msra.mxu0 0
        %1719 = vmatprep.subr.bf16.mxu0 0
        %1720 = vmatpush1.bf16.xpose.msra.mxu0 0
        %1721 = vmatprep.subr.bf16.mxu0 0
        %1722 = vmatpush1.bf16.xpose.msra.mxu0 0
        %1723 = vmatprep.subr.bf16.mxu0 0
        %1724 = vmatpush1.bf16.xpose.msra.mxu0 0
        %1725 = vmatprep.subr.bf16.mxu0 0
        %1726 = vmatpush1.bf16.xpose.msra.mxu0 0
        %1727 = vmatprep.subr.bf16.mxu0 0
        %1728 = vmatpush1.bf16.xpose.msra.mxu0 0
        %1729 = vmatprep.subr.bf16.mxu0 0
        %1730 = vmatpush1.bf16.xpose.msra.mxu0 0
        %1731 = vmatprep.subr.bf16.mxu0 0
        %1732 = vmatpush1.bf16.xpose.msra.mxu0 0
        %1733 = vmatprep.mubr.bf16.mxu0 0
        %1734 = vmatmul.mubr.bf16.gmra.mrb[0].mxu0 %v1696
        %v1735 = vpop.f32.mrb[0].mxu0
        %v1736 = vadd.f32 0.0, %v1735
        %v1737 = vpop.f32.mrb[0].mxu0
        %v1738 = vpop.f32.mrb[0].mxu0
        %v1739 = vpop.f32.mrb[0].mxu0
        %1740 = vdwg.mxu0
        %1741 = vrot.lane.b32.xlu0 %v1032, 104
        %v1742 = vpop.permute.xlu0 %1741
        %1743 = vrot.lane.b32.xlu0 %v1032, 72
        %v1744 = vpop.permute.xlu0 %1743
        %v1746 = vsel %vm1035, %v1742, 0
        %v1749 = vsel %vm1035, %v1744, 0
        %1751 = vmatprep.subr.bf16.mxu0 0
        %1752 = vmatpush1.bf16.xpose.msra.mxu0 %v1749
        %1753 = vmatprep.subr.bf16.mxu0 0
        %1754 = vmatpush1.bf16.xpose.msra.mxu0 0
        %1755 = vmatprep.subr.bf16.mxu0 0
        %1756 = vmatpush1.bf16.xpose.msra.mxu0 0
        %1757 = vmatprep.subr.bf16.mxu0 0
        %1758 = vmatpush1.bf16.xpose.msra.mxu0 0
        %1759 = vmatprep.subr.bf16.mxu0 0
        %1760 = vmatpush1.bf16.xpose.msra.mxu0 0
        %1761 = vmatprep.subr.bf16.mxu0 0
        %1762 = vmatpush1.bf16.xpose.msra.mxu0 0
        %1763 = vmatprep.subr.bf16.mxu0 0
        %1764 = vmatpush1.bf16.xpose.msra.mxu0 0
        %1765 = vmatprep.subr.bf16.mxu0 0
        %1766 = vmatpush1.bf16.xpose.msra.mxu0 0
        %1767 = vmatprep.subr.bf16.mxu0 0
        %1768 = vmatpush1.bf16.xpose.msra.mxu0 0
        %1769 = vmatprep.subr.bf16.mxu0 0
        %1770 = vmatpush1.bf16.xpose.msra.mxu0 0
        %1771 = vmatprep.subr.bf16.mxu0 0
        %1772 = vmatpush1.bf16.xpose.msra.mxu0 0
        %1773 = vmatprep.subr.bf16.mxu0 0
        %1774 = vmatpush1.bf16.xpose.msra.mxu0 0
        %1775 = vmatprep.subr.bf16.mxu0 0
        %1776 = vmatpush1.bf16.xpose.msra.mxu0 0
        %1777 = vmatprep.subr.bf16.mxu0 0
        %1778 = vmatpush1.bf16.xpose.msra.mxu0 0
        %1779 = vmatprep.subr.bf16.mxu0 0
        %1780 = vmatpush1.bf16.xpose.msra.mxu0 0
        %1781 = vmatprep.subr.bf16.mxu0 0
        %1782 = vmatpush1.bf16.xpose.msra.mxu0 0
        %1783 = vmatprep.mubr.bf16.mxu0 0
        %1784 = vmatmul.mubr.bf16.gmra.mrb[0].mxu0 %v1746
        %v1785 = vpop.f32.mrb[0].mxu0
        %v1786 = vadd.f32 0.0, %v1785
        %v1787 = vpop.f32.mrb[0].mxu0
        %v1788 = vpop.f32.mrb[0].mxu0
        %v1789 = vpop.f32.mrb[0].mxu0
        %1790 = vdwg.mxu0
        %v1791 = vsel %vm1035, %v1736, -inf
        %1792 = vmax.xlane.f32.xlu0 %v1791
        %v1793 = vpop.xlane.xlu0 %1792
        %v1794 = vsel %vm1035, %v1786, -inf
        %1795 = vmax.xlane.f32.xlu0 %v1794
        %v1796 = vpop.xlane.xlu0 %1795
        %v1797 = vsub.f32 %v1736, %v1793
        %v1798 = vsub.f32 %v1786, %v1796
        %v1799 = vmul.f32 %v1797, 1.442695
        %v1800 = vpow.pop %v1799
        %v1801 = vmul.f32 %v1798, 1.442695
        %v1802 = vpow.pop %v1801
        %v1803 = vsel %vm1035, %v1800, 0.0
        %1804 = vadd.xlane.f32.xlu0 %v1803
        %v1805 = vpop.xlane.xlu0 %1804
        %v1806 = vsel %vm1035, %v1802, 0.0
        %1807 = vadd.xlane.f32.xlu0 %v1806
        %v1808 = vpop.xlane.xlu0 %1807
        %v1809 = vrcp.pop %v1805
        %v1810 = vrcp.pop %v1808
        %v1811 = vmul.f32 %v1800, %v1809
        %v1812 = vmul.f32 %v1802, %v1810
        %v1813 = vpack.c.bf16 %v1811, %v1811
        %v1814 = vpack.c.bf16 %v1812, %v1812
        %1815 = vrot.lane.b32.xlu0 %v1031, 40
        %v1816 = vpop.permute.xlu0 %1815
        %v1818 = vsel %vm1035, %v1813, 0
        %v1821 = vsel %vm1159, %v1816, 0
        %1823 = vmatprep.subr.bf16.mxu0 0
        %1824 = vmatpush1.bf16.msra.mxu0 %v1821
        %1825 = vmatprep.subr.bf16.mxu0 0
        %1826 = vmatpush1.bf16.msra.mxu0 0
        %1827 = vmatprep.subr.bf16.mxu0 0
        %1828 = vmatpush1.bf16.msra.mxu0 0
        %1829 = vmatprep.subr.bf16.mxu0 0
        %1830 = vmatpush1.bf16.msra.mxu0 0
        %1831 = vmatprep.subr.bf16.mxu0 0
        %1832 = vmatpush1.bf16.msra.mxu0 0
        %1833 = vmatprep.subr.bf16.mxu0 0
        %1834 = vmatpush1.bf16.msra.mxu0 0
        %1835 = vmatprep.subr.bf16.mxu0 0
        %1836 = vmatpush1.bf16.msra.mxu0 0
        %1837 = vmatprep.subr.bf16.mxu0 0
        %1838 = vmatpush1.bf16.msra.mxu0 0
        %1839 = vmatprep.subr.bf16.mxu0 0
        %1840 = vmatpush1.bf16.msra.mxu0 0
        %1841 = vmatprep.subr.bf16.mxu0 0
        %1842 = vmatpush1.bf16.msra.mxu0 0
        %1843 = vmatprep.subr.bf16.mxu0 0
        %1844 = vmatpush1.bf16.msra.mxu0 0
        %1845 = vmatprep.subr.bf16.mxu0 0
        %1846 = vmatpush1.bf16.msra.mxu0 0
        %1847 = vmatprep.subr.bf16.mxu0 0
        %1848 = vmatpush1.bf16.msra.mxu0 0
        %1849 = vmatprep.subr.bf16.mxu0 0
        %1850 = vmatpush1.bf16.msra.mxu0 0
        %1851 = vmatprep.subr.bf16.mxu0 0
        %1852 = vmatpush1.bf16.msra.mxu0 0
        %1853 = vmatprep.subr.bf16.mxu0 0
        %1854 = vmatpush1.bf16.msra.mxu0 0
        %1855 = vmatprep.mubr.bf16.mxu0 0
        %1856 = vmatmul.mubr.bf16.gmra.mrb[0].mxu0 %v1818
        %v1857 = vpop.f32.mrb[0].mxu0
        %v1858 = vadd.f32 0.0, %v1857
        %v1859 = vpop.f32.mrb[0].mxu0
        %v1860 = vpop.f32.mrb[0].mxu0
        %v1861 = vpop.f32.mrb[0].mxu0
        %1862 = vdwg.mxu0
        %1863 = vrot.lane.b32.xlu0 %v1032, 40
        %v1864 = vpop.permute.xlu0 %1863
        %v1866 = vsel %vm1035, %v1814, 0
        %v1869 = vsel %vm1159, %v1864, 0
        %1871 = vmatprep.subr.bf16.mxu0 0
        %1872 = vmatpush1.bf16.msra.mxu0 %v1869
        %1873 = vmatprep.subr.bf16.mxu0 0
        %1874 = vmatpush1.bf16.msra.mxu0 0
        %1875 = vmatprep.subr.bf16.mxu0 0
        %1876 = vmatpush1.bf16.msra.mxu0 0
        %1877 = vmatprep.subr.bf16.mxu0 0
        %1878 = vmatpush1.bf16.msra.mxu0 0
        %1879 = vmatprep.subr.bf16.mxu0 0
        %1880 = vmatpush1.bf16.msra.mxu0 0
        %1881 = vmatprep.subr.bf16.mxu0 0
        %1882 = vmatpush1.bf16.msra.mxu0 0
        %1883 = vmatprep.subr.bf16.mxu0 0
        %1884 = vmatpush1.bf16.msra.mxu0 0
        %1885 = vmatprep.subr.bf16.mxu0 0
        %1886 = vmatpush1.bf16.msra.mxu0 0
        %1887 = vmatprep.subr.bf16.mxu0 0
        %1888 = vmatpush1.bf16.msra.mxu0 0
        %1889 = vmatprep.subr.bf16.mxu0 0
        %1890 = vmatpush1.bf16.msra.mxu0 0
        %1891 = vmatprep.subr.bf16.mxu0 0
        %1892 = vmatpush1.bf16.msra.mxu0 0
        %1893 = vmatprep.subr.bf16.mxu0 0
        %1894 = vmatpush1.bf16.msra.mxu0 0
        %1895 = vmatprep.subr.bf16.mxu0 0
        %1896 = vmatpush1.bf16.msra.mxu0 0
        %1897 = vmatprep.subr.bf16.mxu0 0
        %1898 = vmatpush1.bf16.msra.mxu0 0
        %1899 = vmatprep.subr.bf16.mxu0 0
        %1900 = vmatpush1.bf16.msra.mxu0 0
        %1901 = vmatprep.subr.bf16.mxu0 0
        %1902 = vmatpush1.bf16.msra.mxu0 0
        %1903 = vmatprep.mubr.bf16.mxu0 0
        %1904 = vmatmul.mubr.bf16.gmra.mrb[0].mxu0 %v1866
        %v1905 = vpop.f32.mrb[0].mxu0
        %v1906 = vadd.f32 0.0, %v1905
        %v1907 = vpop.f32.mrb[0].mxu0
        %v1908 = vpop.f32.mrb[0].mxu0
        %v1909 = vpop.f32.mrb[0].mxu0
        %1910 = vdwg.mxu0
        %1913 = vrot.lane.b32.xlu0 %v1418, 8
        %v1914 = vpop.permute.xlu0 %1913
        %1915 = vrot.lane.b32.xlu0 %v1466, 8
        %v1916 = vpop.permute.xlu0 %1915
        %1921 = vrot.lane.b32.xlu0 %v1638, 16
        %v1922 = vpop.permute.xlu0 %1921
        %1923 = vrot.lane.b32.xlu0 %v1686, 16
        %v1924 = vpop.permute.xlu0 %1923
        %1929 = vrot.lane.b32.xlu0 %v1858, 24
        %v1930 = vpop.permute.xlu0 %1929
        %1931 = vrot.lane.b32.xlu0 %v1906, 24
        %v1932 = vpop.permute.xlu0 %1931
        %v1935 = vsel %vm1035, %v1198, %v1914
        %v1936 = vsel %vm1035, %v1246, %v1916
        %vm1937 = vcmask 130048
        %v1938 = vsel %vm1937, %v1935, %v1922
        %v1939 = vsel %vm1937, %v1936, %v1924
        %vm1940 = vcmask 195584
        %v1941 = vsel %vm1940, %v1938, %v1930
        %v1942 = vsel %vm1940, %v1939, %v1932
        %v1943 = vpack.c.bf16 %v1942, %v1941
        %v1944 = vld [vmem:[%s756] sm:$0xf]
        %v1945 = vld [vmem:[%s756 + $0x4] sm:$0xf]
        %v1946 = vld [vmem:[%s756 + $0x8] sm:$0xf]
        %v1947 = vld [vmem:[%s756 + $0xc] sm:$0xf]
        %v1952 = vunpack.c.l.b16 %v1944
        %v1953 = vunpack.c.l.b16 %v1945
        %v1954 = vunpack.c.l.b16 %v1946
        %v1955 = vunpack.c.l.b16 %v1947
        %v1956 = vpack.c.b16 %v1953, %v1952
        %v1957 = vpack.c.b16 %v1955, %v1954
        %v1961 = vsel %vm922, %v1943, 0
        %1963 = vmatprep.subr.bf16.mxu0 0
        %1964 = vmatpush1.bf16.msra.mxu0 %v1956
        %1965 = vmatprep.subr.bf16.mxu0 0
        %1966 = vmatpush1.bf16.msra.mxu0 %v1957
        %1967 = vmatprep.subr.bf16.mxu0 0
        %1968 = vmatpush1.bf16.msra.mxu0 0
        %1969 = vmatprep.subr.bf16.mxu0 0
        %1970 = vmatpush1.bf16.msra.mxu0 0
        %1971 = vmatprep.subr.bf16.mxu0 0
        %1972 = vmatpush1.bf16.msra.mxu0 0
        %1973 = vmatprep.subr.bf16.mxu0 0
        %1974 = vmatpush1.bf16.msra.mxu0 0
        %1975 = vmatprep.subr.bf16.mxu0 0
        %1976 = vmatpush1.bf16.msra.mxu0 0
        %1977 = vmatprep.subr.bf16.mxu0 0
        %1978 = vmatpush1.bf16.msra.mxu0 0
        %1979 = vmatprep.subr.bf16.mxu0 0
        %1980 = vmatpush1.bf16.msra.mxu0 0
        %1981 = vmatprep.subr.bf16.mxu0 0
        %1982 = vmatpush1.bf16.msra.mxu0 0
        %1983 = vmatprep.subr.bf16.mxu0 0
        %1984 = vmatpush1.bf16.msra.mxu0 0
        %1985 = vmatprep.subr.bf16.mxu0 0
        %1986 = vmatpush1.bf16.msra.mxu0 0
        %1987 = vmatprep.subr.bf16.mxu0 0
        %1988 = vmatpush1.bf16.msra.mxu0 0
        %1989 = vmatprep.subr.bf16.mxu0 0
        %1990 = vmatpush1.bf16.msra.mxu0 0
        %1991 = vmatprep.subr.bf16.mxu0 0
        %1992 = vmatpush1.bf16.msra.mxu0 0
        %1993 = vmatprep.subr.bf16.mxu0 0
        %1994 = vmatpush1.bf16.msra.mxu0 0
        %1995 = vmatprep.mubr.bf16.mxu0 0
        %1996 = vmatmul.mubr.bf16.gmra.mrb[0].mxu0 %v1961
        %v1997 = vpop.f32.mrb[0].mxu0
        %v1998 = vadd.f32 0.0, %v1997
        %v1999 = vpop.f32.mrb[0].mxu0
        %v2000 = vpop.f32.mrb[0].mxu0
        %v2001 = vadd.f32 0.0, %v2000
        %v2002 = vpop.f32.mrb[0].mxu0
        %2003 = vdwg.mxu0
        %v2004 = vadd.f32 %v918, %v1998
        %v2005 = vadd.f32 %v919, %v2001
        %v2006 = vld [vmem:[%s759] sm:$0x1]
        %v2007 = vld [vmem:[%s762] sm:$0x1]
        %v2008 = vsel %vm922, %v2004, 0.0
        %2009 = vadd.xlane.f32.xlu0 %v2008
        %v2010 = vpop.xlane.xlu0 %2009
        %v2011 = vsel %vm922, %v2005, 0.0
        %2012 = vadd.xlane.f32.xlu0 %v2011
        %v2013 = vpop.xlane.xlu0 %2012
        %v2014 = vmul.f32 %v2010, %v929
        %v2015 = vmul.f32 %v2013, %v929
        %v2016 = vsub.f32 %v2004, %v2014
        %v2017 = vsub.f32 %v2005, %v2015
        %v2018 = vmul.f32 %v2016, %v2016
        %v2019 = vmul.f32 %v2017, %v2017
        %v2020 = vsel %vm922, %v2018, 0.0
        %2021 = vadd.xlane.f32.xlu0 %v2020
        %v2022 = vpop.xlane.xlu0 %2021
        %v2023 = vsel %vm922, %v2019, 0.0
        %2024 = vadd.xlane.f32.xlu0 %v2023
        %v2025 = vpop.xlane.xlu0 %2024
        %v2026 = vmul.f32 %v2022, %v929
        %v2027 = vmul.f32 %v2025, %v929
        %v2028 = vadd.f32 %v2026, 1e-05
        %v2029 = vadd.f32 %v2027, 1e-05
        %v2030 = vrsqrt.pop %v2028
        %v2031 = vrsqrt.pop %v2029
        %v2032 = vmul.f32 %v2016, %v2030
        %v2033 = vmul.f32 %v2017, %v2031
        %v2035 = vlaneseq
        %v2036 = vshrl.u32 %v2035, 7
        %v2037 = vsub.s32 0, %v2036
        %v2038 = vrot.slane %v2006, %v2037
        %v2040 = vmul.f32 %v2032, %v2038
        %v2041 = vmul.f32 %v2033, %v2038
        %v2043 = vlaneseq
        %v2044 = vshrl.u32 %v2043, 7
        %v2045 = vsub.s32 0, %v2044
        %v2046 = vrot.slane %v2007, %v2045
        %v2048 = vadd.f32 %v2040, %v2046
        %v2049 = vadd.f32 %v2041, %v2046
        %v2050 = vpack.c.bf16 %v2049, %v2048
        %v2051 = vld [vmem:[%s767] sm:$0xf]
        %v2052 = vld [vmem:[%s767 + $0x4] sm:$0xf]
        %v2053 = vld [vmem:[%s767 + $0x8] sm:$0xf]
        %v2054 = vld [vmem:[%s767 + $0xc] sm:$0xf]
        %v2055 = vld [vmem:[%s770] sm:$0x1]
        %v2057 = vlaneseq
        %v2058 = vshrl.u32 %v2057, 7
        %v2059 = vsub.s32 0, %v2058
        %v2060 = vrot.slane %v2055, %v2059
        %v2066 = vunpack.c.l.b16 %v2051
        %v2067 = vunpack.c.l.b16 %v2052
        %v2068 = vunpack.c.l.b16 %v2053
        %v2069 = vunpack.c.l.b16 %v2054
        %v2070 = vpack.c.b16 %v2067, %v2066
        %v2071 = vpack.c.b16 %v2069, %v2068
        %v2075 = vsel %vm922, %v2050, 0
        %2077 = vmatprep.subr.bf16.mxu0 0
        %2078 = vmatpush1.bf16.msra.mxu0 %v2070
        %2079 = vmatprep.subr.bf16.mxu0 0
        %2080 = vmatpush1.bf16.msra.mxu0 %v2071
        %2081 = vmatprep.subr.bf16.mxu0 0
        %2082 = vmatpush1.bf16.msra.mxu0 0
        %2083 = vmatprep.subr.bf16.mxu0 0
        %2084 = vmatpush1.bf16.msra.mxu0 0
        %2085 = vmatprep.subr.bf16.mxu0 0
        %2086 = vmatpush1.bf16.msra.mxu0 0
        %2087 = vmatprep.subr.bf16.mxu0 0
        %2088 = vmatpush1.bf16.msra.mxu0 0
        %2089 = vmatprep.subr.bf16.mxu0 0
        %2090 = vmatpush1.bf16.msra.mxu0 0
        %2091 = vmatprep.subr.bf16.mxu0 0
        %2092 = vmatpush1.bf16.msra.mxu0 0
        %2093 = vmatprep.subr.bf16.mxu0 0
        %2094 = vmatpush1.bf16.msra.mxu0 0
        %2095 = vmatprep.subr.bf16.mxu0 0
        %2096 = vmatpush1.bf16.msra.mxu0 0
        %2097 = vmatprep.subr.bf16.mxu0 0
        %2098 = vmatpush1.bf16.msra.mxu0 0
        %2099 = vmatprep.subr.bf16.mxu0 0
        %2100 = vmatpush1.bf16.msra.mxu0 0
        %2101 = vmatprep.subr.bf16.mxu0 0
        %2102 = vmatpush1.bf16.msra.mxu0 0
        %2103 = vmatprep.subr.bf16.mxu0 0
        %2104 = vmatpush1.bf16.msra.mxu0 0
        %2105 = vmatprep.subr.bf16.mxu0 0
        %2106 = vmatpush1.bf16.msra.mxu0 0
        %2107 = vmatprep.subr.bf16.mxu0 0
        %2108 = vmatpush1.bf16.msra.mxu0 0
        %2109 = vmatprep.mubr.bf16.mxu0 0
        %2110 = vmatmul.mubr.bf16.gmra.mrb[0].mxu0 %v2075
        %v2111 = vpop.f32.mrb[0].mxu0
        %v2112 = vadd.f32 %v2060, %v2111
        %v2113 = vpop.f32.mrb[0].mxu0
        %v2114 = vpop.f32.mrb[0].mxu0
        %v2115 = vadd.f32 %v2060, %v2114
        %v2116 = vpop.f32.mrb[0].mxu0
        %2117 = vdwg.mxu0
        %v2118 = vmul.f32 %v2112, 0.5
        %v2119 = vmul.f32 %v2115, 0.5
        %v2120 = vmul.f32 %v2112, 0.70710677
        %v2121 = vmul.f32 %v2115, 0.70710677
        %v2122 = vand.u32 2147483647, %v2120
        %v2123 = vand.u32 2147483647, %v2121
        %v2124 = vmul.f32 %v2122, 0.3275911
        %v2125 = vmul.f32 %v2123, 0.3275911
        %v2126 = vadd.f32 %v2124, 1.0
        %v2127 = vadd.f32 %v2125, 1.0
        %v2128 = vrcp.pop %v2126
        %v2129 = vmul.f32 1.0, %v2128
        %v2130 = vrcp.pop %v2127
        %v2131 = vmul.f32 1.0, %v2130
        %v2132 = vmul.f32 %v2129, 1.0614054
        %v2133 = vmul.f32 %v2131, 1.0614054
        %v2134 = vadd.f32 %v2132, -1.4531521
        %v2135 = vadd.f32 %v2133, -1.4531521
        %v2136 = vmul.f32 %v2134, %v2129
        %v2137 = vmul.f32 %v2135, %v2131
        %v2138 = vadd.f32 %v2136, 1.4214138
        %v2139 = vadd.f32 %v2137, 1.4214138
        %v2140 = vmul.f32 %v2138, %v2129
        %v2141 = vmul.f32 %v2139, %v2131
        %v2142 = vadd.f32 %v2140, -0.28449672
        %v2143 = vadd.f32 %v2141, -0.28449672
        %v2144 = vmul.f32 %v2142, %v2129
        %v2145 = vmul.f32 %v2143, %v2131
        %v2146 = vadd.f32 %v2144, 0.2548296
        %v2147 = vadd.f32 %v2145, 0.2548296
        %v2148 = vmul.f32 %v2146, %v2129
        %v2149 = vmul.f32 %v2147, %v2131
        %v2150 = vsub.f32 0.0, %v2122
        %v2151 = vsub.f32 0.0, %v2123
        %v2152 = vmul.f32 %v2150, %v2122
        %v2153 = vmul.f32 %v2151, %v2123
        %v2154 = vmul.f32 %v2152, 1.442695
        %v2155 = vpow.pop %v2154
        %v2156 = vmul.f32 %v2153, 1.442695
        %v2157 = vpow.pop %v2156
        %v2158 = vmul.f32 %v2148, %v2155
        %v2159 = vmul.f32 %v2149, %v2157
        %v2160 = vsub.f32 1.0, %v2158
        %v2161 = vsub.f32 1.0, %v2159
        %vm2162 = vcmp.ge.f32.partialorder %v2120, 0.0
        %vm2163 = vcmp.ge.f32.partialorder %v2121, 0.0
        %v2164 = vsub.f32 0.0, %v2160
        %v2165 = vsub.f32 0.0, %v2161
        %v2166 = vsel %vm2162, %v2160, %v2164
        %v2167 = vsel %vm2163, %v2161, %v2165
        %v2168 = vadd.f32 %v2166, 1.0
        %v2169 = vadd.f32 %v2167, 1.0
        %v2170 = vmul.f32 %v2118, %v2168
        %v2171 = vmul.f32 %v2119, %v2169
        %v2172 = vpack.c.bf16 %v2171, %v2170
        %v2173 = vld [vmem:[%s775] sm:$0xf]
        %v2174 = vld [vmem:[%s775 + $0x4] sm:$0xf]
        %v2175 = vld [vmem:[%s775 + $0x8] sm:$0xf]
        %v2176 = vld [vmem:[%s775 + $0xc] sm:$0xf]
        %v2177 = vld [vmem:[%s775 + $0x10] sm:$0xf]
        %v2178 = vld [vmem:[%s775 + $0x14] sm:$0xf]
        %v2179 = vld [vmem:[%s775 + $0x18] sm:$0xf]
        %v2180 = vld [vmem:[%s775 + $0x1c] sm:$0xf]
        %v2181 = vld [vmem:[%s775 + $0x20] sm:$0xf]
        %v2182 = vld [vmem:[%s775 + $0x24] sm:$0xf]
        %v2183 = vld [vmem:[%s775 + $0x28] sm:$0xf]
        %v2184 = vld [vmem:[%s775 + $0x2c] sm:$0xf]
        %v2185 = vld [vmem:[%s775 + $0x30] sm:$0xf]
        %v2186 = vld [vmem:[%s775 + $0x34] sm:$0xf]
        %v2187 = vld [vmem:[%s775 + $0x38] sm:$0xf]
        %v2188 = vld [vmem:[%s775 + $0x3c] sm:$0xf]
        %v2205 = vunpack.c.l.b16 %v2173
        %v2206 = vunpack.c.l.b16 %v2174
        %v2207 = vunpack.c.l.b16 %v2175
        %v2208 = vunpack.c.l.b16 %v2176
        %v2209 = vunpack.c.l.b16 %v2177
        %v2210 = vunpack.c.l.b16 %v2178
        %v2211 = vunpack.c.l.b16 %v2179
        %v2212 = vunpack.c.l.b16 %v2180
        %v2213 = vunpack.c.l.b16 %v2181
        %v2214 = vunpack.c.l.b16 %v2182
        %v2215 = vunpack.c.l.b16 %v2183
        %v2216 = vunpack.c.l.b16 %v2184
        %v2217 = vunpack.c.l.b16 %v2185
        %v2218 = vunpack.c.l.b16 %v2186
        %v2219 = vunpack.c.l.b16 %v2187
        %v2220 = vunpack.c.l.b16 %v2188
        %v2221 = vpack.c.b16 %v2206, %v2205
        %v2222 = vpack.c.b16 %v2208, %v2207
        %v2223 = vpack.c.b16 %v2210, %v2209
        %v2224 = vpack.c.b16 %v2212, %v2211
        %v2225 = vpack.c.b16 %v2214, %v2213
        %v2226 = vpack.c.b16 %v2216, %v2215
        %v2227 = vpack.c.b16 %v2218, %v2217
        %v2228 = vpack.c.b16 %v2220, %v2219
        %2237 = vmatprep.subr.bf16.mxu0 0
        %2238 = vmatpush1.bf16.msra.mxu0 %v2221
        %2239 = vmatprep.subr.bf16.mxu0 0
        %2240 = vmatpush1.bf16.msra.mxu0 %v2222
        %2241 = vmatprep.subr.bf16.mxu0 0
        %2242 = vmatpush1.bf16.msra.mxu0 %v2223
        %2243 = vmatprep.subr.bf16.mxu0 0
        %2244 = vmatpush1.bf16.msra.mxu0 %v2224
        %2245 = vmatprep.subr.bf16.mxu0 0
        %2246 = vmatpush1.bf16.msra.mxu0 %v2225
        %2247 = vmatprep.subr.bf16.mxu0 0
        %2248 = vmatpush1.bf16.msra.mxu0 %v2226
        %2249 = vmatprep.subr.bf16.mxu0 0
        %2250 = vmatpush1.bf16.msra.mxu0 %v2227
        %2251 = vmatprep.subr.bf16.mxu0 0
        %2252 = vmatpush1.bf16.msra.mxu0 %v2228
        %2253 = vmatprep.subr.bf16.mxu0 0
        %2254 = vmatpush1.bf16.msra.mxu0 0
        %2255 = vmatprep.subr.bf16.mxu0 0
        %2256 = vmatpush1.bf16.msra.mxu0 0
        %2257 = vmatprep.subr.bf16.mxu0 0
        %2258 = vmatpush1.bf16.msra.mxu0 0
        %2259 = vmatprep.subr.bf16.mxu0 0
        %2260 = vmatpush1.bf16.msra.mxu0 0
        %2261 = vmatprep.subr.bf16.mxu0 0
        %2262 = vmatpush1.bf16.msra.mxu0 0
        %2263 = vmatprep.subr.bf16.mxu0 0
        %2264 = vmatpush1.bf16.msra.mxu0 0
        %2265 = vmatprep.subr.bf16.mxu0 0
        %2266 = vmatpush1.bf16.msra.mxu0 0
        %2267 = vmatprep.subr.bf16.mxu0 0
        %2268 = vmatpush1.bf16.msra.mxu0 0
        %2269 = vmatprep.mubr.bf16.mxu0 0
        %2270 = vmatmul.mubr.bf16.gmra.mrb[0].mxu0 %v2172
        %v2271 = vpop.f32.mrb[0].mxu0
        %v2272 = vadd.f32 0.0, %v2271
        %v2273 = vpop.f32.mrb[0].mxu0
        %v2274 = vpop.f32.mrb[0].mxu0
        %v2275 = vadd.f32 0.0, %v2274
        %v2276 = vpop.f32.mrb[0].mxu0
        %2277 = vdwg.mxu0
        %v2278 = vadd.f32 %v2004, %v2272
        %v2279 = vadd.f32 %v2005, %v2275
        %v2280 = vld [vmem:[%s778] sm:$0x1]
        %v2282 = vlaneseq
        %v2283 = vshrl.u32 %v2282, 7
        %v2284 = vsub.s32 0, %v2283
        %v2285 = vrot.slane %v2280, %v2284
        %v2287 = vadd.f32 %v2278, %v2285
        %v2288 = vadd.f32 %v2279, %v2285
        %2289 = vst.msk [vmem:[#allocation2] sm:$0xff] %vm922, %v2287
        %2290 = vst.msk [vmem:[#allocation2 + $0x8] sm:$0xff] %vm922, %v2288
        %p2291 = scmp.eq.s32.totalorder %s38, 1
        // Predicated region
        $region101: #{forward.1} parent=95 // pred_check
          %p2292 = pneg %p2291
        $region102: #{forward.1} parent=95 // pred_check_branch
          %2294 = sbr.rel (%p2292) target = $region104
        $region103: #{forward.1} parent=95 // pred_region
          %v2295 = vld [vmem:[%s15] sm:$0x1]
          %v2296 = vld [vmem:[%s16] sm:$0x1]
          %v2299 = vrot.slane %v2288, 7
          %vm2300 = vcmask 1041409
          %v2301 = vsel %vm2300, %v2299, %v2287
          %vm2303 = vcmask 254976
          %v2304 = vsel %vm2303, %v2301, 0.0
          %2305 = vadd.xlane.f32.xlu0 %v2304
          %v2306 = vpop.xlane.xlu0 %2305
          %v2307 = vmul.f32 %v2306, %v929
          %v2309 = vrot.slane %v2307, 1
          %v2312 = vsub.f32 %v2287, %v2307
          %v2313 = vsub.f32 %v2288, %v2309
          %v2314 = vmul.f32 %v2312, %v2312
          %v2315 = vmul.f32 %v2313, %v2313
          %v2318 = vrot.slane %v2315, 7
          %v2319 = vsel %vm2300, %v2318, %v2314
          %v2321 = vsel %vm2303, %v2319, 0.0
          %2322 = vadd.xlane.f32.xlu0 %v2321
          %v2323 = vpop.xlane.xlu0 %2322
          %v2324 = vmul.f32 %v2323, %v929
          %v2325 = vadd.f32 %v2324, 1e-05
          %v2326 = vrsqrt.pop %v2325
          %v2328 = vrot.slane %v2326, 1
          %v2331 = vmul.f32 %v2312, %v2326
          %v2332 = vmul.f32 %v2313, %v2328
          %v2334 = vlaneseq
          %v2335 = vshrl.u32 %v2334, 7
          %v2336 = vsub.s32 0, %v2335
          %v2337 = vrot.slane %v2295, %v2336
          %v2339 = vmul.f32 %v2331, %v2337
          %v2340 = vmul.f32 %v2332, %v2337
          %v2342 = vlaneseq
          %v2343 = vshrl.u32 %v2342, 7
          %v2344 = vsub.s32 0, %v2343
          %v2345 = vrot.slane %v2296, %v2344
          %v2347 = vadd.f32 %v2339, %v2345
          %v2348 = vadd.f32 %v2340, %v2345
          %v2349 = vld [vmem:[%s17] sm:$0x1]
          %v2350 = vld [vmem:[%s18] sm:$0x1]
          %v2353 = vrot.slane %v2348, 7
          %v2354 = vsel %vm2300, %v2353, %v2347
          %v2356 = vsel %vm2303, %v2354, 0.0
          %2357 = vadd.xlane.f32.xlu0 %v2356
          %v2358 = vpop.xlane.xlu0 %2357
          %v2359 = vmul.f32 %v2358, %v929
          %v2361 = vrot.slane %v2359, 1
          %v2364 = vsub.f32 %v2347, %v2359
          %v2365 = vsub.f32 %v2348, %v2361
          %v2366 = vmul.f32 %v2364, %v2364
          %v2367 = vmul.f32 %v2365, %v2365
          %v2370 = vrot.slane %v2367, 7
          %v2371 = vsel %vm2300, %v2370, %v2366
          %v2373 = vsel %vm2303, %v2371, 0.0
          %2374 = vadd.xlane.f32.xlu0 %v2373
          %v2375 = vpop.xlane.xlu0 %2374
          %v2376 = vmul.f32 %v2375, %v929
          %v2377 = vadd.f32 %v2376, 1e-05
          %v2378 = vrsqrt.pop %v2377
          %v2380 = vrot.slane %v2378, 1
          %v2383 = vmul.f32 %v2364, %v2378
          %v2384 = vmul.f32 %v2365, %v2380
          %v2386 = vlaneseq
          %v2387 = vshrl.u32 %v2386, 7
          %v2388 = vsub.s32 0, %v2387
          %v2389 = vrot.slane %v2349, %v2388
          %v2391 = vmul.f32 %v2383, %v2389
          %v2392 = vmul.f32 %v2384, %v2389
          %v2394 = vlaneseq
          %v2395 = vshrl.u32 %v2394, 7
          %v2396 = vsub.s32 0, %v2395
          %v2397 = vrot.slane %v2350, %v2396
          %v2399 = vadd.f32 %v2391, %v2397
          %v2400 = vadd.f32 %v2392, %v2397
          %v2403 = vrot.slane %v2400, 7
          %v2404 = vsel %vm2300, %v2403, %v2399
          %2406 = vst.msk [vmem:[%s734] sm:$0x3] %vm2303, %v2404
        $region104: #{forward.1} parent=95 // pred_fallthru
          _
        %s2407 = sand.u32 %s507, 1
        %s2408 = scalar_lea.sflag [#allocation4], %s2407
        %s2409 = sand.u32 %s507, 1
        %s2410 = smul.addr %s2409, 2
        %s2411 = scalar_lea.vmem [#allocation3], %s2410
        // Predicated region
        $region105: #{forward.1} parent=95 // pred_check
          %p2412 = pneg %p517
        $region106: #{forward.1} parent=95 // pred_check_branch
          %2414 = sbr.rel (%p2412) target = $region108
        $region107: #{forward.1} parent=95 // pred_region
          %s2416 = ssub.s32 32, 32
          %2417 = vsyncadd %s2408, %s2416
          %s2418 = smul.addr %s37, 32
          %s2419 = scalar_lea.hbm %s19, %s2418
          %s2421 = sshll.u32 %s2411, 4
          %s2422 = int_to_ptr.vmem [resolvable:$true] %s2421
          %2424 = dma.vmem_to_hbm [thread:$0]  %s2422, 32, %s2419, %s2408
        $region108: #{forward.1} parent=95 // pred_fallthru
          _
      $region96: #{forward.1} parent=5 // pred_fallthru
        _
      %p2425 = scmp.le.s32.totalorder 2, %s28
      // Predicated region
      $region109: #{forward.1} parent=5 // pred_check
        %p2426 = pneg %p2425
      $region110: #{forward.1} parent=5 // pred_check_branch
        %2428 = sbr.rel (%p2426) target = $region112
      $region111: #{forward.1} parent=5 // pred_region
        %s2429 = ssub.s32 %s28, 2
        // Predicated region
        $region113: #{forward.1} parent=111 // pred_check
          %p2430 = pneg %p523
        $region114: #{forward.1} parent=111 // pred_check_branch
          %2432 = sbr.rel (%p2430) target = $region116
        $region115: #{forward.1} parent=111 // pred_region
          %s2433 = sand.u32 %s508, 1
          %s2434 = scalar_lea.sflag [#allocation4], %s2433
          %s2435 = sand.u32 %s508, 1
          %s2436 = smul.addr %s2435, 2
          %s2437 = scalar_lea.vmem [#allocation3], %s2436
          %2438 = dma.done %s2434, 32
        $region116: #{forward.1} parent=111 // pred_fallthru
          _
      $region112: #{forward.1} parent=5 // pred_fallthru
        _
    $region6: #{forward.1} parent=1 // loop_footer
      %s32 = sadd.s32 1, %s28
    $region7: #{forward.1} parent=1 // loop_footer_branch
      %27 = sbr.rel target = $region3
    $region8: #{forward.1} parent=1 // loop_exit
      _
    %2439 = vsyncpa [#allocation4], 1
    %s2440 = scalar_lea.sflag [#allocation4], 1
    %2441 = vsyncpa %s2440, 1

</llo_original>
